<compile_context>
chip_gen: v6e
topology: v6e:2x2x1
jax: 0.10.0
libtpu: 0.0.40
codegen_flags: <defaults>
</compile_context>

<pallas_src>
import functools
import math

import jax
import jax.numpy as jnp
from jax.experimental import pallas as pl
from jax.experimental.pallas import tpu as pltpu


def _layer_norm(x, g, b, eps=1e-6):
    """One-pass LayerNorm: var = E[x^2] - mu^2 (biased, like torch)."""
    xf = x.astype(jnp.float32)
    mu = jnp.mean(xf, axis=-1, keepdims=True)
    mu2 = jnp.mean(xf * xf, axis=-1, keepdims=True)
    var = mu2 - mu * mu
    return (xf - mu) * jax.lax.rsqrt(var + eps) * g + b


def _gelu(x):
    # PreSumm's tanh-approximation gelu (EUP tanh).
    c = math.sqrt(2.0 / math.pi)
    return 0.5 * x * (1.0 + jnp.tanh(c * (x + 0.044715 * x * x * x)))


def _encoder_layer_kernel(apply_pre_ln, heads, q_tile, compute_dtype, eup_dtype,
                          x_full_ref,            # (1, S, D)  f32 (K/V source)
                          x_tile_ref,            # (1, Tq, D) f32 (Q + residual)
                          maskb_ref,             # (1, 1, S)  f32 additive bias
                          ln0_g_ref, ln0_b_ref,  # (1, D) f32
                          wq_ref, bq_ref,        # (D, D) bf16 (pre-scaled), (1, D) f32
                          wkv_ref, bkv_ref,      # (D, 2D) bf16, (1, 2D) f32
                          wo_ref, bo_ref,        # (D, D) bf16, (1, D) f32
                          lnf_g_ref, lnf_b_ref,  # (1, D) f32
                          w1_ref, b1_ref,        # (D, F) bf16, (1, F) f32
                          w2_ref, b2_ref,        # (F, D) bf16, (1, D) f32
                          o_ref,                 # (1, Tq, D) f32
                          k_scr, v_scr):         # (H, S, dh) bf16 scratch
    qi = pl.program_id(1)
    S, D = x_full_ref.shape[1], x_full_ref.shape[2]
    H = heads
    dh = D // H

    # ---- once per batch element: full-sequence K/V into VMEM scratch ------
    @pl.when(qi == 0)
    def _compute_kv():
        x_full = x_full_ref[0]                                   # [S, D] f32
        if apply_pre_ln:
            xn = _layer_norm(x_full, ln0_g_ref[0], ln0_b_ref[0])
        else:
            xn = x_full
        kv = jnp.dot(xn.astype(compute_dtype), wkv_ref[...],
                     preferred_element_type=jnp.float32) + bkv_ref[0]
        kv = kv.astype(compute_dtype)                            # [S, 2D]
        # TODO(synk): for dh<128 these lane slices are masked stores and the
        # (H,S,dh) scratch is lane-padded; a lane-dense (S,2D) scratch + a
        # flash K-tile loop would halve scratch VMEM on v7x (review item 6/8).
        for h in range(H):                                       # static loop
            k_scr[h] = kv[:, h * dh:(h + 1) * dh]
            v_scr[h] = kv[:, D + h * dh:D + (h + 1) * dh]

    # ---- per query tile ----------------------------------------------------
    x_t = x_tile_ref[0]                                          # [Tq, D] f32
    if apply_pre_ln:
        xn_t = _layer_norm(x_t, ln0_g_ref[0], ln0_b_ref[0])
    else:
        xn_t = x_t
    # Q projection per tile (scale already folded into Wq/bq); no Q scratch.
    q_dense = jnp.dot(xn_t.astype(compute_dtype), wq_ref[...],
                      preferred_element_type=jnp.float32) + bq_ref[0]
    q_dense = q_dense.astype(compute_dtype)                      # [Tq, D]
    q_t = jnp.stack([q_dense[:, h * dh:(h + 1) * dh] for h in range(H)],
                    axis=0)                                      # [H, Tq, dh]

    s = jnp.einsum('hqd,hkd->hqk', q_t, k_scr[...],
                   preferred_element_type=jnp.float32)           # [H, Tq, S]
    s = s + maskb_ref[...]                                       # bcast (1,1,S)

    m = jnp.max(s, axis=-1, keepdims=True)
    e = jnp.exp((s - m).astype(eup_dtype))                       # bf16 EUP on v6e/v7x
    denom = jnp.sum(e.astype(jnp.float32), axis=-1, keepdims=True)
    p = (e.astype(compute_dtype)
         * pl.reciprocal(denom, approx=True).astype(compute_dtype))

    ctx = jnp.einsum('hqk,hkd->hqd', p, v_scr[...],
                     preferred_element_type=jnp.float32)         # [H, Tq, dh]

    # head concat -> ONE [Tq,D]@[D,D] output projection (full-K MXU matmul)
    ctx_cat = jnp.concatenate(
        [ctx[h].astype(compute_dtype) for h in range(H)], axis=-1)  # [Tq, D]
    attn_out = jnp.dot(ctx_cat, wo_ref[...],
                       preferred_element_type=jnp.float32) + bo_ref[0]

    out = attn_out + x_t                                         # dropout = id

    # PositionwiseFeedForward: x + W2(gelu(W1(LN(x))))
    y = _layer_norm(out, lnf_g_ref[0], lnf_b_ref[0]).astype(compute_dtype)
    y1 = jnp.dot(y, w1_ref[...], preferred_element_type=jnp.float32) + b1_ref[0]
    inter = _gelu(y1.astype(eup_dtype)).astype(compute_dtype)
    ff = jnp.dot(inter, w2_ref[...],
                 preferred_element_type=jnp.float32) + b2_ref[0]
    o_ref[0] = (ff + out).astype(o_ref.dtype)


# --------------------------------------------------------------------------
# Generation-aware sizing helpers (Python ints only).
# --------------------------------------------------------------------------
def _round_up(x, m):
    return ((x + m - 1) // m) * m


def _vmem_capacity_bytes():
    try:
        return int(pltpu.get_tpu_info().vmem_capacity_bytes)
    except Exception:
        return 64 << 20                      # conservative: v7x per-TC VMEM


def _use_bf16_transcendentals():
    try:
        kind = jax.devices()[0].device_kind.lower()
    except Exception:
        return False
    # v2-v5 have no bf16 EUP/VPU; keep f32 transcendentals there.
    return not any(t in kind for t in ("v2", "v3", "v4", "v5"))


def _need_bytes(S, D, F, H, dh, Tq, wbytes, single_buffer):
    """Rough VMEM demand incl. blocks, scratch and live intermediates."""
    nbuf_w = 1 if single_buffer else 2
    weights = (D * D + D * 2 * D + D * D + D * F + F * D) * wbytes
    small = (9 * D + F + 2 * D) * 4                       # biases + LN params
    x_full = (1 if single_buffer else 2) * S * _round_up(D, 128) * 4
    blocks = (2 * 2 * Tq * _round_up(D, 128) * 4          # x_tile + out, 2 bufs
              + 2 * _round_up(S, 128) * 4)                # mask bias
    scratch = 2 * H * _round_up(S, 8) * _round_up(dh, 128) * wbytes
    inter = (2 * H * Tq * _round_up(S, 128) * 4           # s, e (f32)
             + H * Tq * _round_up(S, 128) * wbytes        # p (bf16)
             + H * Tq * _round_up(dh, 128) * 4            # ctx (f32)
             + Tq * _round_up(F, 128) * 4                 # FFN intermediate
             + 4 * Tq * _round_up(D, 128) * 4)            # misc f32 temps
    return nbuf_w * (weights + small) + x_full + blocks + scratch + inter \
        + (8 << 20)


def _pick_q_tile(S, D, F, H, dh, wbytes, vmem_cap, single_buffer):
    if S % 8 != 0:
        return S                              # tiny / odd sequences: one tile
    target = 256 if vmem_cap >= (100 << 20) else 128
    cands = [t for t in range(8, S + 1, 8) if S % t == 0]
    budget = int(0.85 * vmem_cap)
    fitting = [t for t in cands if t <= target and
               _need_bytes(S, D, F, H, dh, t, wbytes, single_buffer) <= budget]
    if fitting:
        return max(fitting)
    return min(cands)


def transformer_encoder_layer(iter_, x, mask, params, heads, *,
                              q_tile=None, compute_dtype=jnp.bfloat16,
                              eup_dtype=None):
    """x: [B, S, D] f32; mask: [B, S] (1 = padded key). Returns [B, S, D] f32.

    `iter_` must be static (Python int/bool), matching the PyTorch module.
    """
    B, S, D = x.shape
    F = params["w1"].shape[1]
    assert D % heads == 0, "d_model must be divisible by heads"
    dh = D // heads
    wbytes = jnp.dtype(compute_dtype).itemsize

    vmem_cap = _vmem_capacity_bytes()
    if eup_dtype is None:
        eup_dtype = (jnp.bfloat16
                     if (_use_bf16_transcendentals()
                         and compute_dtype == jnp.bfloat16)
                     else jnp.float32)

    single_buffer_pref = hasattr(pl, "Buffered")
    if q_tile is None:
        q_tile = _pick_q_tile(S, D, F, heads, dh, wbytes, vmem_cap,
                              single_buffer_pref)
    assert S % q_tile == 0 and (q_tile % 8 == 0 or q_tile == S)
    n_q = S // q_tile

    # --- one-time weight transforms (constant folding under jit) -----------
    scale = 1.0 / math.sqrt(dh)
    wq = (params["wq"] * scale).astype(compute_dtype)            # [D, D]
    bq = (params["bq"] * scale).astype(jnp.float32)              # [1, D]
    wkv = jnp.concatenate([params["wk"], params["wv"]],
                          axis=1).astype(compute_dtype)          # [D, 2D]
    bkv = jnp.concatenate([params["bk"], params["bv"]],
                          axis=1).astype(jnp.float32)            # [1, 2D]
    wo = params["wo"].astype(compute_dtype)                      # [D, D] (un-reshaped)
    w1 = params["w1"].astype(compute_dtype)
    w2 = params["w2"].astype(compute_dtype)

    # additive attention bias: 0 where visible, -1e18 where masked
    mask_bias = (mask.astype(jnp.float32) * jnp.float32(-1e18)).reshape(B, 1, S)

    flops = int(B * (8 * S * D * D + 4 * S * S * D + 4 * S * D * F))
    transcendentals = int(B * (heads * S * S + S * F + 4 * S))
    bytes_accessed = int(3 * B * S * D * 4 + B * S * 4
                         + (3 * D * D + 2 * D * F) * wbytes)
    cost = pl.CostEstimate(flops=flops, transcendentals=transcendentals,
                           bytes_accessed=bytes_accessed)

    kernel = functools.partial(_encoder_layer_kernel, bool(iter_ != 0),
                               heads, q_tile, compute_dtype, eup_dtype)

    def _call(single_buffer_weights):
        weight_mode = {}
        if single_buffer_weights:
            # Replicated blocks: default double-buffering only doubles VMEM.
            weight_mode = dict(pipeline_mode=pl.Buffered(1))

        def wspec(shape):
            return pl.BlockSpec(shape, lambda b, q: (0, 0), **weight_mode)

        in_specs = [
            # full-seq x: consumed only at qi == 0 (K/V); single-buffered.
            pl.BlockSpec((1, S, D), lambda b, q: (b, 0, 0), **weight_mode),
            # per-tile x: Q projection input + residual (lane-dense tile DMA).
            pl.BlockSpec((1, q_tile, D), lambda b, q: (b, q, 0)),
            pl.BlockSpec((1, 1, S), lambda b, q: (b, 0, 0)),     # mask bias
            wspec((1, D)), wspec((1, D)),                        # ln0 g, b
            wspec((D, D)), wspec((1, D)),                        # Wq, bq
            wspec((D, 2 * D)), wspec((1, 2 * D)),                # Wkv, bkv
            wspec((D, D)), wspec((1, D)),                        # Wo, bo
            wspec((1, D)), wspec((1, D)),                        # ffn LN g, b
            wspec((D, F)), wspec((1, F)),                        # W1, b1
            wspec((F, D)), wspec((1, D)),                        # W2, b2
        ]
        out_spec = pl.BlockSpec((1, q_tile, D), lambda b, q: (b, q, 0))
        scratch_shapes = [pltpu.VMEM((heads, S, dh), compute_dtype)
                          for _ in range(2)]                     # K, V

        need = _need_bytes(S, D, F, heads, dh, q_tile, wbytes,
                           single_buffer_weights)
        vmem_limit = int(min(max(need, 32 << 20), int(0.85 * vmem_cap)))

        return pl.pallas_call(
            kernel,
            out_shape=jax.ShapeDtypeStruct((B, S, D), jnp.float32),
            grid_spec=pltpu.PrefetchScalarGridSpec(
                num_scalar_prefetch=0,
                grid=(B, n_q),
                in_specs=in_specs,
                out_specs=out_spec,
                scratch_shapes=scratch_shapes,
            ),
            compiler_params=pltpu.CompilerParams(
                # q-tile axis is "arbitrary": it carries the per-batch K/V
                # scratch computed at qi == 0.
                dimension_semantics=("parallel", "arbitrary"),
                vmem_limit_bytes=vmem_limit),
            cost_estimate=cost,
        )(x, x, mask_bias,
          params["ln0_g"], params["ln0_b"],
          wq, bq, wkv, bkv, wo, params["bo"],
          params["lnf_g"], params["lnf_b"],
          w1, params["b1"], w2, params["b2"])

    if single_buffer_pref:
        try:
            return _call(True)
        except Exception:
            # pipeline_mode=pl.Buffered(1) not supported by this build:
            # fall back to default double-buffered specs.
            pass
    return _call(False)


def init_params(key, d_model, d_ff):
    keys = jax.random.split(key, 6)
    s = 0.02
    # Linear weights stored already transposed to [in, out]; biases as [1, out].
    return {
        "ln0_g": jnp.ones((1, d_model), jnp.float32),
        "ln0_b": jnp.zeros((1, d_model), jnp.float32),
        "wq": s * jax.random.normal(keys[0], (d_model, d_model), jnp.float32),
        "bq": jnp.zeros((1, d_model), jnp.float32),
        "wk": s * jax.random.normal(keys[1], (d_model, d_model), jnp.float32),
        "bk": jnp.zeros((1, d_model), jnp.float32),
        "wv": s * jax.random.normal(keys[2], (d_model, d_model), jnp.float32),
        "bv": jnp.zeros((1, d_model), jnp.float32),
        "wo": s * jax.random.normal(keys[3], (d_model, d_model), jnp.float32),
        "bo": jnp.zeros((1, d_model), jnp.float32),
        "lnf_g": jnp.ones((1, d_model), jnp.float32),
        "lnf_b": jnp.zeros((1, d_model), jnp.float32),
        "w1": s * jax.random.normal(keys[4], (d_model, d_ff), jnp.float32),
        "b1": jnp.zeros((1, d_ff), jnp.float32),
        "w2": s * jax.random.normal(keys[5], (d_ff, d_model), jnp.float32),
        "b2": jnp.zeros((1, d_model), jnp.float32),
    }


def _reference(iter_, x, mask, params, heads):
    """Pure-JAX f32 reference matching the PyTorch forward (eval mode)."""
    B, S, D = x.shape
    dh = D // heads

    def ln(t, g, b):
        mu = t.mean(-1, keepdims=True)
        var = ((t - mu) ** 2).mean(-1, keepdims=True)
        return (t - mu) / jnp.sqrt(var + 1e-6) * g + b

    xn = ln(x, params["ln0_g"], params["ln0_b"]) if iter_ != 0 else x
    q = (xn @ params["wq"] + params["bq"])
    k = (xn @ params["wk"] + params["bk"])
    v = (xn @ params["wv"] + params["bv"])
    q = q.reshape(B, S, heads, dh).transpose(0, 2, 1, 3) / math.sqrt(dh)
    k = k.reshape(B, S, heads, dh).transpose(0, 2, 1, 3)
    v = v.reshape(B, S, heads, dh).transpose(0, 2, 1, 3)
    s = jnp.einsum('bhqd,bhkd->bhqk', q, k)
    s = jnp.where(mask[:, None, None, :] > 0, -1e18, s)
    p = jax.nn.softmax(s, axis=-1)
    ctx = jnp.einsum('bhqk,bhkd->bhqd', p, v)
    ctx = ctx.transpose(0, 2, 1, 3).reshape(B, S, D)
    attn_out = ctx @ params["wo"] + params["bo"]
    out = attn_out + x
    y = ln(out, params["lnf_g"], params["lnf_b"])
    inter = _gelu(y @ params["w1"] + params["b1"])
    return inter @ params["w2"] + params["b2"] + out


if __name__ == "__main__":
    B, S, D, H, FF = 2, 16, 32, 4, 64

    root = jax.random.PRNGKey(0)
    kx, kp = jax.random.split(root)
    x = jax.random.normal(kx, (B, S, D), jnp.float32)
    # mask: 1.0 at padded KEY positions (last 3 tokens of batch element 1)
    mask = jnp.zeros((B, S), jnp.float32).at[1, S - 3:].set(1.0)
    params = init_params(kp, D, FF)

    # q_tile=8 -> grid (B, 2): exercises both the qi==0 K/V path and reuse.
    out = transformer_encoder_layer(1, x, mask, params, heads=H, q_tile=8)
    jax.block_until_ready(out)
    assert out.shape == (B, S, D)
    ref = _reference(1, x, mask, params, H)
    err1 = float(jnp.max(jnp.abs(out - ref)))
    assert bool(jnp.all(jnp.isfinite(out)))
    assert err1 < 3e-2, f"iter!=0 max abs error vs f32 reference: {err1}"

    # iter == 0 path (no pre-LayerNorm), auto q_tile (single tile here).
    out0 = transformer_encoder_layer(0, x, mask, params, heads=H)
    jax.block_until_ready(out0)
    ref0 = _reference(0, x, mask, params, H)
    err0 = float(jnp.max(jnp.abs(out0 - ref0)))
    assert bool(jnp.all(jnp.isfinite(out0)))
    assert err0 < 3e-2, f"iter==0 max abs error vs f32 reference: {err0}"

    print("KERNEL_OK")
</pallas_src>

<mosaic_0001>
module attributes {stable_mosaic.version = 11 : i64} {
  func.func @_encoder_layer_kernel(%arg0: i32, %arg1: i32, %arg2: memref<1x16x32xf32, #tpu.memory_space<vmem>>, %arg3: memref<1x8x32xf32, #tpu.memory_space<vmem>>, %arg4: memref<1x1x16xf32, #tpu.memory_space<vmem>>, %arg5: memref<1x32xf32, #tpu.memory_space<vmem>>, %arg6: memref<1x32xf32, #tpu.memory_space<vmem>>, %arg7: memref<32x32xbf16, #tpu.memory_space<vmem>>, %arg8: memref<1x32xf32, #tpu.memory_space<vmem>>, %arg9: memref<32x64xbf16, #tpu.memory_space<vmem>>, %arg10: memref<1x64xf32, #tpu.memory_space<vmem>>, %arg11: memref<32x32xbf16, #tpu.memory_space<vmem>>, %arg12: memref<1x32xf32, #tpu.memory_space<vmem>>, %arg13: memref<1x32xf32, #tpu.memory_space<vmem>>, %arg14: memref<1x32xf32, #tpu.memory_space<vmem>>, %arg15: memref<32x64xbf16, #tpu.memory_space<vmem>>, %arg16: memref<1x64xf32, #tpu.memory_space<vmem>>, %arg17: memref<64x32xbf16, #tpu.memory_space<vmem>>, %arg18: memref<1x32xf32, #tpu.memory_space<vmem>>, %arg19: memref<1x8x32xf32, #tpu.memory_space<vmem>>, %arg20: memref<4x16x8xbf16, #tpu.memory_space<vmem>>, %arg21: memref<4x16x8xbf16, #tpu.memory_space<vmem>>) attributes {dimension_semantics = [#tpu.dimension_semantics<parallel>, #tpu.dimension_semantics<arbitrary>], iteration_bounds = array<i64: 2, 2>, scalar_prefetch = 0 : i64, scratch_operands = 2 : i64, tpu.core_type = #tpu.core_type<tc>, window_params = [{pipeline_mode = #tpu.pipeline_mode<synchronous>, transform_indices = @transform_0, window_bounds = array<i64: 1, 16, 32>}, {transform_indices = @transform_1, window_bounds = array<i64: 1, 8, 32>}, {transform_indices = @transform_2, window_bounds = array<i64: 1, 1, 16>}, {pipeline_mode = #tpu.pipeline_mode<synchronous>, transform_indices = @transform_3, window_bounds = array<i64: 1, 32>}, {pipeline_mode = #tpu.pipeline_mode<synchronous>, transform_indices = @transform_4, window_bounds = array<i64: 1, 32>}, {pipeline_mode = #tpu.pipeline_mode<synchronous>, transform_indices = @transform_5, window_bounds = array<i64: 32, 32>}, {pipeline_mode = #tpu.pipeline_mode<synchronous>, transform_indices = @transform_6, window_bounds = array<i64: 1, 32>}, {pipeline_mode = #tpu.pipeline_mode<synchronous>, transform_indices = @transform_7, window_bounds = array<i64: 32, 64>}, {pipeline_mode = #tpu.pipeline_mode<synchronous>, transform_indices = @transform_8, window_bounds = array<i64: 1, 64>}, {pipeline_mode = #tpu.pipeline_mode<synchronous>, transform_indices = @transform_9, window_bounds = array<i64: 32, 32>}, {pipeline_mode = #tpu.pipeline_mode<synchronous>, transform_indices = @transform_10, window_bounds = array<i64: 1, 32>}, {pipeline_mode = #tpu.pipeline_mode<synchronous>, transform_indices = @transform_11, window_bounds = array<i64: 1, 32>}, {pipeline_mode = #tpu.pipeline_mode<synchronous>, transform_indices = @transform_12, window_bounds = array<i64: 1, 32>}, {pipeline_mode = #tpu.pipeline_mode<synchronous>, transform_indices = @transform_13, window_bounds = array<i64: 32, 64>}, {pipeline_mode = #tpu.pipeline_mode<synchronous>, transform_indices = @transform_14, window_bounds = array<i64: 1, 64>}, {pipeline_mode = #tpu.pipeline_mode<synchronous>, transform_indices = @transform_15, window_bounds = array<i64: 64, 32>}, {pipeline_mode = #tpu.pipeline_mode<synchronous>, transform_indices = @transform_16, window_bounds = array<i64: 1, 32>}, {transform_indices = @transform_17, window_bounds = array<i64: 1, 8, 32>}]} {
    %c0_i32 = arith.constant 0 : i32
    %0 = arith.cmpi eq, %arg1, %c0_i32 : i32
    %1 = arith.extui %0 : i1 to i32
    %c0_i32_0 = arith.constant 0 : i32
    %2 = arith.cmpi ne, %1, %c0_i32_0 : i32
    scf.if %2 {
      %c0_60 = arith.constant 0 : index
      %c0_61 = arith.constant 0 : index
      %c0_62 = arith.constant 0 : index
      %153 = vector.load %arg2[%c0_60, %c0_61, %c0_62] : memref<1x16x32xf32, #tpu.memory_space<vmem>>, vector<1x16x32xf32>
      %154 = vector.shape_cast %153 : vector<1x16x32xf32> to vector<16x32xf32>
      %c0_63 = arith.constant 0 : index
      %c0_64 = arith.constant 0 : index
      %155 = vector.load %arg5[%c0_63, %c0_64] : memref<1x32xf32, #tpu.memory_space<vmem>>, vector<1x32xf32>
      %156 = vector.shape_cast %155 : vector<1x32xf32> to vector<32xf32>
      %c0_65 = arith.constant 0 : index
      %c0_66 = arith.constant 0 : index
      %157 = vector.load %arg6[%c0_65, %c0_66] : memref<1x32xf32, #tpu.memory_space<vmem>>, vector<1x32xf32>
      %158 = vector.shape_cast %157 : vector<1x32xf32> to vector<32xf32>
      %cst_67 = arith.constant dense<0.000000e+00> : vector<16xf32>
      %159 = vector.multi_reduction <add>, %154, %cst_67 [1] : vector<16x32xf32> to vector<16xf32>
      %160 = vector.shape_cast %159 : vector<16xf32> to vector<16x1xf32>
      %cst_68 = arith.constant 3.200000e+01 : f32
      %161 = vector.broadcast %cst_68 : f32 to vector<16x1xf32>
      %162 = arith.divf %160, %161 : vector<16x1xf32>
      %163 = arith.mulf %154, %154 : vector<16x32xf32>
      %cst_69 = arith.constant dense<0.000000e+00> : vector<16xf32>
      %164 = vector.multi_reduction <add>, %163, %cst_69 [1] : vector<16x32xf32> to vector<16xf32>
      %165 = vector.shape_cast %164 : vector<16xf32> to vector<16x1xf32>
      %cst_70 = arith.constant 3.200000e+01 : f32
      %166 = vector.broadcast %cst_70 : f32 to vector<16x1xf32>
      %167 = arith.divf %165, %166 : vector<16x1xf32>
      %168 = arith.mulf %162, %162 : vector<16x1xf32>
      %169 = arith.subf %167, %168 : vector<16x1xf32>
      %170 = vector.broadcast %162 : vector<16x1xf32> to vector<16x32xf32>
      %171 = arith.subf %154, %170 : vector<16x32xf32>
      %cst_71 = arith.constant 9.99999997E-7 : f32
      %172 = vector.broadcast %cst_71 : f32 to vector<16x1xf32>
      %173 = arith.addf %169, %172 : vector<16x1xf32>
      %174 = math.rsqrt %173 : vector<16x1xf32>
      %175 = vector.broadcast %174 : vector<16x1xf32> to vector<16x32xf32>
      %176 = arith.mulf %171, %175 : vector<16x32xf32>
      %177 = vector.shape_cast %156 : vector<32xf32> to vector<1x32xf32>
      %178 = vector.broadcast %177 : vector<1x32xf32> to vector<16x32xf32>
      %179 = arith.mulf %176, %178 : vector<16x32xf32>
      %180 = vector.shape_cast %158 : vector<32xf32> to vector<1x32xf32>
      %181 = vector.broadcast %180 : vector<1x32xf32> to vector<16x32xf32>
      %182 = arith.addf %179, %181 : vector<16x32xf32>
      %183 = arith.truncf %182 : vector<16x32xf32> to vector<16x32xbf16>
      %c0_72 = arith.constant 0 : index
      %c0_73 = arith.constant 0 : index
      %184 = vector.load %arg9[%c0_72, %c0_73] : memref<32x64xbf16, #tpu.memory_space<vmem>>, vector<32x64xbf16>
      %cst_74 = arith.constant dense<0.000000e+00> : vector<16x64xf32>
      %185 = tpu.matmul %183, %184, %cst_74 {dimension_numbers = #tpu.dot_dimension_numbers<[1], [0], [0], [1], [0, 0, 1, 1], [], []>} : vector<16x32xbf16>, vector<32x64xbf16>, vector<16x64xf32> -> vector<16x64xf32>
      %c0_75 = arith.constant 0 : index
      %c0_76 = arith.constant 0 : index
      %186 = vector.load %arg10[%c0_75, %c0_76] : memref<1x64xf32, #tpu.memory_space<vmem>>, vector<1x64xf32>
      %187 = vector.shape_cast %186 : vector<1x64xf32> to vector<64xf32>
      %188 = vector.shape_cast %187 : vector<64xf32> to vector<1x64xf32>
      %189 = vector.broadcast %188 : vector<1x64xf32> to vector<16x64xf32>
      %190 = arith.addf %185, %189 : vector<16x64xf32>
      %191 = arith.truncf %190 : vector<16x64xf32> to vector<16x64xbf16>
      %192 = vector.extract_strided_slice %191 {offsets = [0, 0], sizes = [16, 8], strides = [1, 1]} : vector<16x64xbf16> to vector<16x8xbf16>
      %c0_77 = arith.constant 0 : index
      %c0_78 = arith.constant 0 : index
      %c0_79 = arith.constant 0 : index
      %193 = vector.load %arg20[%c0_77, %c0_78, %c0_79] : memref<4x16x8xbf16, #tpu.memory_space<vmem>>, vector<1x16x8xbf16>
      %194 = vector.shape_cast %193 : vector<1x16x8xbf16> to vector<16x8xbf16>
      %195 = vector.shape_cast %192 : vector<16x8xbf16> to vector<1x16x8xbf16>
      tpu.vector_store %arg20[%c0_77, %c0_78, %c0_79], %195 {strides = array<i32>} : memref<4x16x8xbf16, #tpu.memory_space<vmem>>, vector<1x16x8xbf16>,
      %196 = vector.extract_strided_slice %191 {offsets = [0, 32], sizes = [16, 8], strides = [1, 1]} : vector<16x64xbf16> to vector<16x8xbf16>
      %c0_80 = arith.constant 0 : index
      %c0_81 = arith.constant 0 : index
      %c0_82 = arith.constant 0 : index
      %197 = vector.load %arg21[%c0_80, %c0_81, %c0_82] : memref<4x16x8xbf16, #tpu.memory_space<vmem>>, vector<1x16x8xbf16>
      %198 = vector.shape_cast %197 : vector<1x16x8xbf16> to vector<16x8xbf16>
      %199 = vector.shape_cast %196 : vector<16x8xbf16> to vector<1x16x8xbf16>
      tpu.vector_store %arg21[%c0_80, %c0_81, %c0_82], %199 {strides = array<i32>} : memref<4x16x8xbf16, #tpu.memory_space<vmem>>, vector<1x16x8xbf16>,
      %200 = vector.extract_strided_slice %191 {offsets = [0, 8], sizes = [16, 8], strides = [1, 1]} : vector<16x64xbf16> to vector<16x8xbf16>
      %c1 = arith.constant 1 : index
      %c0_83 = arith.constant 0 : index
      %c0_84 = arith.constant 0 : index
      %201 = vector.load %arg20[%c1, %c0_83, %c0_84] : memref<4x16x8xbf16, #tpu.memory_space<vmem>>, vector<1x16x8xbf16>
      %202 = vector.shape_cast %201 : vector<1x16x8xbf16> to vector<16x8xbf16>
      %203 = vector.shape_cast %200 : vector<16x8xbf16> to vector<1x16x8xbf16>
      tpu.vector_store %arg20[%c1, %c0_83, %c0_84], %203 {strides = array<i32>} : memref<4x16x8xbf16, #tpu.memory_space<vmem>>, vector<1x16x8xbf16>,
      %204 = vector.extract_strided_slice %191 {offsets = [0, 40], sizes = [16, 8], strides = [1, 1]} : vector<16x64xbf16> to vector<16x8xbf16>
      %c1_85 = arith.constant 1 : index
      %c0_86 = arith.constant 0 : index
      %c0_87 = arith.constant 0 : index
      %205 = vector.load %arg21[%c1_85, %c0_86, %c0_87] : memref<4x16x8xbf16, #tpu.memory_space<vmem>>, vector<1x16x8xbf16>
      %206 = vector.shape_cast %205 : vector<1x16x8xbf16> to vector<16x8xbf16>
      %207 = vector.shape_cast %204 : vector<16x8xbf16> to vector<1x16x8xbf16>
      tpu.vector_store %arg21[%c1_85, %c0_86, %c0_87], %207 {strides = array<i32>} : memref<4x16x8xbf16, #tpu.memory_space<vmem>>, vector<1x16x8xbf16>,
      %208 = vector.extract_strided_slice %191 {offsets = [0, 16], sizes = [16, 8], strides = [1, 1]} : vector<16x64xbf16> to vector<16x8xbf16>
      %c2 = arith.constant 2 : index
      %c0_88 = arith.constant 0 : index
      %c0_89 = arith.constant 0 : index
      %209 = vector.load %arg20[%c2, %c0_88, %c0_89] : memref<4x16x8xbf16, #tpu.memory_space<vmem>>, vector<1x16x8xbf16>
      %210 = vector.shape_cast %209 : vector<1x16x8xbf16> to vector<16x8xbf16>
      %211 = vector.shape_cast %208 : vector<16x8xbf16> to vector<1x16x8xbf16>
      tpu.vector_store %arg20[%c2, %c0_88, %c0_89], %211 {strides = array<i32>} : memref<4x16x8xbf16, #tpu.memory_space<vmem>>, vector<1x16x8xbf16>,
      %212 = vector.extract_strided_slice %191 {offsets = [0, 48], sizes = [16, 8], strides = [1, 1]} : vector<16x64xbf16> to vector<16x8xbf16>
      %c2_90 = arith.constant 2 : index
      %c0_91 = arith.constant 0 : index
      %c0_92 = arith.constant 0 : index
      %213 = vector.load %arg21[%c2_90, %c0_91, %c0_92] : memref<4x16x8xbf16, #tpu.memory_space<vmem>>, vector<1x16x8xbf16>
      %214 = vector.shape_cast %213 : vector<1x16x8xbf16> to vector<16x8xbf16>
      %215 = vector.shape_cast %212 : vector<16x8xbf16> to vector<1x16x8xbf16>
      tpu.vector_store %arg21[%c2_90, %c0_91, %c0_92], %215 {strides = array<i32>} : memref<4x16x8xbf16, #tpu.memory_space<vmem>>, vector<1x16x8xbf16>,
      %216 = vector.extract_strided_slice %191 {offsets = [0, 24], sizes = [16, 8], strides = [1, 1]} : vector<16x64xbf16> to vector<16x8xbf16>
      %c3 = arith.constant 3 : index
      %c0_93 = arith.constant 0 : index
      %c0_94 = arith.constant 0 : index
      %217 = vector.load %arg20[%c3, %c0_93, %c0_94] : memref<4x16x8xbf16, #tpu.memory_space<vmem>>, vector<1x16x8xbf16>
      %218 = vector.shape_cast %217 : vector<1x16x8xbf16> to vector<16x8xbf16>
      %219 = vector.shape_cast %216 : vector<16x8xbf16> to vector<1x16x8xbf16>
      tpu.vector_store %arg20[%c3, %c0_93, %c0_94], %219 {strides = array<i32>} : memref<4x16x8xbf16, #tpu.memory_space<vmem>>, vector<1x16x8xbf16>,
      %220 = vector.extract_strided_slice %191 {offsets = [0, 56], sizes = [16, 8], strides = [1, 1]} : vector<16x64xbf16> to vector<16x8xbf16>
      %c3_95 = arith.constant 3 : index
      %c0_96 = arith.constant 0 : index
      %c0_97 = arith.constant 0 : index
      %221 = vector.load %arg21[%c3_95, %c0_96, %c0_97] : memref<4x16x8xbf16, #tpu.memory_space<vmem>>, vector<1x16x8xbf16>
      %222 = vector.shape_cast %221 : vector<1x16x8xbf16> to vector<16x8xbf16>
      %223 = vector.shape_cast %220 : vector<16x8xbf16> to vector<1x16x8xbf16>
      tpu.vector_store %arg21[%c3_95, %c0_96, %c0_97], %223 {strides = array<i32>} : memref<4x16x8xbf16, #tpu.memory_space<vmem>>, vector<1x16x8xbf16>,
    } else {
    }
    %c0 = arith.constant 0 : index
    %c0_1 = arith.constant 0 : index
    %c0_2 = arith.constant 0 : index
    %3 = vector.load %arg3[%c0, %c0_1, %c0_2] : memref<1x8x32xf32, #tpu.memory_space<vmem>>, vector<1x8x32xf32>
    %4 = vector.shape_cast %3 : vector<1x8x32xf32> to vector<8x32xf32>
    %c0_3 = arith.constant 0 : index
    %c0_4 = arith.constant 0 : index
    %5 = vector.load %arg5[%c0_3, %c0_4] : memref<1x32xf32, #tpu.memory_space<vmem>>, vector<1x32xf32>
    %6 = vector.shape_cast %5 : vector<1x32xf32> to vector<32xf32>
    %c0_5 = arith.constant 0 : index
    %c0_6 = arith.constant 0 : index
    %7 = vector.load %arg6[%c0_5, %c0_6] : memref<1x32xf32, #tpu.memory_space<vmem>>, vector<1x32xf32>
    %8 = vector.shape_cast %7 : vector<1x32xf32> to vector<32xf32>
    %cst = arith.constant dense<0.000000e+00> : vector<8xf32>
    %9 = vector.multi_reduction <add>, %4, %cst [1] : vector<8x32xf32> to vector<8xf32>
    %10 = vector.shape_cast %9 : vector<8xf32> to vector<8x1xf32>
    %cst_7 = arith.constant 3.200000e+01 : f32
    %11 = vector.broadcast %cst_7 : f32 to vector<8x1xf32>
    %12 = arith.divf %10, %11 : vector<8x1xf32>
    %13 = arith.mulf %4, %4 : vector<8x32xf32>
    %cst_8 = arith.constant dense<0.000000e+00> : vector<8xf32>
    %14 = vector.multi_reduction <add>, %13, %cst_8 [1] : vector<8x32xf32> to vector<8xf32>
    %15 = vector.shape_cast %14 : vector<8xf32> to vector<8x1xf32>
    %cst_9 = arith.constant 3.200000e+01 : f32
    %16 = vector.broadcast %cst_9 : f32 to vector<8x1xf32>
    %17 = arith.divf %15, %16 : vector<8x1xf32>
    %18 = arith.mulf %12, %12 : vector<8x1xf32>
    %19 = arith.subf %17, %18 : vector<8x1xf32>
    %20 = vector.broadcast %12 : vector<8x1xf32> to vector<8x32xf32>
    %21 = arith.subf %4, %20 : vector<8x32xf32>
    %cst_10 = arith.constant 9.99999997E-7 : f32
    %22 = vector.broadcast %cst_10 : f32 to vector<8x1xf32>
    %23 = arith.addf %19, %22 : vector<8x1xf32>
    %24 = math.rsqrt %23 : vector<8x1xf32>
    %25 = vector.broadcast %24 : vector<8x1xf32> to vector<8x32xf32>
    %26 = arith.mulf %21, %25 : vector<8x32xf32>
    %27 = vector.shape_cast %6 : vector<32xf32> to vector<1x32xf32>
    %28 = vector.broadcast %27 : vector<1x32xf32> to vector<8x32xf32>
    %29 = arith.mulf %26, %28 : vector<8x32xf32>
    %30 = vector.shape_cast %8 : vector<32xf32> to vector<1x32xf32>
    %31 = vector.broadcast %30 : vector<1x32xf32> to vector<8x32xf32>
    %32 = arith.addf %29, %31 : vector<8x32xf32>
    %33 = arith.truncf %32 : vector<8x32xf32> to vector<8x32xbf16>
    %c0_11 = arith.constant 0 : index
    %c0_12 = arith.constant 0 : index
    %34 = vector.load %arg7[%c0_11, %c0_12] : memref<32x32xbf16, #tpu.memory_space<vmem>>, vector<32x32xbf16>
    %cst_13 = arith.constant dense<0.000000e+00> : vector<8x32xf32>
    %35 = tpu.matmul %33, %34, %cst_13 {dimension_numbers = #tpu.dot_dimension_numbers<[1], [0], [0], [1], [0, 0, 1, 1], [], []>} : vector<8x32xbf16>, vector<32x32xbf16>, vector<8x32xf32> -> vector<8x32xf32>
    %c0_14 = arith.constant 0 : index
    %c0_15 = arith.constant 0 : index
    %36 = vector.load %arg8[%c0_14, %c0_15] : memref<1x32xf32, #tpu.memory_space<vmem>>, vector<1x32xf32>
    %37 = vector.shape_cast %36 : vector<1x32xf32> to vector<32xf32>
    %38 = vector.shape_cast %37 : vector<32xf32> to vector<1x32xf32>
    %39 = vector.broadcast %38 : vector<1x32xf32> to vector<8x32xf32>
    %40 = arith.addf %35, %39 : vector<8x32xf32>
    %41 = arith.truncf %40 : vector<8x32xf32> to vector<8x32xbf16>
    %42 = vector.extract_strided_slice %41 {offsets = [0, 0], sizes = [8, 8], strides = [1, 1]} : vector<8x32xbf16> to vector<8x8xbf16>
    %43 = vector.extract_strided_slice %41 {offsets = [0, 8], sizes = [8, 8], strides = [1, 1]} : vector<8x32xbf16> to vector<8x8xbf16>
    %44 = vector.extract_strided_slice %41 {offsets = [0, 16], sizes = [8, 8], strides = [1, 1]} : vector<8x32xbf16> to vector<8x8xbf16>
    %45 = vector.extract_strided_slice %41 {offsets = [0, 24], sizes = [8, 8], strides = [1, 1]} : vector<8x32xbf16> to vector<8x8xbf16>
    %46 = vector.shape_cast %42 : vector<8x8xbf16> to vector<1x8x8xbf16>
    %47 = vector.shape_cast %43 : vector<8x8xbf16> to vector<1x8x8xbf16>
    %48 = vector.shape_cast %44 : vector<8x8xbf16> to vector<1x8x8xbf16>
    %49 = vector.shape_cast %45 : vector<8x8xbf16> to vector<1x8x8xbf16>
    %50 = tpu.concatenate %46, %47, %48, %49 in 0 : vector<1x8x8xbf16>, vector<1x8x8xbf16>, vector<1x8x8xbf16>, vector<1x8x8xbf16> -> vector<4x8x8xbf16>
    %c0_16 = arith.constant 0 : index
    %c0_17 = arith.constant 0 : index
    %c0_18 = arith.constant 0 : index
    %51 = vector.load %arg20[%c0_16, %c0_17, %c0_18] : memref<4x16x8xbf16, #tpu.memory_space<vmem>>, vector<4x16x8xbf16>
    "tpu.trace_start"() <{level = 10 : i32, message = "hqd,hkd->hqk"}> : () -> ()
    %cst_19 = arith.constant dense<0.000000e+00> : vector<4x8x16xf32>
    %52 = tpu.matmul %50, %51, %cst_19 {dimension_numbers = #tpu.dot_dimension_numbers<[2], [2], [1], [1], [0, 0, 0, 1, 1, 1], [0], [0]>} : vector<4x8x8xbf16>, vector<4x16x8xbf16>, vector<4x8x16xf32> -> vector<4x8x16xf32>
    "tpu.trace_stop"() : () -> ()
    %c0_20 = arith.constant 0 : index
    %c0_21 = arith.constant 0 : index
    %c0_22 = arith.constant 0 : index
    %53 = vector.load %arg4[%c0_20, %c0_21, %c0_22] : memref<1x1x16xf32, #tpu.memory_space<vmem>>, vector<1x1x16xf32>
    %54 = vector.broadcast %53 : vector<1x1x16xf32> to vector<4x8x16xf32>
    %55 = arith.addf %52, %54 : vector<4x8x16xf32>
    %cst_23 = arith.constant dense<0xFF800000> : vector<4x8xf32>
    %56 = vector.multi_reduction <maximumf>, %55, %cst_23 [2] : vector<4x8x16xf32> to vector<4x8xf32>
    %57 = vector.shape_cast %56 : vector<4x8xf32> to vector<4x8x1xf32>
    %58 = vector.broadcast %57 : vector<4x8x1xf32> to vector<4x8x16xf32>
    %59 = arith.subf %55, %58 : vector<4x8x16xf32>
    %60 = arith.truncf %59 : vector<4x8x16xf32> to vector<4x8x16xbf16>
    %61 = math.exp %60 : vector<4x8x16xbf16>
    %62 = arith.extf %61 : vector<4x8x16xbf16> to vector<4x8x16xf32>
    %cst_24 = arith.constant dense<0.000000e+00> : vector<4x8xf32>
    %63 = vector.multi_reduction <add>, %62, %cst_24 [2] : vector<4x8x16xf32> to vector<4x8xf32>
    %64 = vector.shape_cast %63 : vector<4x8xf32> to vector<4x8x1xf32>
    %65 = tpu.reciprocal %64 {approx = true} : vector<4x8x1xf32> -> vector<4x8x1xf32>
    %66 = arith.truncf %65 : vector<4x8x1xf32> to vector<4x8x1xbf16>
    %67 = vector.broadcast %66 : vector<4x8x1xbf16> to vector<4x8x16xbf16>
    %68 = arith.mulf %61, %67 : vector<4x8x16xbf16>
    %c0_25 = arith.constant 0 : index
    %c0_26 = arith.constant 0 : index
    %c0_27 = arith.constant 0 : index
    %69 = vector.load %arg21[%c0_25, %c0_26, %c0_27] : memref<4x16x8xbf16, #tpu.memory_space<vmem>>, vector<4x16x8xbf16>
    "tpu.trace_start"() <{level = 10 : i32, message = "hqk,hkd->hqd"}> : () -> ()
    %cst_28 = arith.constant dense<0.000000e+00> : vector<4x8x8xf32>
    %70 = tpu.matmul %68, %69, %cst_28 {dimension_numbers = #tpu.dot_dimension_numbers<[2], [1], [1], [2], [0, 0, 0, 1, 1, 2], [0], [0]>} : vector<4x8x16xbf16>, vector<4x16x8xbf16>, vector<4x8x8xf32> -> vector<4x8x8xf32>
    "tpu.trace_stop"() : () -> ()
    %71 = vector.extract_strided_slice %70 {offsets = [0, 0, 0], sizes = [1, 8, 8], strides = [1, 1, 1]} : vector<4x8x8xf32> to vector<1x8x8xf32>
    %72 = vector.shape_cast %71 : vector<1x8x8xf32> to vector<8x8xf32>
    %73 = arith.truncf %72 : vector<8x8xf32> to vector<8x8xbf16>
    %74 = vector.extract_strided_slice %70 {offsets = [1, 0, 0], sizes = [1, 8, 8], strides = [1, 1, 1]} : vector<4x8x8xf32> to vector<1x8x8xf32>
    %75 = vector.shape_cast %74 : vector<1x8x8xf32> to vector<8x8xf32>
    %76 = arith.truncf %75 : vector<8x8xf32> to vector<8x8xbf16>
    %77 = vector.extract_strided_slice %70 {offsets = [2, 0, 0], sizes = [1, 8, 8], strides = [1, 1, 1]} : vector<4x8x8xf32> to vector<1x8x8xf32>
    %78 = vector.shape_cast %77 : vector<1x8x8xf32> to vector<8x8xf32>
    %79 = arith.truncf %78 : vector<8x8xf32> to vector<8x8xbf16>
    %80 = vector.extract_strided_slice %70 {offsets = [3, 0, 0], sizes = [1, 8, 8], strides = [1, 1, 1]} : vector<4x8x8xf32> to vector<1x8x8xf32>
    %81 = vector.shape_cast %80 : vector<1x8x8xf32> to vector<8x8xf32>
    %82 = arith.truncf %81 : vector<8x8xf32> to vector<8x8xbf16>
    %83 = tpu.concatenate %73, %76, %79, %82 in 1 : vector<8x8xbf16>, vector<8x8xbf16>, vector<8x8xbf16>, vector<8x8xbf16> -> vector<8x32xbf16>
    %c0_29 = arith.constant 0 : index
    %c0_30 = arith.constant 0 : index
    %84 = vector.load %arg11[%c0_29, %c0_30] : memref<32x32xbf16, #tpu.memory_space<vmem>>, vector<32x32xbf16>
    %cst_31 = arith.constant dense<0.000000e+00> : vector<8x32xf32>
    %85 = tpu.matmul %83, %84, %cst_31 {dimension_numbers = #tpu.dot_dimension_numbers<[1], [0], [0], [1], [0, 0, 1, 1], [], []>} : vector<8x32xbf16>, vector<32x32xbf16>, vector<8x32xf32> -> vector<8x32xf32>
    %c0_32 = arith.constant 0 : index
    %c0_33 = arith.constant 0 : index
    %86 = vector.load %arg12[%c0_32, %c0_33] : memref<1x32xf32, #tpu.memory_space<vmem>>, vector<1x32xf32>
    %87 = vector.shape_cast %86 : vector<1x32xf32> to vector<32xf32>
    %88 = vector.shape_cast %87 : vector<32xf32> to vector<1x32xf32>
    %89 = vector.broadcast %88 : vector<1x32xf32> to vector<8x32xf32>
    %90 = arith.addf %85, %89 : vector<8x32xf32>
    %91 = arith.addf %90, %4 : vector<8x32xf32>
    %c0_34 = arith.constant 0 : index
    %c0_35 = arith.constant 0 : index
    %92 = vector.load %arg13[%c0_34, %c0_35] : memref<1x32xf32, #tpu.memory_space<vmem>>, vector<1x32xf32>
    %93 = vector.shape_cast %92 : vector<1x32xf32> to vector<32xf32>
    %c0_36 = arith.constant 0 : index
    %c0_37 = arith.constant 0 : index
    %94 = vector.load %arg14[%c0_36, %c0_37] : memref<1x32xf32, #tpu.memory_space<vmem>>, vector<1x32xf32>
    %95 = vector.shape_cast %94 : vector<1x32xf32> to vector<32xf32>
    %cst_38 = arith.constant dense<0.000000e+00> : vector<8xf32>
    %96 = vector.multi_reduction <add>, %91, %cst_38 [1] : vector<8x32xf32> to vector<8xf32>
    %97 = vector.shape_cast %96 : vector<8xf32> to vector<8x1xf32>
    %cst_39 = arith.constant 3.200000e+01 : f32
    %98 = vector.broadcast %cst_39 : f32 to vector<8x1xf32>
    %99 = arith.divf %97, %98 : vector<8x1xf32>
    %100 = arith.mulf %91, %91 : vector<8x32xf32>
    %cst_40 = arith.constant dense<0.000000e+00> : vector<8xf32>
    %101 = vector.multi_reduction <add>, %100, %cst_40 [1] : vector<8x32xf32> to vector<8xf32>
    %102 = vector.shape_cast %101 : vector<8xf32> to vector<8x1xf32>
    %cst_41 = arith.constant 3.200000e+01 : f32
    %103 = vector.broadcast %cst_41 : f32 to vector<8x1xf32>
    %104 = arith.divf %102, %103 : vector<8x1xf32>
    %105 = arith.mulf %99, %99 : vector<8x1xf32>
    %106 = arith.subf %104, %105 : vector<8x1xf32>
    %107 = vector.broadcast %99 : vector<8x1xf32> to vector<8x32xf32>
    %108 = arith.subf %91, %107 : vector<8x32xf32>
    %cst_42 = arith.constant 9.99999997E-7 : f32
    %109 = vector.broadcast %cst_42 : f32 to vector<8x1xf32>
    %110 = arith.addf %106, %109 : vector<8x1xf32>
    %111 = math.rsqrt %110 : vector<8x1xf32>
    %112 = vector.broadcast %111 : vector<8x1xf32> to vector<8x32xf32>
    %113 = arith.mulf %108, %112 : vector<8x32xf32>
    %114 = vector.shape_cast %93 : vector<32xf32> to vector<1x32xf32>
    %115 = vector.broadcast %114 : vector<1x32xf32> to vector<8x32xf32>
    %116 = arith.mulf %113, %115 : vector<8x32xf32>
    %117 = vector.shape_cast %95 : vector<32xf32> to vector<1x32xf32>
    %118 = vector.broadcast %117 : vector<1x32xf32> to vector<8x32xf32>
    %119 = arith.addf %116, %118 : vector<8x32xf32>
    %120 = arith.truncf %119 : vector<8x32xf32> to vector<8x32xbf16>
    %c0_43 = arith.constant 0 : index
    %c0_44 = arith.constant 0 : index
    %121 = vector.load %arg15[%c0_43, %c0_44] : memref<32x64xbf16, #tpu.memory_space<vmem>>, vector<32x64xbf16>
    %cst_45 = arith.constant dense<0.000000e+00> : vector<8x64xf32>
    %122 = tpu.matmul %120, %121, %cst_45 {dimension_numbers = #tpu.dot_dimension_numbers<[1], [0], [0], [1], [0, 0, 1, 1], [], []>} : vector<8x32xbf16>, vector<32x64xbf16>, vector<8x64xf32> -> vector<8x64xf32>
    %c0_46 = arith.constant 0 : index
    %c0_47 = arith.constant 0 : index
    %123 = vector.load %arg16[%c0_46, %c0_47] : memref<1x64xf32, #tpu.memory_space<vmem>>, vector<1x64xf32>
    %124 = vector.shape_cast %123 : vector<1x64xf32> to vector<64xf32>
    %125 = vector.shape_cast %124 : vector<64xf32> to vector<1x64xf32>
    %126 = vector.broadcast %125 : vector<1x64xf32> to vector<8x64xf32>
    %127 = arith.addf %122, %126 : vector<8x64xf32>
    %128 = arith.truncf %127 : vector<8x64xf32> to vector<8x64xbf16>
    %cst_48 = arith.constant 5.000000e-01 : bf16
    %129 = vector.broadcast %cst_48 : bf16 to vector<8x64xbf16>
    %130 = arith.mulf %129, %128 : vector<8x64xbf16>
    %cst_49 = arith.constant 4.467770e-02 : bf16
    %131 = vector.broadcast %cst_49 : bf16 to vector<8x64xbf16>
    %132 = arith.mulf %131, %128 : vector<8x64xbf16>
    %133 = arith.mulf %132, %128 : vector<8x64xbf16>
    %134 = arith.mulf %133, %128 : vector<8x64xbf16>
    %135 = arith.addf %128, %134 : vector<8x64xbf16>
    %cst_50 = arith.constant 7.968750e-01 : bf16
    %136 = vector.broadcast %cst_50 : bf16 to vector<8x64xbf16>
    %137 = arith.mulf %136, %135 : vector<8x64xbf16>
    %138 = math.tanh %137 : vector<8x64xbf16>
    %cst_51 = arith.constant 1.000000e+00 : bf16
    %139 = vector.broadcast %cst_51 : bf16 to vector<8x64xbf16>
    %140 = arith.addf %139, %138 : vector<8x64xbf16>
    %141 = arith.mulf %130, %140 : vector<8x64xbf16>
    %c0_52 = arith.constant 0 : index
    %c0_53 = arith.constant 0 : index
    %142 = vector.load %arg17[%c0_52, %c0_53] : memref<64x32xbf16, #tpu.memory_space<vmem>>, vector<64x32xbf16>
    %cst_54 = arith.constant dense<0.000000e+00> : vector<8x32xf32>
    %143 = tpu.matmul %141, %142, %cst_54 {dimension_numbers = #tpu.dot_dimension_numbers<[1], [0], [0], [1], [0, 0, 1, 1], [], []>} : vector<8x64xbf16>, vector<64x32xbf16>, vector<8x32xf32> -> vector<8x32xf32>
    %c0_55 = arith.constant 0 : index
    %c0_56 = arith.constant 0 : index
    %144 = vector.load %arg18[%c0_55, %c0_56] : memref<1x32xf32, #tpu.memory_space<vmem>>, vector<1x32xf32>
    %145 = vector.shape_cast %144 : vector<1x32xf32> to vector<32xf32>
    %146 = vector.shape_cast %145 : vector<32xf32> to vector<1x32xf32>
    %147 = vector.broadcast %146 : vector<1x32xf32> to vector<8x32xf32>
    %148 = arith.addf %143, %147 : vector<8x32xf32>
    %149 = arith.addf %148, %91 : vector<8x32xf32>
    %c0_57 = arith.constant 0 : index
    %c0_58 = arith.constant 0 : index
    %c0_59 = arith.constant 0 : index
    %150 = vector.load %arg19[%c0_57, %c0_58, %c0_59] : memref<1x8x32xf32, #tpu.memory_space<vmem>>, vector<1x8x32xf32>
    %151 = vector.shape_cast %150 : vector<1x8x32xf32> to vector<8x32xf32>
    %152 = vector.shape_cast %149 : vector<8x32xf32> to vector<1x8x32xf32>
    tpu.vector_store %arg19[%c0_57, %c0_58, %c0_59], %152 {strides = array<i32>} : memref<1x8x32xf32, #tpu.memory_space<vmem>>, vector<1x8x32xf32>,
    return
  }
  func.func @transform_0(%arg0: i32, %arg1: i32) -> (i32, i32, i32) {
    %c0_i32 = arith.constant 0 : i32
    %c0_i32_0 = arith.constant 0 : i32
    %c0_i32_1 = arith.constant 0 : i32
    return %arg0, %c0_i32, %c0_i32_0 : i32, i32, i32
  }
  func.func @transform_1(%arg0: i32, %arg1: i32) -> (i32, i32, i32) {
    %c0_i32 = arith.constant 0 : i32
    %c0_i32_0 = arith.constant 0 : i32
    return %arg0, %arg1, %c0_i32 : i32, i32, i32
  }
  func.func @transform_2(%arg0: i32, %arg1: i32) -> (i32, i32, i32) {
    %c0_i32 = arith.constant 0 : i32
    %c0_i32_0 = arith.constant 0 : i32
    %c0_i32_1 = arith.constant 0 : i32
    return %arg0, %c0_i32, %c0_i32_0 : i32, i32, i32
  }
  func.func @transform_3(%arg0: i32, %arg1: i32) -> (i32, i32) {
    %c0_i32 = arith.constant 0 : i32
    %c0_i32_0 = arith.constant 0 : i32
    %c0_i32_1 = arith.constant 0 : i32
    return %c0_i32, %c0_i32_0 : i32, i32
  }
  func.func @transform_4(%arg0: i32, %arg1: i32) -> (i32, i32) {
    %c0_i32 = arith.constant 0 : i32
    %c0_i32_0 = arith.constant 0 : i32
    %c0_i32_1 = arith.constant 0 : i32
    return %c0_i32, %c0_i32_0 : i32, i32
  }
  func.func @transform_5(%arg0: i32, %arg1: i32) -> (i32, i32) {
    %c0_i32 = arith.constant 0 : i32
    %c0_i32_0 = arith.constant 0 : i32
    %c0_i32_1 = arith.constant 0 : i32
    return %c0_i32, %c0_i32_0 : i32, i32
  }
  func.func @transform_6(%arg0: i32, %arg1: i32) -> (i32, i32) {
    %c0_i32 = arith.constant 0 : i32
    %c0_i32_0 = arith.constant 0 : i32
    %c0_i32_1 = arith.constant 0 : i32
    return %c0_i32, %c0_i32_0 : i32, i32
  }
  func.func @transform_7(%arg0: i32, %arg1: i32) -> (i32, i32) {
    %c0_i32 = arith.constant 0 : i32
    %c0_i32_0 = arith.constant 0 : i32
    %c0_i32_1 = arith.constant 0 : i32
    return %c0_i32, %c0_i32_0 : i32, i32
  }
  func.func @transform_8(%arg0: i32, %arg1: i32) -> (i32, i32) {
    %c0_i32 = arith.constant 0 : i32
    %c0_i32_0 = arith.constant 0 : i32
    %c0_i32_1 = arith.constant 0 : i32
    return %c0_i32, %c0_i32_0 : i32, i32
  }
  func.func @transform_9(%arg0: i32, %arg1: i32) -> (i32, i32) {
    %c0_i32 = arith.constant 0 : i32
    %c0_i32_0 = arith.constant 0 : i32
    %c0_i32_1 = arith.constant 0 : i32
    return %c0_i32, %c0_i32_0 : i32, i32
  }
  func.func @transform_10(%arg0: i32, %arg1: i32) -> (i32, i32) {
    %c0_i32 = arith.constant 0 : i32
    %c0_i32_0 = arith.constant 0 : i32
    %c0_i32_1 = arith.constant 0 : i32
    return %c0_i32, %c0_i32_0 : i32, i32
  }
  func.func @transform_11(%arg0: i32, %arg1: i32) -> (i32, i32) {
    %c0_i32 = arith.constant 0 : i32
    %c0_i32_0 = arith.constant 0 : i32
    %c0_i32_1 = arith.constant 0 : i32
    return %c0_i32, %c0_i32_0 : i32, i32
  }
  func.func @transform_12(%arg0: i32, %arg1: i32) -> (i32, i32) {
    %c0_i32 = arith.constant 0 : i32
    %c0_i32_0 = arith.constant 0 : i32
    %c0_i32_1 = arith.constant 0 : i32
    return %c0_i32, %c0_i32_0 : i32, i32
  }
  func.func @transform_13(%arg0: i32, %arg1: i32) -> (i32, i32) {
    %c0_i32 = arith.constant 0 : i32
    %c0_i32_0 = arith.constant 0 : i32
    %c0_i32_1 = arith.constant 0 : i32
    return %c0_i32, %c0_i32_0 : i32, i32
  }
  func.func @transform_14(%arg0: i32, %arg1: i32) -> (i32, i32) {
    %c0_i32 = arith.constant 0 : i32
    %c0_i32_0 = arith.constant 0 : i32
    %c0_i32_1 = arith.constant 0 : i32
    return %c0_i32, %c0_i32_0 : i32, i32
  }
  func.func @transform_15(%arg0: i32, %arg1: i32) -> (i32, i32) {
    %c0_i32 = arith.constant 0 : i32
    %c0_i32_0 = arith.constant 0 : i32
    %c0_i32_1 = arith.constant 0 : i32
    return %c0_i32, %c0_i32_0 : i32, i32
  }
  func.func @transform_16(%arg0: i32, %arg1: i32) -> (i32, i32) {
    %c0_i32 = arith.constant 0 : i32
    %c0_i32_0 = arith.constant 0 : i32
    %c0_i32_1 = arith.constant 0 : i32
    return %c0_i32, %c0_i32_0 : i32, i32
  }
  func.func @transform_17(%arg0: i32, %arg1: i32) -> (i32, i32, i32) {
    %c0_i32 = arith.constant 0 : i32
    %c0_i32_0 = arith.constant 0 : i32
    return %arg0, %arg1, %c0_i32 : i32, i32, i32
  }
}

module attributes {stable_mosaic.version = 11 : i64} {
  func.func @_encoder_layer_kernel(%arg0: i32, %arg1: i32, %arg2: memref<1x16x32xf32, #tpu.memory_space<vmem>>, %arg3: memref<1x8x32xf32, #tpu.memory_space<vmem>>, %arg4: memref<1x1x16xf32, #tpu.memory_space<vmem>>, %arg5: memref<1x32xf32, #tpu.memory_space<vmem>>, %arg6: memref<1x32xf32, #tpu.memory_space<vmem>>, %arg7: memref<32x32xbf16, #tpu.memory_space<vmem>>, %arg8: memref<1x32xf32, #tpu.memory_space<vmem>>, %arg9: memref<32x64xbf16, #tpu.memory_space<vmem>>, %arg10: memref<1x64xf32, #tpu.memory_space<vmem>>, %arg11: memref<32x32xbf16, #tpu.memory_space<vmem>>, %arg12: memref<1x32xf32, #tpu.memory_space<vmem>>, %arg13: memref<1x32xf32, #tpu.memory_space<vmem>>, %arg14: memref<1x32xf32, #tpu.memory_space<vmem>>, %arg15: memref<32x64xbf16, #tpu.memory_space<vmem>>, %arg16: memref<1x64xf32, #tpu.memory_space<vmem>>, %arg17: memref<64x32xbf16, #tpu.memory_space<vmem>>, %arg18: memref<1x32xf32, #tpu.memory_space<vmem>>, %arg19: memref<1x8x32xf32, #tpu.memory_space<vmem>>, %arg20: memref<4x16x8xbf16, #tpu.memory_space<vmem>>, %arg21: memref<4x16x8xbf16, #tpu.memory_space<vmem>>) attributes {dimension_semantics = [#tpu.dimension_semantics<parallel>, #tpu.dimension_semantics<arbitrary>], iteration_bounds = array<i64: 2, 2>, scalar_prefetch = 0 : i64, scratch_operands = 2 : i64, tpu.core_type = #tpu.core_type<tc>, window_params = [{transform_indices = @transform_0, window_bounds = array<i64: 1, 16, 32>}, {transform_indices = @transform_1, window_bounds = array<i64: 1, 8, 32>}, {transform_indices = @transform_2, window_bounds = array<i64: 1, 1, 16>}, {pipeline_mode = #tpu.pipeline_mode<synchronous>, transform_indices = @transform_3, window_bounds = array<i64: 1, 32>}, {pipeline_mode = #tpu.pipeline_mode<synchronous>, transform_indices = @transform_4, window_bounds = array<i64: 1, 32>}, {pipeline_mode = #tpu.pipeline_mode<synchronous>, transform_indices = @transform_5, window_bounds = array<i64: 32, 32>}, {pipeline_mode = #tpu.pipeline_mode<synchronous>, transform_indices = @transform_6, window_bounds = array<i64: 1, 32>}, {pipeline_mode = #tpu.pipeline_mode<synchronous>, transform_indices = @transform_7, window_bounds = array<i64: 32, 64>}, {pipeline_mode = #tpu.pipeline_mode<synchronous>, transform_indices = @transform_8, window_bounds = array<i64: 1, 64>}, {pipeline_mode = #tpu.pipeline_mode<synchronous>, transform_indices = @transform_9, window_bounds = array<i64: 32, 32>}, {pipeline_mode = #tpu.pipeline_mode<synchronous>, transform_indices = @transform_10, window_bounds = array<i64: 1, 32>}, {pipeline_mode = #tpu.pipeline_mode<synchronous>, transform_indices = @transform_11, window_bounds = array<i64: 1, 32>}, {pipeline_mode = #tpu.pipeline_mode<synchronous>, transform_indices = @transform_12, window_bounds = array<i64: 1, 32>}, {pipeline_mode = #tpu.pipeline_mode<synchronous>, transform_indices = @transform_13, window_bounds = array<i64: 32, 64>}, {pipeline_mode = #tpu.pipeline_mode<synchronous>, transform_indices = @transform_14, window_bounds = array<i64: 1, 64>}, {pipeline_mode = #tpu.pipeline_mode<synchronous>, transform_indices = @transform_15, window_bounds = array<i64: 64, 32>}, {pipeline_mode = #tpu.pipeline_mode<synchronous>, transform_indices = @transform_16, window_bounds = array<i64: 1, 32>}, {transform_indices = @transform_17, window_bounds = array<i64: 1, 8, 32>}]} {
    %c0_i32 = arith.constant 0 : i32
    %0 = arith.cmpi eq, %arg1, %c0_i32 : i32
    %1 = arith.extui %0 : i1 to i32
    %c0_i32_0 = arith.constant 0 : i32
    %2 = arith.cmpi ne, %1, %c0_i32_0 : i32
    scf.if %2 {
      %c0_60 = arith.constant 0 : index
      %c0_61 = arith.constant 0 : index
      %c0_62 = arith.constant 0 : index
      %153 = vector.load %arg2[%c0_60, %c0_61, %c0_62] : memref<1x16x32xf32, #tpu.memory_space<vmem>>, vector<1x16x32xf32>
      %154 = vector.shape_cast %153 : vector<1x16x32xf32> to vector<16x32xf32>
      %c0_63 = arith.constant 0 : index
      %c0_64 = arith.constant 0 : index
      %155 = vector.load %arg5[%c0_63, %c0_64] : memref<1x32xf32, #tpu.memory_space<vmem>>, vector<1x32xf32>
      %156 = vector.shape_cast %155 : vector<1x32xf32> to vector<32xf32>
      %c0_65 = arith.constant 0 : index
      %c0_66 = arith.constant 0 : index
      %157 = vector.load %arg6[%c0_65, %c0_66] : memref<1x32xf32, #tpu.memory_space<vmem>>, vector<1x32xf32>
      %158 = vector.shape_cast %157 : vector<1x32xf32> to vector<32xf32>
      %cst_67 = arith.constant dense<0.000000e+00> : vector<16xf32>
      %159 = vector.multi_reduction <add>, %154, %cst_67 [1] : vector<16x32xf32> to vector<16xf32>
      %160 = vector.shape_cast %159 : vector<16xf32> to vector<16x1xf32>
      %cst_68 = arith.constant 3.200000e+01 : f32
      %161 = vector.broadcast %cst_68 : f32 to vector<16x1xf32>
      %162 = arith.divf %160, %161 : vector<16x1xf32>
      %163 = arith.mulf %154, %154 : vector<16x32xf32>
      %cst_69 = arith.constant dense<0.000000e+00> : vector<16xf32>
      %164 = vector.multi_reduction <add>, %163, %cst_69 [1] : vector<16x32xf32> to vector<16xf32>
      %165 = vector.shape_cast %164 : vector<16xf32> to vector<16x1xf32>
      %cst_70 = arith.constant 3.200000e+01 : f32
      %166 = vector.broadcast %cst_70 : f32 to vector<16x1xf32>
      %167 = arith.divf %165, %166 : vector<16x1xf32>
      %168 = arith.mulf %162, %162 : vector<16x1xf32>
      %169 = arith.subf %167, %168 : vector<16x1xf32>
      %170 = vector.broadcast %162 : vector<16x1xf32> to vector<16x32xf32>
      %171 = arith.subf %154, %170 : vector<16x32xf32>
      %cst_71 = arith.constant 9.99999997E-7 : f32
      %172 = vector.broadcast %cst_71 : f32 to vector<16x1xf32>
      %173 = arith.addf %169, %172 : vector<16x1xf32>
      %174 = math.rsqrt %173 : vector<16x1xf32>
      %175 = vector.broadcast %174 : vector<16x1xf32> to vector<16x32xf32>
      %176 = arith.mulf %171, %175 : vector<16x32xf32>
      %177 = vector.shape_cast %156 : vector<32xf32> to vector<1x32xf32>
      %178 = vector.broadcast %177 : vector<1x32xf32> to vector<16x32xf32>
      %179 = arith.mulf %176, %178 : vector<16x32xf32>
      %180 = vector.shape_cast %158 : vector<32xf32> to vector<1x32xf32>
      %181 = vector.broadcast %180 : vector<1x32xf32> to vector<16x32xf32>
      %182 = arith.addf %179, %181 : vector<16x32xf32>
      %183 = arith.truncf %182 : vector<16x32xf32> to vector<16x32xbf16>
      %c0_72 = arith.constant 0 : index
      %c0_73 = arith.constant 0 : index
      %184 = vector.load %arg9[%c0_72, %c0_73] : memref<32x64xbf16, #tpu.memory_space<vmem>>, vector<32x64xbf16>
      %cst_74 = arith.constant dense<0.000000e+00> : vector<16x64xf32>
      %185 = tpu.matmul %183, %184, %cst_74 {dimension_numbers = #tpu.dot_dimension_numbers<[1], [0], [0], [1], [0, 0, 1, 1], [], []>} : vector<16x32xbf16>, vector<32x64xbf16>, vector<16x64xf32> -> vector<16x64xf32>
      %c0_75 = arith.constant 0 : index
      %c0_76 = arith.constant 0 : index
      %186 = vector.load %arg10[%c0_75, %c0_76] : memref<1x64xf32, #tpu.memory_space<vmem>>, vector<1x64xf32>
      %187 = vector.shape_cast %186 : vector<1x64xf32> to vector<64xf32>
      %188 = vector.shape_cast %187 : vector<64xf32> to vector<1x64xf32>
      %189 = vector.broadcast %188 : vector<1x64xf32> to vector<16x64xf32>
      %190 = arith.addf %185, %189 : vector<16x64xf32>
      %191 = arith.truncf %190 : vector<16x64xf32> to vector<16x64xbf16>
      %192 = vector.extract_strided_slice %191 {offsets = [0, 0], sizes = [16, 8], strides = [1, 1]} : vector<16x64xbf16> to vector<16x8xbf16>
      %c0_77 = arith.constant 0 : index
      %c0_78 = arith.constant 0 : index
      %c0_79 = arith.constant 0 : index
      %193 = vector.load %arg20[%c0_77, %c0_78, %c0_79] : memref<4x16x8xbf16, #tpu.memory_space<vmem>>, vector<1x16x8xbf16>
      %194 = vector.shape_cast %193 : vector<1x16x8xbf16> to vector<16x8xbf16>
      %195 = vector.shape_cast %192 : vector<16x8xbf16> to vector<1x16x8xbf16>
      tpu.vector_store %arg20[%c0_77, %c0_78, %c0_79], %195 {strides = array<i32>} : memref<4x16x8xbf16, #tpu.memory_space<vmem>>, vector<1x16x8xbf16>,
      %196 = vector.extract_strided_slice %191 {offsets = [0, 32], sizes = [16, 8], strides = [1, 1]} : vector<16x64xbf16> to vector<16x8xbf16>
      %c0_80 = arith.constant 0 : index
      %c0_81 = arith.constant 0 : index
      %c0_82 = arith.constant 0 : index
      %197 = vector.load %arg21[%c0_80, %c0_81, %c0_82] : memref<4x16x8xbf16, #tpu.memory_space<vmem>>, vector<1x16x8xbf16>
      %198 = vector.shape_cast %197 : vector<1x16x8xbf16> to vector<16x8xbf16>
      %199 = vector.shape_cast %196 : vector<16x8xbf16> to vector<1x16x8xbf16>
      tpu.vector_store %arg21[%c0_80, %c0_81, %c0_82], %199 {strides = array<i32>} : memref<4x16x8xbf16, #tpu.memory_space<vmem>>, vector<1x16x8xbf16>,
      %200 = vector.extract_strided_slice %191 {offsets = [0, 8], sizes = [16, 8], strides = [1, 1]} : vector<16x64xbf16> to vector<16x8xbf16>
      %c1 = arith.constant 1 : index
      %c0_83 = arith.constant 0 : index
      %c0_84 = arith.constant 0 : index
      %201 = vector.load %arg20[%c1, %c0_83, %c0_84] : memref<4x16x8xbf16, #tpu.memory_space<vmem>>, vector<1x16x8xbf16>
      %202 = vector.shape_cast %201 : vector<1x16x8xbf16> to vector<16x8xbf16>
      %203 = vector.shape_cast %200 : vector<16x8xbf16> to vector<1x16x8xbf16>
      tpu.vector_store %arg20[%c1, %c0_83, %c0_84], %203 {strides = array<i32>} : memref<4x16x8xbf16, #tpu.memory_space<vmem>>, vector<1x16x8xbf16>,
      %204 = vector.extract_strided_slice %191 {offsets = [0, 40], sizes = [16, 8], strides = [1, 1]} : vector<16x64xbf16> to vector<16x8xbf16>
      %c1_85 = arith.constant 1 : index
      %c0_86 = arith.constant 0 : index
      %c0_87 = arith.constant 0 : index
      %205 = vector.load %arg21[%c1_85, %c0_86, %c0_87] : memref<4x16x8xbf16, #tpu.memory_space<vmem>>, vector<1x16x8xbf16>
      %206 = vector.shape_cast %205 : vector<1x16x8xbf16> to vector<16x8xbf16>
      %207 = vector.shape_cast %204 : vector<16x8xbf16> to vector<1x16x8xbf16>
      tpu.vector_store %arg21[%c1_85, %c0_86, %c0_87], %207 {strides = array<i32>} : memref<4x16x8xbf16, #tpu.memory_space<vmem>>, vector<1x16x8xbf16>,
      %208 = vector.extract_strided_slice %191 {offsets = [0, 16], sizes = [16, 8], strides = [1, 1]} : vector<16x64xbf16> to vector<16x8xbf16>
      %c2 = arith.constant 2 : index
      %c0_88 = arith.constant 0 : index
      %c0_89 = arith.constant 0 : index
      %209 = vector.load %arg20[%c2, %c0_88, %c0_89] : memref<4x16x8xbf16, #tpu.memory_space<vmem>>, vector<1x16x8xbf16>
      %210 = vector.shape_cast %209 : vector<1x16x8xbf16> to vector<16x8xbf16>
      %211 = vector.shape_cast %208 : vector<16x8xbf16> to vector<1x16x8xbf16>
      tpu.vector_store %arg20[%c2, %c0_88, %c0_89], %211 {strides = array<i32>} : memref<4x16x8xbf16, #tpu.memory_space<vmem>>, vector<1x16x8xbf16>,
      %212 = vector.extract_strided_slice %191 {offsets = [0, 48], sizes = [16, 8], strides = [1, 1]} : vector<16x64xbf16> to vector<16x8xbf16>
      %c2_90 = arith.constant 2 : index
      %c0_91 = arith.constant 0 : index
      %c0_92 = arith.constant 0 : index
      %213 = vector.load %arg21[%c2_90, %c0_91, %c0_92] : memref<4x16x8xbf16, #tpu.memory_space<vmem>>, vector<1x16x8xbf16>
      %214 = vector.shape_cast %213 : vector<1x16x8xbf16> to vector<16x8xbf16>
      %215 = vector.shape_cast %212 : vector<16x8xbf16> to vector<1x16x8xbf16>
      tpu.vector_store %arg21[%c2_90, %c0_91, %c0_92], %215 {strides = array<i32>} : memref<4x16x8xbf16, #tpu.memory_space<vmem>>, vector<1x16x8xbf16>,
      %216 = vector.extract_strided_slice %191 {offsets = [0, 24], sizes = [16, 8], strides = [1, 1]} : vector<16x64xbf16> to vector<16x8xbf16>
      %c3 = arith.constant 3 : index
      %c0_93 = arith.constant 0 : index
      %c0_94 = arith.constant 0 : index
      %217 = vector.load %arg20[%c3, %c0_93, %c0_94] : memref<4x16x8xbf16, #tpu.memory_space<vmem>>, vector<1x16x8xbf16>
      %218 = vector.shape_cast %217 : vector<1x16x8xbf16> to vector<16x8xbf16>
      %219 = vector.shape_cast %216 : vector<16x8xbf16> to vector<1x16x8xbf16>
      tpu.vector_store %arg20[%c3, %c0_93, %c0_94], %219 {strides = array<i32>} : memref<4x16x8xbf16, #tpu.memory_space<vmem>>, vector<1x16x8xbf16>,
      %220 = vector.extract_strided_slice %191 {offsets = [0, 56], sizes = [16, 8], strides = [1, 1]} : vector<16x64xbf16> to vector<16x8xbf16>
      %c3_95 = arith.constant 3 : index
      %c0_96 = arith.constant 0 : index
      %c0_97 = arith.constant 0 : index
      %221 = vector.load %arg21[%c3_95, %c0_96, %c0_97] : memref<4x16x8xbf16, #tpu.memory_space<vmem>>, vector<1x16x8xbf16>
      %222 = vector.shape_cast %221 : vector<1x16x8xbf16> to vector<16x8xbf16>
      %223 = vector.shape_cast %220 : vector<16x8xbf16> to vector<1x16x8xbf16>
      tpu.vector_store %arg21[%c3_95, %c0_96, %c0_97], %223 {strides = array<i32>} : memref<4x16x8xbf16, #tpu.memory_space<vmem>>, vector<1x16x8xbf16>,
    } else {
    }
    %c0 = arith.constant 0 : index
    %c0_1 = arith.constant 0 : index
    %c0_2 = arith.constant 0 : index
    %3 = vector.load %arg3[%c0, %c0_1, %c0_2] : memref<1x8x32xf32, #tpu.memory_space<vmem>>, vector<1x8x32xf32>
    %4 = vector.shape_cast %3 : vector<1x8x32xf32> to vector<8x32xf32>
    %c0_3 = arith.constant 0 : index
    %c0_4 = arith.constant 0 : index
    %5 = vector.load %arg5[%c0_3, %c0_4] : memref<1x32xf32, #tpu.memory_space<vmem>>, vector<1x32xf32>
    %6 = vector.shape_cast %5 : vector<1x32xf32> to vector<32xf32>
    %c0_5 = arith.constant 0 : index
    %c0_6 = arith.constant 0 : index
    %7 = vector.load %arg6[%c0_5, %c0_6] : memref<1x32xf32, #tpu.memory_space<vmem>>, vector<1x32xf32>
    %8 = vector.shape_cast %7 : vector<1x32xf32> to vector<32xf32>
    %cst = arith.constant dense<0.000000e+00> : vector<8xf32>
    %9 = vector.multi_reduction <add>, %4, %cst [1] : vector<8x32xf32> to vector<8xf32>
    %10 = vector.shape_cast %9 : vector<8xf32> to vector<8x1xf32>
    %cst_7 = arith.constant 3.200000e+01 : f32
    %11 = vector.broadcast %cst_7 : f32 to vector<8x1xf32>
    %12 = arith.divf %10, %11 : vector<8x1xf32>
    %13 = arith.mulf %4, %4 : vector<8x32xf32>
    %cst_8 = arith.constant dense<0.000000e+00> : vector<8xf32>
    %14 = vector.multi_reduction <add>, %13, %cst_8 [1] : vector<8x32xf32> to vector<8xf32>
    %15 = vector.shape_cast %14 : vector<8xf32> to vector<8x1xf32>
    %cst_9 = arith.constant 3.200000e+01 : f32
    %16 = vector.broadcast %cst_9 : f32 to vector<8x1xf32>
    %17 = arith.divf %15, %16 : vector<8x1xf32>
    %18 = arith.mulf %12, %12 : vector<8x1xf32>
    %19 = arith.subf %17, %18 : vector<8x1xf32>
    %20 = vector.broadcast %12 : vector<8x1xf32> to vector<8x32xf32>
    %21 = arith.subf %4, %20 : vector<8x32xf32>
    %cst_10 = arith.constant 9.99999997E-7 : f32
    %22 = vector.broadcast %cst_10 : f32 to vector<8x1xf32>
    %23 = arith.addf %19, %22 : vector<8x1xf32>
    %24 = math.rsqrt %23 : vector<8x1xf32>
    %25 = vector.broadcast %24 : vector<8x1xf32> to vector<8x32xf32>
    %26 = arith.mulf %21, %25 : vector<8x32xf32>
    %27 = vector.shape_cast %6 : vector<32xf32> to vector<1x32xf32>
    %28 = vector.broadcast %27 : vector<1x32xf32> to vector<8x32xf32>
    %29 = arith.mulf %26, %28 : vector<8x32xf32>
    %30 = vector.shape_cast %8 : vector<32xf32> to vector<1x32xf32>
    %31 = vector.broadcast %30 : vector<1x32xf32> to vector<8x32xf32>
    %32 = arith.addf %29, %31 : vector<8x32xf32>
    %33 = arith.truncf %32 : vector<8x32xf32> to vector<8x32xbf16>
    %c0_11 = arith.constant 0 : index
    %c0_12 = arith.constant 0 : index
    %34 = vector.load %arg7[%c0_11, %c0_12] : memref<32x32xbf16, #tpu.memory_space<vmem>>, vector<32x32xbf16>
    %cst_13 = arith.constant dense<0.000000e+00> : vector<8x32xf32>
    %35 = tpu.matmul %33, %34, %cst_13 {dimension_numbers = #tpu.dot_dimension_numbers<[1], [0], [0], [1], [0, 0, 1, 1], [], []>} : vector<8x32xbf16>, vector<32x32xbf16>, vector<8x32xf32> -> vector<8x32xf32>
    %c0_14 = arith.constant 0 : index
    %c0_15 = arith.constant 0 : index
    %36 = vector.load %arg8[%c0_14, %c0_15] : memref<1x32xf32, #tpu.memory_space<vmem>>, vector<1x32xf32>
    %37 = vector.shape_cast %36 : vector<1x32xf32> to vector<32xf32>
    %38 = vector.shape_cast %37 : vector<32xf32> to vector<1x32xf32>
    %39 = vector.broadcast %38 : vector<1x32xf32> to vector<8x32xf32>
    %40 = arith.addf %35, %39 : vector<8x32xf32>
    %41 = arith.truncf %40 : vector<8x32xf32> to vector<8x32xbf16>
    %42 = vector.extract_strided_slice %41 {offsets = [0, 0], sizes = [8, 8], strides = [1, 1]} : vector<8x32xbf16> to vector<8x8xbf16>
    %43 = vector.extract_strided_slice %41 {offsets = [0, 8], sizes = [8, 8], strides = [1, 1]} : vector<8x32xbf16> to vector<8x8xbf16>
    %44 = vector.extract_strided_slice %41 {offsets = [0, 16], sizes = [8, 8], strides = [1, 1]} : vector<8x32xbf16> to vector<8x8xbf16>
    %45 = vector.extract_strided_slice %41 {offsets = [0, 24], sizes = [8, 8], strides = [1, 1]} : vector<8x32xbf16> to vector<8x8xbf16>
    %46 = vector.shape_cast %42 : vector<8x8xbf16> to vector<1x8x8xbf16>
    %47 = vector.shape_cast %43 : vector<8x8xbf16> to vector<1x8x8xbf16>
    %48 = vector.shape_cast %44 : vector<8x8xbf16> to vector<1x8x8xbf16>
    %49 = vector.shape_cast %45 : vector<8x8xbf16> to vector<1x8x8xbf16>
    %50 = tpu.concatenate %46, %47, %48, %49 in 0 : vector<1x8x8xbf16>, vector<1x8x8xbf16>, vector<1x8x8xbf16>, vector<1x8x8xbf16> -> vector<4x8x8xbf16>
    %c0_16 = arith.constant 0 : index
    %c0_17 = arith.constant 0 : index
    %c0_18 = arith.constant 0 : index
    %51 = vector.load %arg20[%c0_16, %c0_17, %c0_18] : memref<4x16x8xbf16, #tpu.memory_space<vmem>>, vector<4x16x8xbf16>
    "tpu.trace_start"() <{level = 10 : i32, message = "hqd,hkd->hqk"}> : () -> ()
    %cst_19 = arith.constant dense<0.000000e+00> : vector<4x8x16xf32>
    %52 = tpu.matmul %50, %51, %cst_19 {dimension_numbers = #tpu.dot_dimension_numbers<[2], [2], [1], [1], [0, 0, 0, 1, 1, 1], [0], [0]>} : vector<4x8x8xbf16>, vector<4x16x8xbf16>, vector<4x8x16xf32> -> vector<4x8x16xf32>
    "tpu.trace_stop"() : () -> ()
    %c0_20 = arith.constant 0 : index
    %c0_21 = arith.constant 0 : index
    %c0_22 = arith.constant 0 : index
    %53 = vector.load %arg4[%c0_20, %c0_21, %c0_22] : memref<1x1x16xf32, #tpu.memory_space<vmem>>, vector<1x1x16xf32>
    %54 = vector.broadcast %53 : vector<1x1x16xf32> to vector<4x8x16xf32>
    %55 = arith.addf %52, %54 : vector<4x8x16xf32>
    %cst_23 = arith.constant dense<0xFF800000> : vector<4x8xf32>
    %56 = vector.multi_reduction <maximumf>, %55, %cst_23 [2] : vector<4x8x16xf32> to vector<4x8xf32>
    %57 = vector.shape_cast %56 : vector<4x8xf32> to vector<4x8x1xf32>
    %58 = vector.broadcast %57 : vector<4x8x1xf32> to vector<4x8x16xf32>
    %59 = arith.subf %55, %58 : vector<4x8x16xf32>
    %60 = arith.truncf %59 : vector<4x8x16xf32> to vector<4x8x16xbf16>
    %61 = math.exp %60 : vector<4x8x16xbf16>
    %62 = arith.extf %61 : vector<4x8x16xbf16> to vector<4x8x16xf32>
    %cst_24 = arith.constant dense<0.000000e+00> : vector<4x8xf32>
    %63 = vector.multi_reduction <add>, %62, %cst_24 [2] : vector<4x8x16xf32> to vector<4x8xf32>
    %64 = vector.shape_cast %63 : vector<4x8xf32> to vector<4x8x1xf32>
    %65 = tpu.reciprocal %64 {approx = true} : vector<4x8x1xf32> -> vector<4x8x1xf32>
    %66 = arith.truncf %65 : vector<4x8x1xf32> to vector<4x8x1xbf16>
    %67 = vector.broadcast %66 : vector<4x8x1xbf16> to vector<4x8x16xbf16>
    %68 = arith.mulf %61, %67 : vector<4x8x16xbf16>
    %c0_25 = arith.constant 0 : index
    %c0_26 = arith.constant 0 : index
    %c0_27 = arith.constant 0 : index
    %69 = vector.load %arg21[%c0_25, %c0_26, %c0_27] : memref<4x16x8xbf16, #tpu.memory_space<vmem>>, vector<4x16x8xbf16>
    "tpu.trace_start"() <{level = 10 : i32, message = "hqk,hkd->hqd"}> : () -> ()
    %cst_28 = arith.constant dense<0.000000e+00> : vector<4x8x8xf32>
    %70 = tpu.matmul %68, %69, %cst_28 {dimension_numbers = #tpu.dot_dimension_numbers<[2], [1], [1], [2], [0, 0, 0, 1, 1, 2], [0], [0]>} : vector<4x8x16xbf16>, vector<4x16x8xbf16>, vector<4x8x8xf32> -> vector<4x8x8xf32>
    "tpu.trace_stop"() : () -> ()
    %71 = vector.extract_strided_slice %70 {offsets = [0, 0, 0], sizes = [1, 8, 8], strides = [1, 1, 1]} : vector<4x8x8xf32> to vector<1x8x8xf32>
    %72 = vector.shape_cast %71 : vector<1x8x8xf32> to vector<8x8xf32>
    %73 = arith.truncf %72 : vector<8x8xf32> to vector<8x8xbf16>
    %74 = vector.extract_strided_slice %70 {offsets = [1, 0, 0], sizes = [1, 8, 8], strides = [1, 1, 1]} : vector<4x8x8xf32> to vector<1x8x8xf32>
    %75 = vector.shape_cast %74 : vector<1x8x8xf32> to vector<8x8xf32>
    %76 = arith.truncf %75 : vector<8x8xf32> to vector<8x8xbf16>
    %77 = vector.extract_strided_slice %70 {offsets = [2, 0, 0], sizes = [1, 8, 8], strides = [1, 1, 1]} : vector<4x8x8xf32> to vector<1x8x8xf32>
    %78 = vector.shape_cast %77 : vector<1x8x8xf32> to vector<8x8xf32>
    %79 = arith.truncf %78 : vector<8x8xf32> to vector<8x8xbf16>
    %80 = vector.extract_strided_slice %70 {offsets = [3, 0, 0], sizes = [1, 8, 8], strides = [1, 1, 1]} : vector<4x8x8xf32> to vector<1x8x8xf32>
    %81 = vector.shape_cast %80 : vector<1x8x8xf32> to vector<8x8xf32>
    %82 = arith.truncf %81 : vector<8x8xf32> to vector<8x8xbf16>
    %83 = tpu.concatenate %73, %76, %79, %82 in 1 : vector<8x8xbf16>, vector<8x8xbf16>, vector<8x8xbf16>, vector<8x8xbf16> -> vector<8x32xbf16>
    %c0_29 = arith.constant 0 : index
    %c0_30 = arith.constant 0 : index
    %84 = vector.load %arg11[%c0_29, %c0_30] : memref<32x32xbf16, #tpu.memory_space<vmem>>, vector<32x32xbf16>
    %cst_31 = arith.constant dense<0.000000e+00> : vector<8x32xf32>
    %85 = tpu.matmul %83, %84, %cst_31 {dimension_numbers = #tpu.dot_dimension_numbers<[1], [0], [0], [1], [0, 0, 1, 1], [], []>} : vector<8x32xbf16>, vector<32x32xbf16>, vector<8x32xf32> -> vector<8x32xf32>
    %c0_32 = arith.constant 0 : index
    %c0_33 = arith.constant 0 : index
    %86 = vector.load %arg12[%c0_32, %c0_33] : memref<1x32xf32, #tpu.memory_space<vmem>>, vector<1x32xf32>
    %87 = vector.shape_cast %86 : vector<1x32xf32> to vector<32xf32>
    %88 = vector.shape_cast %87 : vector<32xf32> to vector<1x32xf32>
    %89 = vector.broadcast %88 : vector<1x32xf32> to vector<8x32xf32>
    %90 = arith.addf %85, %89 : vector<8x32xf32>
    %91 = arith.addf %90, %4 : vector<8x32xf32>
    %c0_34 = arith.constant 0 : index
    %c0_35 = arith.constant 0 : index
    %92 = vector.load %arg13[%c0_34, %c0_35] : memref<1x32xf32, #tpu.memory_space<vmem>>, vector<1x32xf32>
    %93 = vector.shape_cast %92 : vector<1x32xf32> to vector<32xf32>
    %c0_36 = arith.constant 0 : index
    %c0_37 = arith.constant 0 : index
    %94 = vector.load %arg14[%c0_36, %c0_37] : memref<1x32xf32, #tpu.memory_space<vmem>>, vector<1x32xf32>
    %95 = vector.shape_cast %94 : vector<1x32xf32> to vector<32xf32>
    %cst_38 = arith.constant dense<0.000000e+00> : vector<8xf32>
    %96 = vector.multi_reduction <add>, %91, %cst_38 [1] : vector<8x32xf32> to vector<8xf32>
    %97 = vector.shape_cast %96 : vector<8xf32> to vector<8x1xf32>
    %cst_39 = arith.constant 3.200000e+01 : f32
    %98 = vector.broadcast %cst_39 : f32 to vector<8x1xf32>
    %99 = arith.divf %97, %98 : vector<8x1xf32>
    %100 = arith.mulf %91, %91 : vector<8x32xf32>
    %cst_40 = arith.constant dense<0.000000e+00> : vector<8xf32>
    %101 = vector.multi_reduction <add>, %100, %cst_40 [1] : vector<8x32xf32> to vector<8xf32>
    %102 = vector.shape_cast %101 : vector<8xf32> to vector<8x1xf32>
    %cst_41 = arith.constant 3.200000e+01 : f32
    %103 = vector.broadcast %cst_41 : f32 to vector<8x1xf32>
    %104 = arith.divf %102, %103 : vector<8x1xf32>
    %105 = arith.mulf %99, %99 : vector<8x1xf32>
    %106 = arith.subf %104, %105 : vector<8x1xf32>
    %107 = vector.broadcast %99 : vector<8x1xf32> to vector<8x32xf32>
    %108 = arith.subf %91, %107 : vector<8x32xf32>
    %cst_42 = arith.constant 9.99999997E-7 : f32
    %109 = vector.broadcast %cst_42 : f32 to vector<8x1xf32>
    %110 = arith.addf %106, %109 : vector<8x1xf32>
    %111 = math.rsqrt %110 : vector<8x1xf32>
    %112 = vector.broadcast %111 : vector<8x1xf32> to vector<8x32xf32>
    %113 = arith.mulf %108, %112 : vector<8x32xf32>
    %114 = vector.shape_cast %93 : vector<32xf32> to vector<1x32xf32>
    %115 = vector.broadcast %114 : vector<1x32xf32> to vector<8x32xf32>
    %116 = arith.mulf %113, %115 : vector<8x32xf32>
    %117 = vector.shape_cast %95 : vector<32xf32> to vector<1x32xf32>
    %118 = vector.broadcast %117 : vector<1x32xf32> to vector<8x32xf32>
    %119 = arith.addf %116, %118 : vector<8x32xf32>
    %120 = arith.truncf %119 : vector<8x32xf32> to vector<8x32xbf16>
    %c0_43 = arith.constant 0 : index
    %c0_44 = arith.constant 0 : index
    %121 = vector.load %arg15[%c0_43, %c0_44] : memref<32x64xbf16, #tpu.memory_space<vmem>>, vector<32x64xbf16>
    %cst_45 = arith.constant dense<0.000000e+00> : vector<8x64xf32>
    %122 = tpu.matmul %120, %121, %cst_45 {dimension_numbers = #tpu.dot_dimension_numbers<[1], [0], [0], [1], [0, 0, 1, 1], [], []>} : vector<8x32xbf16>, vector<32x64xbf16>, vector<8x64xf32> -> vector<8x64xf32>
    %c0_46 = arith.constant 0 : index
    %c0_47 = arith.constant 0 : index
    %123 = vector.load %arg16[%c0_46, %c0_47] : memref<1x64xf32, #tpu.memory_space<vmem>>, vector<1x64xf32>
    %124 = vector.shape_cast %123 : vector<1x64xf32> to vector<64xf32>
    %125 = vector.shape_cast %124 : vector<64xf32> to vector<1x64xf32>
    %126 = vector.broadcast %125 : vector<1x64xf32> to vector<8x64xf32>
    %127 = arith.addf %122, %126 : vector<8x64xf32>
    %128 = arith.truncf %127 : vector<8x64xf32> to vector<8x64xbf16>
    %cst_48 = arith.constant 5.000000e-01 : bf16
    %129 = vector.broadcast %cst_48 : bf16 to vector<8x64xbf16>
    %130 = arith.mulf %129, %128 : vector<8x64xbf16>
    %cst_49 = arith.constant 4.467770e-02 : bf16
    %131 = vector.broadcast %cst_49 : bf16 to vector<8x64xbf16>
    %132 = arith.mulf %131, %128 : vector<8x64xbf16>
    %133 = arith.mulf %132, %128 : vector<8x64xbf16>
    %134 = arith.mulf %133, %128 : vector<8x64xbf16>
    %135 = arith.addf %128, %134 : vector<8x64xbf16>
    %cst_50 = arith.constant 7.968750e-01 : bf16
    %136 = vector.broadcast %cst_50 : bf16 to vector<8x64xbf16>
    %137 = arith.mulf %136, %135 : vector<8x64xbf16>
    %138 = math.tanh %137 : vector<8x64xbf16>
    %cst_51 = arith.constant 1.000000e+00 : bf16
    %139 = vector.broadcast %cst_51 : bf16 to vector<8x64xbf16>
    %140 = arith.addf %139, %138 : vector<8x64xbf16>
    %141 = arith.mulf %130, %140 : vector<8x64xbf16>
    %c0_52 = arith.constant 0 : index
    %c0_53 = arith.constant 0 : index
    %142 = vector.load %arg17[%c0_52, %c0_53] : memref<64x32xbf16, #tpu.memory_space<vmem>>, vector<64x32xbf16>
    %cst_54 = arith.constant dense<0.000000e+00> : vector<8x32xf32>
    %143 = tpu.matmul %141, %142, %cst_54 {dimension_numbers = #tpu.dot_dimension_numbers<[1], [0], [0], [1], [0, 0, 1, 1], [], []>} : vector<8x64xbf16>, vector<64x32xbf16>, vector<8x32xf32> -> vector<8x32xf32>
    %c0_55 = arith.constant 0 : index
    %c0_56 = arith.constant 0 : index
    %144 = vector.load %arg18[%c0_55, %c0_56] : memref<1x32xf32, #tpu.memory_space<vmem>>, vector<1x32xf32>
    %145 = vector.shape_cast %144 : vector<1x32xf32> to vector<32xf32>
    %146 = vector.shape_cast %145 : vector<32xf32> to vector<1x32xf32>
    %147 = vector.broadcast %146 : vector<1x32xf32> to vector<8x32xf32>
    %148 = arith.addf %143, %147 : vector<8x32xf32>
    %149 = arith.addf %148, %91 : vector<8x32xf32>
    %c0_57 = arith.constant 0 : index
    %c0_58 = arith.constant 0 : index
    %c0_59 = arith.constant 0 : index
    %150 = vector.load %arg19[%c0_57, %c0_58, %c0_59] : memref<1x8x32xf32, #tpu.memory_space<vmem>>, vector<1x8x32xf32>
    %151 = vector.shape_cast %150 : vector<1x8x32xf32> to vector<8x32xf32>
    %152 = vector.shape_cast %149 : vector<8x32xf32> to vector<1x8x32xf32>
    tpu.vector_store %arg19[%c0_57, %c0_58, %c0_59], %152 {strides = array<i32>} : memref<1x8x32xf32, #tpu.memory_space<vmem>>, vector<1x8x32xf32>,
    return
  }
  func.func @transform_0(%arg0: i32, %arg1: i32) -> (i32, i32, i32) {
    %c0_i32 = arith.constant 0 : i32
    %c0_i32_0 = arith.constant 0 : i32
    %c0_i32_1 = arith.constant 0 : i32
    return %arg0, %c0_i32, %c0_i32_0 : i32, i32, i32
  }
  func.func @transform_1(%arg0: i32, %arg1: i32) -> (i32, i32, i32) {
    %c0_i32 = arith.constant 0 : i32
    %c0_i32_0 = arith.constant 0 : i32
    return %arg0, %arg1, %c0_i32 : i32, i32, i32
  }
  func.func @transform_2(%arg0: i32, %arg1: i32) -> (i32, i32, i32) {
    %c0_i32 = arith.constant 0 : i32
    %c0_i32_0 = arith.constant 0 : i32
    %c0_i32_1 = arith.constant 0 : i32
    return %arg0, %c0_i32, %c0_i32_0 : i32, i32, i32
  }
  func.func @transform_3(%arg0: i32, %arg1: i32) -> (i32, i32) {
    %c0_i32 = arith.constant 0 : i32
    %c0_i32_0 = arith.constant 0 : i32
    %c0_i32_1 = arith.constant 0 : i32
    return %c0_i32, %c0_i32_0 : i32, i32
  }
  func.func @transform_4(%arg0: i32, %arg1: i32) -> (i32, i32) {
    %c0_i32 = arith.constant 0 : i32
    %c0_i32_0 = arith.constant 0 : i32
    %c0_i32_1 = arith.constant 0 : i32
    return %c0_i32, %c0_i32_0 : i32, i32
  }
  func.func @transform_5(%arg0: i32, %arg1: i32) -> (i32, i32) {
    %c0_i32 = arith.constant 0 : i32
    %c0_i32_0 = arith.constant 0 : i32
    %c0_i32_1 = arith.constant 0 : i32
    return %c0_i32, %c0_i32_0 : i32, i32
  }
  func.func @transform_6(%arg0: i32, %arg1: i32) -> (i32, i32) {
    %c0_i32 = arith.constant 0 : i32
    %c0_i32_0 = arith.constant 0 : i32
    %c0_i32_1 = arith.constant 0 : i32
    return %c0_i32, %c0_i32_0 : i32, i32
  }
  func.func @transform_7(%arg0: i32, %arg1: i32) -> (i32, i32) {
    %c0_i32 = arith.constant 0 : i32
    %c0_i32_0 = arith.constant 0 : i32
    %c0_i32_1 = arith.constant 0 : i32
    return %c0_i32, %c0_i32_0 : i32, i32
  }
  func.func @transform_8(%arg0: i32, %arg1: i32) -> (i32, i32) {
    %c0_i32 = arith.constant 0 : i32
    %c0_i32_0 = arith.constant 0 : i32
    %c0_i32_1 = arith.constant 0 : i32
    return %c0_i32, %c0_i32_0 : i32, i32
  }
  func.func @transform_9(%arg0: i32, %arg1: i32) -> (i32, i32) {
    %c0_i32 = arith.constant 0 : i32
    %c0_i32_0 = arith.constant 0 : i32
    %c0_i32_1 = arith.constant 0 : i32
    return %c0_i32, %c0_i32_0 : i32, i32
  }
  func.func @transform_10(%arg0: i32, %arg1: i32) -> (i32, i32) {
    %c0_i32 = arith.constant 0 : i32
    %c0_i32_0 = arith.constant 0 : i32
    %c0_i32_1 = arith.constant 0 : i32
    return %c0_i32, %c0_i32_0 : i32, i32
  }
  func.func @transform_11(%arg0: i32, %arg1: i32) -> (i32, i32) {
    %c0_i32 = arith.constant 0 : i32
    %c0_i32_0 = arith.constant 0 : i32
    %c0_i32_1 = arith.constant 0 : i32
    return %c0_i32, %c0_i32_0 : i32, i32
  }
  func.func @transform_12(%arg0: i32, %arg1: i32) -> (i32, i32) {
    %c0_i32 = arith.constant 0 : i32
    %c0_i32_0 = arith.constant 0 : i32
    %c0_i32_1 = arith.constant 0 : i32
    return %c0_i32, %c0_i32_0 : i32, i32
  }
  func.func @transform_13(%arg0: i32, %arg1: i32) -> (i32, i32) {
    %c0_i32 = arith.constant 0 : i32
    %c0_i32_0 = arith.constant 0 : i32
    %c0_i32_1 = arith.constant 0 : i32
    return %c0_i32, %c0_i32_0 : i32, i32
  }
  func.func @transform_14(%arg0: i32, %arg1: i32) -> (i32, i32) {
    %c0_i32 = arith.constant 0 : i32
    %c0_i32_0 = arith.constant 0 : i32
    %c0_i32_1 = arith.constant 0 : i32
    return %c0_i32, %c0_i32_0 : i32, i32
  }
  func.func @transform_15(%arg0: i32, %arg1: i32) -> (i32, i32) {
    %c0_i32 = arith.constant 0 : i32
    %c0_i32_0 = arith.constant 0 : i32
    %c0_i32_1 = arith.constant 0 : i32
    return %c0_i32, %c0_i32_0 : i32, i32
  }
  func.func @transform_16(%arg0: i32, %arg1: i32) -> (i32, i32) {
    %c0_i32 = arith.constant 0 : i32
    %c0_i32_0 = arith.constant 0 : i32
    %c0_i32_1 = arith.constant 0 : i32
    return %c0_i32, %c0_i32_0 : i32, i32
  }
  func.func @transform_17(%arg0: i32, %arg1: i32) -> (i32, i32, i32) {
    %c0_i32 = arith.constant 0 : i32
    %c0_i32_0 = arith.constant 0 : i32
    return %arg0, %arg1, %c0_i32 : i32, i32, i32
  }
}

</mosaic_0001>

<llo_original>
// kernel: tpu_custom_call.1
$region0: #{tpu_custom_call.1}
  #allocation0 [shape = 'u32[]', space=smem, size = 0x4, offset = 0x4, fixed_abs, tag = 'smem constant byte address 0x4 - core index']
  #allocation1 [shape = 'u32[144,128]{1,0:T(1,128)}', space=vmem, size = 0x12000, scoped, tag = 'internal scratch']
  #allocation2 [shape = 'bf16[4,16,8]{2,1,0:T(8,128)(2,1)}', space=vmem, size = 0x4000, scoped, tag = 'scratch operand']
  #allocation3 [shape = 'bf16[4,16,8]{2,1,0:T(8,128)(2,1)}', space=vmem, size = 0x4000, scoped, tag = 'scratch operand']
  %s0 = inlined_call_operand.vmem [shape: f32[2,16,32], index: 0, kind: input, shape index: {}]
  %s1 = inlined_call_operand.hbm [shape: f32[2,16,32], index: 1, kind: input, shape index: {}]
  %s2 = inlined_call_operand.hbm [shape: f32[2,1,16], index: 2, kind: input, shape index: {}]
  %s3 = inlined_call_operand.hbm [shape: f32[1,32], index: 3, kind: input, shape index: {}]
  %s4 = inlined_call_operand.hbm [shape: f32[1,32], index: 4, kind: input, shape index: {}]
  %s5 = inlined_call_operand.vmem [shape: bf16[32,32], index: 5, kind: input, shape index: {}]
  %s6 = inlined_call_operand.hbm [shape: f32[1,32], index: 6, kind: input, shape index: {}]
  %s7 = inlined_call_operand.hbm [shape: bf16[32,64], index: 7, kind: input, shape index: {}]
  %s8 = inlined_call_operand.hbm [shape: f32[1,64], index: 8, kind: input, shape index: {}]
  %s9 = inlined_call_operand.vmem [shape: bf16[32,32], index: 9, kind: input, shape index: {}]
  %s10 = inlined_call_operand.vmem [shape: f32[1,32], index: 10, kind: input, shape index: {}]
  %s11 = inlined_call_operand.vmem [shape: f32[1,32], index: 11, kind: input, shape index: {}]
  %s12 = inlined_call_operand.vmem [shape: f32[1,32], index: 12, kind: input, shape index: {}]
  %s13 = inlined_call_operand.hbm [shape: bf16[32,64], index: 13, kind: input, shape index: {}]
  %s14 = inlined_call_operand.vmem [shape: f32[1,64], index: 14, kind: input, shape index: {}]
  %s15 = inlined_call_operand.vmem [shape: bf16[64,32], index: 15, kind: input, shape index: {}]
  %s16 = inlined_call_operand.vmem [shape: f32[1,32], index: 16, kind: input, shape index: {}]
  %s17 = inlined_call_operand.hbm [shape: f32[2,16,32], index: 17, kind: output, shape index: {}]
  %s18 = sld [smem:[#allocation0]]
  $region137: #{tpu_custom_call.1} parent=0
    _
  %s20 = ssub.s32 1, %s18
  %s21 = scalar_select 0, %s20, %s18
  $region1: #{tpu_custom_call.1} parent=0
    #allocation4 [shape = 'u8[8192]{0}', space=vmem, size = 0x2000, scoped, tag = 'input window, operand 1']
    #allocation5 [shape = 's32[2]{0}', space=sflag, size = 0x8, scoped, tag = 'scoped memory for tpu_custom_call.1']
    #allocation6 [shape = 's32[2]{0}', space=sflag, size = 0x8, scoped, tag = 'scoped memory for tpu_custom_call.1']
    #allocation7 [shape = 'u8[1024]{0}', space=vmem, size = 0x400, scoped, tag = 'input window, operand 2']
    #allocation8 [shape = 's32[2]{0}', space=sflag, size = 0x8, scoped, tag = 'scoped memory for tpu_custom_call.1']
    #allocation9 [shape = 'u8[512]{0}', space=vmem, size = 0x400, scoped, tag = 'input window, operand 3, single buffered']
    #allocation10 [shape = 'u8[512]{0}', space=vmem, size = 0x400, scoped, tag = 'input window, operand 4, single buffered']
    #allocation11 [shape = 's32[1]{0}', space=sflag, size = 0x4, scoped, tag = 'scoped memory for tpu_custom_call.1']
    #allocation12 [shape = 'u8[512]{0}', space=vmem, size = 0x400, scoped, tag = 'input window, operand 6, single buffered']
    #allocation13 [shape = 'u8[8192]{0}', space=vmem, size = 0x2000, scoped, tag = 'input window, operand 7, single buffered']
    #allocation14 [shape = 's32[1]{0}', space=sflag, size = 0x4, scoped, tag = 'scoped memory for tpu_custom_call.1']
    #allocation15 [shape = 'u8[512]{0}', space=vmem, size = 0x400, scoped, tag = 'input window, operand 8, single buffered']
    #allocation16 [shape = 'u8[8192]{0}', space=vmem, size = 0x2000, scoped, tag = 'input window, operand 13, single buffered']
    #allocation17 [shape = 's32[1]{0}', space=sflag, size = 0x4, scoped, tag = 'scoped memory for tpu_custom_call.1']
    #allocation18 [shape = 'u8[8192]{0}', space=vmem, size = 0x2000, scoped, tag = 'output window, operand 0']
    %22 = vsyncpa [#allocation5], 0
    %s23 = scalar_lea.sflag [#allocation5], 1
    %24 = vsyncpa %s23, 0
    %25 = vsyncpa [#allocation8], 0
    %s26 = scalar_lea.sflag [#allocation8], 1
    %27 = vsyncpa %s26, 0
    %28 = vsyncpa [#allocation11], 0
    %29 = vsyncpa [#allocation14], 0
    %30 = vsyncpa [#allocation17], 0
    %31 = vsyncpa [#allocation6], 0
    %s32 = scalar_lea.sflag [#allocation6], 1
    %33 = vsyncpa %s32, 0
    loop: start=0, step=1, limit=6
    $region2: #{tpu_custom_call.1} parent=1 // loop_pre_header
      _
    $region3: #{tpu_custom_call.1} parent=1 // loop_header
      %s35 = sphi 0, %s39
      %p36 = scmp.ge.s32.totalorder %s35, 6
      %s42 = sphi 0, %s54
      %s43 = sphi 0, %s50
      %s44 = sphi 0, %s42
      %s45 = sphi 0, %s43
      %s46 = sphi 0, %s44
      %s47 = sphi 0, %s45
      %s57 = sphi 0, %s59
      %s60 = sphi 0, %s57
      %s61 = sphi 0, %s60
      %s77 = sphi 0, %s61
      %s85 = sphi 0, %s87
      %s88 = sphi 0, %s85
      %s89 = sphi 0, %s88
      %s105 = sphi 0, %s89
      %s111 = sphi 0, %s113
      %s114 = sphi 0, %s111
      %s115 = sphi 0, %s114
      %s131 = sphi 0, %s115
      %s135 = sphi 0, %s135
      %s137 = sphi 0, %s135
      %s138 = sphi 0, %s137
      %s152 = sphi 0, %s138
      %s156 = sphi 0, %s156
      %s158 = sphi 0, %s156
      %s159 = sphi 0, %s158
      %s173 = sphi 0, %s159
      %s177 = sphi 0, %s177
      %s179 = sphi 0, %s177
      %s180 = sphi 0, %s179
      %s194 = sphi 0, %s180
      %s198 = sphi 0, %s198
      %s200 = sphi 0, %s198
      %s201 = sphi 0, %s200
      %s215 = sphi 0, %s201
      %s219 = sphi 0, %s219
      %s221 = sphi 0, %s219
      %s222 = sphi 0, %s221
      %s236 = sphi 0, %s222
      %s240 = sphi 0, %s240
      %s242 = sphi 0, %s240
      %s243 = sphi 0, %s242
      %s257 = sphi 0, %s243
      %s261 = sphi 0, %s261
      %s263 = sphi 0, %s261
      %s264 = sphi 0, %s263
      %s278 = sphi 0, %s264
      %s282 = sphi 0, %s282
      %s284 = sphi 0, %s282
      %s285 = sphi 0, %s284
      %s299 = sphi 0, %s285
      %s303 = sphi 0, %s303
      %s305 = sphi 0, %s303
      %s306 = sphi 0, %s305
      %s320 = sphi 0, %s306
      %s324 = sphi 0, %s324
      %s326 = sphi 0, %s324
      %s327 = sphi 0, %s326
      %s341 = sphi 0, %s327
      %s345 = sphi 0, %s345
      %s347 = sphi 0, %s345
      %s348 = sphi 0, %s347
      %s362 = sphi 0, %s348
      %s366 = sphi 0, %s366
      %s368 = sphi 0, %s366
      %s369 = sphi 0, %s368
      %s383 = sphi 0, %s369
      %s387 = sphi 0, %s387
      %s389 = sphi 0, %s387
      %s390 = sphi 0, %s389
      %s404 = sphi 0, %s390
      %s408 = sphi 0, %s408
      %s410 = sphi 0, %s408
      %s411 = sphi 0, %s410
      %s425 = sphi 0, %s411
      %s433 = sphi 0, %s435
      %s436 = sphi 0, %s433
      %s437 = sphi 0, %s436
      %s453 = sphi 0, %s437
    $region4: #{tpu_custom_call.1} parent=1 // loop_header_branch
      %38 = sbr.rel (%p36) target = $region8
    $region5: #{tpu_custom_call.1} parent=1 // loop_body
      %s40 = ssub.s32 %s35, 1
      %s41 = ssub.s32 %s35, 2
      %s48 = sadd.s32 1, %s43
      %p49 = scmp.ge.s32.totalorder %s48, 2
      %s50 = scalar_select %p49, 0, %s48
      %s51 = sadd.s32 1, %s42
      %s52 = scalar_select %p49, %s51, %s42
      %p53 = scmp.ge.s32.totalorder %s52, 2
      %s54 = scalar_select %p53, 0, %s52
      %s55 = ssub.s32 %s42, %s54
      %p56 = scmp.eq.s32.totalorder %s55, 0
      %s58 = sadd.s32 %s57, 1
      %s59 = scalar_select %p56, %s57, %s58
      %p62 = pneg %p56
      %p63 = scmp.eq.s32.totalorder %s35, 3
      %p64 = por %p62, %p63
      %p65 = scmp.ne.s32.totalorder %s57, %s60
      %p66 = scmp.eq.s32.totalorder %s35, 0
      %p67 = por %p65, %p66
      %p68 = scmp.ne.s32.totalorder %s57, %s60
      %p69 = scmp.eq.s32.totalorder %s40, 3
      %p70 = por %p68, %p69
      %p71 = scmp.ne.s32.totalorder %s60, %s61
      %p72 = scmp.eq.s32.totalorder %s40, 0
      %p73 = por %p71, %p72
      %p74 = scmp.ne.s32.totalorder %s60, %s61
      %p75 = scmp.eq.s32.totalorder %s41, 3
      %p76 = por %p74, %p75
      %p78 = scmp.ne.s32.totalorder %s61, %s77
      %p79 = scmp.eq.s32.totalorder %s41, 0
      %p80 = por %p78, %p79
      %s81 = ssub.s32 %s42, %s54
      %s82 = ssub.s32 %s43, %s50
      %s83 = sor.u32 %s81, %s82
      %p84 = scmp.eq.s32.totalorder %s83, 0
      %s86 = sadd.s32 %s85, 1
      %s87 = scalar_select %p84, %s85, %s86
      %p90 = pneg %p84
      %p91 = scmp.eq.s32.totalorder %s35, 3
      %p92 = por %p90, %p91
      %p93 = scmp.ne.s32.totalorder %s85, %s88
      %p94 = scmp.eq.s32.totalorder %s35, 0
      %p95 = por %p93, %p94
      %p96 = scmp.ne.s32.totalorder %s85, %s88
      %p97 = scmp.eq.s32.totalorder %s40, 3
      %p98 = por %p96, %p97
      %p99 = scmp.ne.s32.totalorder %s88, %s89
      %p100 = scmp.eq.s32.totalorder %s40, 0
      %p101 = por %p99, %p100
      %p102 = scmp.ne.s32.totalorder %s88, %s89
      %p103 = scmp.eq.s32.totalorder %s41, 3
      %p104 = por %p102, %p103
      %p106 = scmp.ne.s32.totalorder %s89, %s105
      %p107 = scmp.eq.s32.totalorder %s41, 0
      %p108 = por %p106, %p107
      %s109 = ssub.s32 %s42, %s54
      %p110 = scmp.eq.s32.totalorder %s109, 0
      %s112 = sadd.s32 %s111, 1
      %s113 = scalar_select %p110, %s111, %s112
      %p116 = pneg %p110
      %p117 = scmp.eq.s32.totalorder %s35, 3
      %p118 = por %p116, %p117
      %p119 = scmp.ne.s32.totalorder %s111, %s114
      %p120 = scmp.eq.s32.totalorder %s35, 0
      %p121 = por %p119, %p120
      %p122 = scmp.ne.s32.totalorder %s111, %s114
      %p123 = scmp.eq.s32.totalorder %s40, 3
      %p124 = por %p122, %p123
      %p125 = scmp.ne.s32.totalorder %s114, %s115
      %p126 = scmp.eq.s32.totalorder %s40, 0
      %p127 = por %p125, %p126
      %p128 = scmp.ne.s32.totalorder %s114, %s115
      %p129 = scmp.eq.s32.totalorder %s41, 3
      %p130 = por %p128, %p129
      %p132 = scmp.ne.s32.totalorder %s115, %s131
      %p133 = scmp.eq.s32.totalorder %s41, 0
      %p134 = por %p132, %p133
      %s136 = sadd.s32 %s135, 1
      %p139 = scmp.eq.s32.totalorder %s35, 3
      %p140 = scmp.ne.s32.totalorder %s135, %s137
      %p141 = scmp.eq.s32.totalorder %s35, 0
      %p142 = por %p140, %p141
      %p143 = scmp.ne.s32.totalorder %s135, %s137
      %p144 = scmp.eq.s32.totalorder %s40, 3
      %p145 = por %p143, %p144
      %p146 = scmp.ne.s32.totalorder %s137, %s138
      %p147 = scmp.eq.s32.totalorder %s40, 0
      %p148 = por %p146, %p147
      %p149 = scmp.ne.s32.totalorder %s137, %s138
      %p150 = scmp.eq.s32.totalorder %s41, 3
      %p151 = por %p149, %p150
      %p153 = scmp.ne.s32.totalorder %s138, %s152
      %p154 = scmp.eq.s32.totalorder %s41, 0
      %p155 = por %p153, %p154
      %s157 = sadd.s32 %s156, 1
      %p160 = scmp.eq.s32.totalorder %s35, 3
      %p161 = scmp.ne.s32.totalorder %s156, %s158
      %p162 = scmp.eq.s32.totalorder %s35, 0
      %p163 = por %p161, %p162
      %p164 = scmp.ne.s32.totalorder %s156, %s158
      %p165 = scmp.eq.s32.totalorder %s40, 3
      %p166 = por %p164, %p165
      %p167 = scmp.ne.s32.totalorder %s158, %s159
      %p168 = scmp.eq.s32.totalorder %s40, 0
      %p169 = por %p167, %p168
      %p170 = scmp.ne.s32.totalorder %s158, %s159
      %p171 = scmp.eq.s32.totalorder %s41, 3
      %p172 = por %p170, %p171
      %p174 = scmp.ne.s32.totalorder %s159, %s173
      %p175 = scmp.eq.s32.totalorder %s41, 0
      %p176 = por %p174, %p175
      %s178 = sadd.s32 %s177, 1
      %p181 = scmp.eq.s32.totalorder %s35, 3
      %p182 = scmp.ne.s32.totalorder %s177, %s179
      %p183 = scmp.eq.s32.totalorder %s35, 0
      %p184 = por %p182, %p183
      %p185 = scmp.ne.s32.totalorder %s177, %s179
      %p186 = scmp.eq.s32.totalorder %s40, 3
      %p187 = por %p185, %p186
      %p188 = scmp.ne.s32.totalorder %s179, %s180
      %p189 = scmp.eq.s32.totalorder %s40, 0
      %p190 = por %p188, %p189
      %p191 = scmp.ne.s32.totalorder %s179, %s180
      %p192 = scmp.eq.s32.totalorder %s41, 3
      %p193 = por %p191, %p192
      %p195 = scmp.ne.s32.totalorder %s180, %s194
      %p196 = scmp.eq.s32.totalorder %s41, 0
      %p197 = por %p195, %p196
      %s199 = sadd.s32 %s198, 1
      %p202 = scmp.eq.s32.totalorder %s35, 3
      %p203 = scmp.ne.s32.totalorder %s198, %s200
      %p204 = scmp.eq.s32.totalorder %s35, 0
      %p205 = por %p203, %p204
      %p206 = scmp.ne.s32.totalorder %s198, %s200
      %p207 = scmp.eq.s32.totalorder %s40, 3
      %p208 = por %p206, %p207
      %p209 = scmp.ne.s32.totalorder %s200, %s201
      %p210 = scmp.eq.s32.totalorder %s40, 0
      %p211 = por %p209, %p210
      %p212 = scmp.ne.s32.totalorder %s200, %s201
      %p213 = scmp.eq.s32.totalorder %s41, 3
      %p214 = por %p212, %p213
      %p216 = scmp.ne.s32.totalorder %s201, %s215
      %p217 = scmp.eq.s32.totalorder %s41, 0
      %p218 = por %p216, %p217
      %s220 = sadd.s32 %s219, 1
      %p223 = scmp.eq.s32.totalorder %s35, 3
      %p224 = scmp.ne.s32.totalorder %s219, %s221
      %p225 = scmp.eq.s32.totalorder %s35, 0
      %p226 = por %p224, %p225
      %p227 = scmp.ne.s32.totalorder %s219, %s221
      %p228 = scmp.eq.s32.totalorder %s40, 3
      %p229 = por %p227, %p228
      %p230 = scmp.ne.s32.totalorder %s221, %s222
      %p231 = scmp.eq.s32.totalorder %s40, 0
      %p232 = por %p230, %p231
      %p233 = scmp.ne.s32.totalorder %s221, %s222
      %p234 = scmp.eq.s32.totalorder %s41, 3
      %p235 = por %p233, %p234
      %p237 = scmp.ne.s32.totalorder %s222, %s236
      %p238 = scmp.eq.s32.totalorder %s41, 0
      %p239 = por %p237, %p238
      %s241 = sadd.s32 %s240, 1
      %p244 = scmp.eq.s32.totalorder %s35, 3
      %p245 = scmp.ne.s32.totalorder %s240, %s242
      %p246 = scmp.eq.s32.totalorder %s35, 0
      %p247 = por %p245, %p246
      %p248 = scmp.ne.s32.totalorder %s240, %s242
      %p249 = scmp.eq.s32.totalorder %s40, 3
      %p250 = por %p248, %p249
      %p251 = scmp.ne.s32.totalorder %s242, %s243
      %p252 = scmp.eq.s32.totalorder %s40, 0
      %p253 = por %p251, %p252
      %p254 = scmp.ne.s32.totalorder %s242, %s243
      %p255 = scmp.eq.s32.totalorder %s41, 3
      %p256 = por %p254, %p255
      %p258 = scmp.ne.s32.totalorder %s243, %s257
      %p259 = scmp.eq.s32.totalorder %s41, 0
      %p260 = por %p258, %p259
      %s262 = sadd.s32 %s261, 1
      %p265 = scmp.eq.s32.totalorder %s35, 3
      %p266 = scmp.ne.s32.totalorder %s261, %s263
      %p267 = scmp.eq.s32.totalorder %s35, 0
      %p268 = por %p266, %p267
      %p269 = scmp.ne.s32.totalorder %s261, %s263
      %p270 = scmp.eq.s32.totalorder %s40, 3
      %p271 = por %p269, %p270
      %p272 = scmp.ne.s32.totalorder %s263, %s264
      %p273 = scmp.eq.s32.totalorder %s40, 0
      %p274 = por %p272, %p273
      %p275 = scmp.ne.s32.totalorder %s263, %s264
      %p276 = scmp.eq.s32.totalorder %s41, 3
      %p277 = por %p275, %p276
      %p279 = scmp.ne.s32.totalorder %s264, %s278
      %p280 = scmp.eq.s32.totalorder %s41, 0
      %p281 = por %p279, %p280
      %s283 = sadd.s32 %s282, 1
      %p286 = scmp.eq.s32.totalorder %s35, 3
      %p287 = scmp.ne.s32.totalorder %s282, %s284
      %p288 = scmp.eq.s32.totalorder %s35, 0
      %p289 = por %p287, %p288
      %p290 = scmp.ne.s32.totalorder %s282, %s284
      %p291 = scmp.eq.s32.totalorder %s40, 3
      %p292 = por %p290, %p291
      %p293 = scmp.ne.s32.totalorder %s284, %s285
      %p294 = scmp.eq.s32.totalorder %s40, 0
      %p295 = por %p293, %p294
      %p296 = scmp.ne.s32.totalorder %s284, %s285
      %p297 = scmp.eq.s32.totalorder %s41, 3
      %p298 = por %p296, %p297
      %p300 = scmp.ne.s32.totalorder %s285, %s299
      %p301 = scmp.eq.s32.totalorder %s41, 0
      %p302 = por %p300, %p301
      %s304 = sadd.s32 %s303, 1
      %p307 = scmp.eq.s32.totalorder %s35, 3
      %p308 = scmp.ne.s32.totalorder %s303, %s305
      %p309 = scmp.eq.s32.totalorder %s35, 0
      %p310 = por %p308, %p309
      %p311 = scmp.ne.s32.totalorder %s303, %s305
      %p312 = scmp.eq.s32.totalorder %s40, 3
      %p313 = por %p311, %p312
      %p314 = scmp.ne.s32.totalorder %s305, %s306
      %p315 = scmp.eq.s32.totalorder %s40, 0
      %p316 = por %p314, %p315
      %p317 = scmp.ne.s32.totalorder %s305, %s306
      %p318 = scmp.eq.s32.totalorder %s41, 3
      %p319 = por %p317, %p318
      %p321 = scmp.ne.s32.totalorder %s306, %s320
      %p322 = scmp.eq.s32.totalorder %s41, 0
      %p323 = por %p321, %p322
      %s325 = sadd.s32 %s324, 1
      %p328 = scmp.eq.s32.totalorder %s35, 3
      %p329 = scmp.ne.s32.totalorder %s324, %s326
      %p330 = scmp.eq.s32.totalorder %s35, 0
      %p331 = por %p329, %p330
      %p332 = scmp.ne.s32.totalorder %s324, %s326
      %p333 = scmp.eq.s32.totalorder %s40, 3
      %p334 = por %p332, %p333
      %p335 = scmp.ne.s32.totalorder %s326, %s327
      %p336 = scmp.eq.s32.totalorder %s40, 0
      %p337 = por %p335, %p336
      %p338 = scmp.ne.s32.totalorder %s326, %s327
      %p339 = scmp.eq.s32.totalorder %s41, 3
      %p340 = por %p338, %p339
      %p342 = scmp.ne.s32.totalorder %s327, %s341
      %p343 = scmp.eq.s32.totalorder %s41, 0
      %p344 = por %p342, %p343
      %s346 = sadd.s32 %s345, 1
      %p349 = scmp.eq.s32.totalorder %s35, 3
      %p350 = scmp.ne.s32.totalorder %s345, %s347
      %p351 = scmp.eq.s32.totalorder %s35, 0
      %p352 = por %p350, %p351
      %p353 = scmp.ne.s32.totalorder %s345, %s347
      %p354 = scmp.eq.s32.totalorder %s40, 3
      %p355 = por %p353, %p354
      %p356 = scmp.ne.s32.totalorder %s347, %s348
      %p357 = scmp.eq.s32.totalorder %s40, 0
      %p358 = por %p356, %p357
      %p359 = scmp.ne.s32.totalorder %s347, %s348
      %p360 = scmp.eq.s32.totalorder %s41, 3
      %p361 = por %p359, %p360
      %p363 = scmp.ne.s32.totalorder %s348, %s362
      %p364 = scmp.eq.s32.totalorder %s41, 0
      %p365 = por %p363, %p364
      %s367 = sadd.s32 %s366, 1
      %p370 = scmp.eq.s32.totalorder %s35, 3
      %p371 = scmp.ne.s32.totalorder %s366, %s368
      %p372 = scmp.eq.s32.totalorder %s35, 0
      %p373 = por %p371, %p372
      %p374 = scmp.ne.s32.totalorder %s366, %s368
      %p375 = scmp.eq.s32.totalorder %s40, 3
      %p376 = por %p374, %p375
      %p377 = scmp.ne.s32.totalorder %s368, %s369
      %p378 = scmp.eq.s32.totalorder %s40, 0
      %p379 = por %p377, %p378
      %p380 = scmp.ne.s32.totalorder %s368, %s369
      %p381 = scmp.eq.s32.totalorder %s41, 3
      %p382 = por %p380, %p381
      %p384 = scmp.ne.s32.totalorder %s369, %s383
      %p385 = scmp.eq.s32.totalorder %s41, 0
      %p386 = por %p384, %p385
      %s388 = sadd.s32 %s387, 1
      %p391 = scmp.eq.s32.totalorder %s35, 3
      %p392 = scmp.ne.s32.totalorder %s387, %s389
      %p393 = scmp.eq.s32.totalorder %s35, 0
      %p394 = por %p392, %p393
      %p395 = scmp.ne.s32.totalorder %s387, %s389
      %p396 = scmp.eq.s32.totalorder %s40, 3
      %p397 = por %p395, %p396
      %p398 = scmp.ne.s32.totalorder %s389, %s390
      %p399 = scmp.eq.s32.totalorder %s40, 0
      %p400 = por %p398, %p399
      %p401 = scmp.ne.s32.totalorder %s389, %s390
      %p402 = scmp.eq.s32.totalorder %s41, 3
      %p403 = por %p401, %p402
      %p405 = scmp.ne.s32.totalorder %s390, %s404
      %p406 = scmp.eq.s32.totalorder %s41, 0
      %p407 = por %p405, %p406
      %s409 = sadd.s32 %s408, 1
      %p412 = scmp.eq.s32.totalorder %s35, 3
      %p413 = scmp.ne.s32.totalorder %s408, %s410
      %p414 = scmp.eq.s32.totalorder %s35, 0
      %p415 = por %p413, %p414
      %p416 = scmp.ne.s32.totalorder %s408, %s410
      %p417 = scmp.eq.s32.totalorder %s40, 3
      %p418 = por %p416, %p417
      %p419 = scmp.ne.s32.totalorder %s410, %s411
      %p420 = scmp.eq.s32.totalorder %s40, 0
      %p421 = por %p419, %p420
      %p422 = scmp.ne.s32.totalorder %s410, %s411
      %p423 = scmp.eq.s32.totalorder %s41, 3
      %p424 = por %p422, %p423
      %p426 = scmp.ne.s32.totalorder %s411, %s425
      %p427 = scmp.eq.s32.totalorder %s41, 0
      %p428 = por %p426, %p427
      %s429 = ssub.s32 %s42, %s54
      %s430 = ssub.s32 %s43, %s50
      %s431 = sor.u32 %s429, %s430
      %p432 = scmp.eq.s32.totalorder %s431, 0
      %s434 = sadd.s32 %s433, 1
      %s435 = scalar_select %p432, %s433, %s434
      %p438 = pneg %p432
      %p439 = scmp.eq.s32.totalorder %s35, 3
      %p440 = por %p438, %p439
      %p441 = scmp.ne.s32.totalorder %s433, %s436
      %p442 = scmp.eq.s32.totalorder %s35, 0
      %p443 = por %p441, %p442
      %p444 = scmp.ne.s32.totalorder %s433, %s436
      %p445 = scmp.eq.s32.totalorder %s40, 3
      %p446 = por %p444, %p445
      %p447 = scmp.ne.s32.totalorder %s436, %s437
      %p448 = scmp.eq.s32.totalorder %s40, 0
      %p449 = por %p447, %p448
      %p450 = scmp.ne.s32.totalorder %s436, %s437
      %p451 = scmp.eq.s32.totalorder %s41, 3
      %p452 = por %p450, %p451
      %p454 = scmp.ne.s32.totalorder %s437, %s453
      %p455 = scmp.eq.s32.totalorder %s41, 0
      %p456 = por %p454, %p455
      %p457 = scmp.le.s32.totalorder 1, %s35
      %p458 = scmp.lt.s32.totalorder %s35, 5
      %p459 = pnand %p457, %p458
      %p460 = pneg %p459
      // Predicated region
      $region9: #{tpu_custom_call.1} parent=5 // pred_check
        _
      $region10: #{tpu_custom_call.1} parent=5 // pred_check_branch
        %462 = sbr.rel (%p459) target = $region12
      $region11: #{tpu_custom_call.1} parent=5 // pred_region
        %s463 = ssub.s32 %s35, 1
        // Predicated region
        $region13: #{tpu_custom_call.1} parent=11 // pred_check
          %p464 = pneg %p73
        $region14: #{tpu_custom_call.1} parent=11 // pred_check_branch
          %466 = sbr.rel (%p464) target = $region16
        $region15: #{tpu_custom_call.1} parent=11 // pred_region
          %p467 = scmp.lt.s32.totalorder %s44, 1
          %s468 = scalar_select %p467, %s44, 1
          %s469 = smul.addr %s468, 2
          %s470 = smul.addr %s469, 8
          %s471 = scalar_lea.vmem %s0, %s470
        $region16: #{tpu_custom_call.1} parent=11 // pred_fallthru
          _
        // Predicated region
        $region17: #{tpu_custom_call.1} parent=11 // pred_check
          %p472 = pneg %p148
        $region18: #{tpu_custom_call.1} parent=11 // pred_check_branch
          %474 = sbr.rel (%p472) target = $region20
        $region19: #{tpu_custom_call.1} parent=11 // pred_region
          %s476 = ssub.s32 16, 16
          %477 = vsyncadd [#allocation8], %s476
          %s479 = sshll.u32 [#allocation9], 4
          %s480 = int_to_ptr.vmem [resolvable:$true] %s479
          %482 = dma.hbm_to_vmem [thread:$0]  %s3, 16, %s480, [#allocation8]
        $region20: #{tpu_custom_call.1} parent=11 // pred_fallthru
          _
        // Predicated region
        $region21: #{tpu_custom_call.1} parent=11 // pred_check
          %p483 = pneg %p169
        $region22: #{tpu_custom_call.1} parent=11 // pred_check_branch
          %485 = sbr.rel (%p483) target = $region24
        $region23: #{tpu_custom_call.1} parent=11 // pred_region
          %s487 = ssub.s32 16, 16
          %488 = vsyncadd [#allocation11], %s487
          %s490 = sshll.u32 [#allocation10], 4
          %s491 = int_to_ptr.vmem [resolvable:$true] %s490
          %493 = dma.hbm_to_vmem [thread:$0]  %s4, 16, %s491, [#allocation11]
        $region24: #{tpu_custom_call.1} parent=11 // pred_fallthru
          _
        // Predicated region
        $region25: #{tpu_custom_call.1} parent=11 // pred_check
          %p494 = pneg %p190
        $region26: #{tpu_custom_call.1} parent=11 // pred_check_branch
          %496 = sbr.rel (%p494) target = $region28
        $region27: #{tpu_custom_call.1} parent=11 // pred_region
          _
        $region28: #{tpu_custom_call.1} parent=11 // pred_fallthru
          _
        // Predicated region
        $region29: #{tpu_custom_call.1} parent=11 // pred_check
          %p497 = pneg %p211
        $region30: #{tpu_custom_call.1} parent=11 // pred_check_branch
          %499 = sbr.rel (%p497) target = $region32
        $region31: #{tpu_custom_call.1} parent=11 // pred_region
          %s501 = ssub.s32 16, 16
          %502 = vsyncadd [#allocation11], %s501
          %s504 = sshll.u32 [#allocation12], 4
          %s505 = int_to_ptr.vmem [resolvable:$true] %s504
          %507 = dma.hbm_to_vmem [thread:$0]  %s6, 16, %s505, [#allocation11]
        $region32: #{tpu_custom_call.1} parent=11 // pred_fallthru
          _
        // Predicated region
        $region33: #{tpu_custom_call.1} parent=11 // pred_check
          %p508 = pneg %p232
        $region34: #{tpu_custom_call.1} parent=11 // pred_check_branch
          %510 = sbr.rel (%p508) target = $region36
        $region35: #{tpu_custom_call.1} parent=11 // pred_region
          %s512 = ssub.s32 256, 256
          %513 = vsyncadd [#allocation14], %s512
          %s514 = sshll.u32 [#allocation13], 4
          %s515 = int_to_ptr.vmem [resolvable:$true] %s514
          %520 = dma.hbm_to_vmem [thread:$0]  %s7, 256, %s515, [#allocation14], 64, 64, 4
        $region36: #{tpu_custom_call.1} parent=11 // pred_fallthru
          _
        // Predicated region
        $region37: #{tpu_custom_call.1} parent=11 // pred_check
          %p521 = pneg %p253
        $region38: #{tpu_custom_call.1} parent=11 // pred_check_branch
          %523 = sbr.rel (%p521) target = $region40
        $region39: #{tpu_custom_call.1} parent=11 // pred_region
          %s525 = ssub.s32 16, 16
          %526 = vsyncadd [#allocation14], %s525
          %s528 = sshll.u32 [#allocation15], 4
          %s529 = int_to_ptr.vmem [resolvable:$true] %s528
          %531 = dma.hbm_to_vmem [thread:$0]  %s8, 16, %s529, [#allocation14]
        $region40: #{tpu_custom_call.1} parent=11 // pred_fallthru
          _
        // Predicated region
        $region41: #{tpu_custom_call.1} parent=11 // pred_check
          %p532 = pneg %p274
        $region42: #{tpu_custom_call.1} parent=11 // pred_check_branch
          %534 = sbr.rel (%p532) target = $region44
        $region43: #{tpu_custom_call.1} parent=11 // pred_region
          _
        $region44: #{tpu_custom_call.1} parent=11 // pred_fallthru
          _
        // Predicated region
        $region45: #{tpu_custom_call.1} parent=11 // pred_check
          %p535 = pneg %p295
        $region46: #{tpu_custom_call.1} parent=11 // pred_check_branch
          %537 = sbr.rel (%p535) target = $region48
        $region47: #{tpu_custom_call.1} parent=11 // pred_region
          _
        $region48: #{tpu_custom_call.1} parent=11 // pred_fallthru
          _
        // Predicated region
        $region49: #{tpu_custom_call.1} parent=11 // pred_check
          %p538 = pneg %p316
        $region50: #{tpu_custom_call.1} parent=11 // pred_check_branch
          %540 = sbr.rel (%p538) target = $region52
        $region51: #{tpu_custom_call.1} parent=11 // pred_region
          _
        $region52: #{tpu_custom_call.1} parent=11 // pred_fallthru
          _
        // Predicated region
        $region53: #{tpu_custom_call.1} parent=11 // pred_check
          %p541 = pneg %p337
        $region54: #{tpu_custom_call.1} parent=11 // pred_check_branch
          %543 = sbr.rel (%p541) target = $region56
        $region55: #{tpu_custom_call.1} parent=11 // pred_region
          _
        $region56: #{tpu_custom_call.1} parent=11 // pred_fallthru
          _
        // Predicated region
        $region57: #{tpu_custom_call.1} parent=11 // pred_check
          %p544 = pneg %p358
        $region58: #{tpu_custom_call.1} parent=11 // pred_check_branch
          %546 = sbr.rel (%p544) target = $region60
        $region59: #{tpu_custom_call.1} parent=11 // pred_region
          %s548 = ssub.s32 256, 256
          %549 = vsyncadd [#allocation17], %s548
          %s550 = sshll.u32 [#allocation16], 4
          %s551 = int_to_ptr.vmem [resolvable:$true] %s550
          %556 = dma.hbm_to_vmem [thread:$0]  %s13, 256, %s551, [#allocation17], 64, 64, 4
        $region60: #{tpu_custom_call.1} parent=11 // pred_fallthru
          _
        // Predicated region
        $region61: #{tpu_custom_call.1} parent=11 // pred_check
          %p557 = pneg %p379
        $region62: #{tpu_custom_call.1} parent=11 // pred_check_branch
          %559 = sbr.rel (%p557) target = $region64
        $region63: #{tpu_custom_call.1} parent=11 // pred_region
          _
        $region64: #{tpu_custom_call.1} parent=11 // pred_fallthru
          _
        // Predicated region
        $region65: #{tpu_custom_call.1} parent=11 // pred_check
          %p560 = pneg %p400
        $region66: #{tpu_custom_call.1} parent=11 // pred_check_branch
          %562 = sbr.rel (%p560) target = $region68
        $region67: #{tpu_custom_call.1} parent=11 // pred_region
          _
        $region68: #{tpu_custom_call.1} parent=11 // pred_fallthru
          _
        // Predicated region
        $region69: #{tpu_custom_call.1} parent=11 // pred_check
          %p563 = pneg %p421
        $region70: #{tpu_custom_call.1} parent=11 // pred_check_branch
          %565 = sbr.rel (%p563) target = $region72
        $region71: #{tpu_custom_call.1} parent=11 // pred_region
          _
        $region72: #{tpu_custom_call.1} parent=11 // pred_fallthru
          _
      $region12: #{tpu_custom_call.1} parent=5 // pred_fallthru
        _
      %p566 = scmp.lt.s32.totalorder %s35, 4
      // Predicated region
      $region73: #{tpu_custom_call.1} parent=5 // pred_check
        %p567 = pneg %p566
      $region74: #{tpu_custom_call.1} parent=5 // pred_check_branch
        %569 = sbr.rel (%p567) target = $region76
      $region75: #{tpu_custom_call.1} parent=5 // pred_region
        // Predicated region
        $region77: #{tpu_custom_call.1} parent=75 // pred_check
          %p570 = pneg %p95
        $region78: #{tpu_custom_call.1} parent=75 // pred_check_branch
          %572 = sbr.rel (%p570) target = $region80
        $region79: #{tpu_custom_call.1} parent=75 // pred_region
          %s573 = sand.u32 %s85, 1
          %s574 = scalar_lea.sflag [#allocation5], %s573
          %s575 = sand.u32 %s85, 1
          %s576 = smul.addr %s575, 8
          %s577 = scalar_lea.vmem [#allocation4], %s576
          %s579 = ssub.s32 128, 128
          %580 = vsyncadd %s574, %s579
          %s581 = smul.addr %s42, 2
          %s582 = sadd.s32 %s43, %s581
          %s583 = smul.addr %s582, 128
          %s584 = scalar_lea.hbm %s1, %s583
          %s586 = sshll.u32 %s577, 4
          %s587 = int_to_ptr.vmem [resolvable:$true] %s586
          %589 = dma.hbm_to_vmem [thread:$0]  %s584, 128, %s587, %s574
        $region80: #{tpu_custom_call.1} parent=75 // pred_fallthru
          _
        // Predicated region
        $region81: #{tpu_custom_call.1} parent=75 // pred_check
          %p590 = pneg %p121
        $region82: #{tpu_custom_call.1} parent=75 // pred_check_branch
          %592 = sbr.rel (%p590) target = $region84
        $region83: #{tpu_custom_call.1} parent=75 // pred_region
          %s593 = sand.u32 %s35, 1
          %s594 = scalar_lea.sflag [#allocation8], %s593
          %s595 = sand.u32 %s111, 1
          %s596 = scalar_lea.vmem [#allocation7], %s595
          %s598 = ssub.s32 16, 16
          %599 = vsyncadd %s594, %s598
          %s600 = smul.addr %s42, 16
          %s601 = scalar_lea.hbm %s2, %s600
          %s603 = sshll.u32 %s596, 4
          %s604 = int_to_ptr.vmem [resolvable:$true] %s603
          %606 = dma.hbm_to_vmem [thread:$0]  %s601, 16, %s604, %s594
        $region84: #{tpu_custom_call.1} parent=75 // pred_fallthru
          _
      $region76: #{tpu_custom_call.1} parent=5 // pred_fallthru
        _
      %p607 = scmp.le.s32.totalorder 1, %s35
      %p608 = scmp.lt.s32.totalorder %s35, 5
      %p609 = pnand %p607, %p608
      %p610 = pneg %p609
      // Predicated region
      $region85: #{tpu_custom_call.1} parent=5 // pred_check
        _
      $region86: #{tpu_custom_call.1} parent=5 // pred_check_branch
        %612 = sbr.rel (%p609) target = $region88
      $region87: #{tpu_custom_call.1} parent=5 // pred_region
        %s613 = ssub.s32 %s35, 1
        %s614 = sand.u32 %s88, 1
        %s615 = scalar_lea.sflag [#allocation5], %s614
        %s616 = sand.u32 %s88, 1
        %s617 = smul.addr %s616, 8
        %s618 = scalar_lea.vmem [#allocation4], %s617
        // Predicated region
        $region89: #{tpu_custom_call.1} parent=87 // pred_check
          %p619 = pneg %p101
        $region90: #{tpu_custom_call.1} parent=87 // pred_check_branch
          %621 = sbr.rel (%p619) target = $region92
        $region91: #{tpu_custom_call.1} parent=87 // pred_region
          %622 = dma.done %s615, 128
        $region92: #{tpu_custom_call.1} parent=87 // pred_fallthru
          _
        %s623 = sand.u32 %s40, 1
        %s624 = scalar_lea.sflag [#allocation8], %s623
        %s625 = sand.u32 %s114, 1
        %s626 = scalar_lea.vmem [#allocation7], %s625
        // Predicated region
        $region93: #{tpu_custom_call.1} parent=87 // pred_check
          %p627 = pneg %p127
        $region94: #{tpu_custom_call.1} parent=87 // pred_check_branch
          %629 = sbr.rel (%p627) target = $region96
        $region95: #{tpu_custom_call.1} parent=87 // pred_region
          %630 = dma.done %s624, 16
        $region96: #{tpu_custom_call.1} parent=87 // pred_fallthru
          _
        // Predicated region
        $region97: #{tpu_custom_call.1} parent=87 // pred_check
          %p631 = pneg %p148
        $region98: #{tpu_custom_call.1} parent=87 // pred_check_branch
          %633 = sbr.rel (%p631) target = $region100
        $region99: #{tpu_custom_call.1} parent=87 // pred_region
          %634 = dma.done [#allocation8], 16
        $region100: #{tpu_custom_call.1} parent=87 // pred_fallthru
          _
        // Predicated region
        $region101: #{tpu_custom_call.1} parent=87 // pred_check
          %p635 = pneg %p169
        $region102: #{tpu_custom_call.1} parent=87 // pred_check_branch
          %637 = sbr.rel (%p635) target = $region104
        $region103: #{tpu_custom_call.1} parent=87 // pred_region
          %638 = dma.done [#allocation11], 16
        $region104: #{tpu_custom_call.1} parent=87 // pred_fallthru
          _
        // Predicated region
        $region105: #{tpu_custom_call.1} parent=87 // pred_check
          %p639 = pneg %p211
        $region106: #{tpu_custom_call.1} parent=87 // pred_check_branch
          %641 = sbr.rel (%p639) target = $region108
        $region107: #{tpu_custom_call.1} parent=87 // pred_region
          %642 = dma.done [#allocation11], 16
        $region108: #{tpu_custom_call.1} parent=87 // pred_fallthru
          _
        // Predicated region
        $region109: #{tpu_custom_call.1} parent=87 // pred_check
          %p643 = pneg %p232
        $region110: #{tpu_custom_call.1} parent=87 // pred_check_branch
          %645 = sbr.rel (%p643) target = $region112
        $region111: #{tpu_custom_call.1} parent=87 // pred_region
          %646 = dma.done [#allocation14], 256
        $region112: #{tpu_custom_call.1} parent=87 // pred_fallthru
          _
        // Predicated region
        $region113: #{tpu_custom_call.1} parent=87 // pred_check
          %p647 = pneg %p253
        $region114: #{tpu_custom_call.1} parent=87 // pred_check_branch
          %649 = sbr.rel (%p647) target = $region116
        $region115: #{tpu_custom_call.1} parent=87 // pred_region
          %650 = dma.done [#allocation14], 16
        $region116: #{tpu_custom_call.1} parent=87 // pred_fallthru
          _
        // Predicated region
        $region117: #{tpu_custom_call.1} parent=87 // pred_check
          %p651 = pneg %p358
        $region118: #{tpu_custom_call.1} parent=87 // pred_check_branch
          %653 = sbr.rel (%p651) target = $region120
        $region119: #{tpu_custom_call.1} parent=87 // pred_region
          %654 = dma.done [#allocation17], 256
        $region120: #{tpu_custom_call.1} parent=87 // pred_fallthru
          _
        %p655 = scmp.lt.s32.totalorder %s44, 1
        %s656 = scalar_select %p655, %s44, 1
        %s657 = smul.addr %s656, 2
        %s658 = smul.addr %s657, 8
        %s659 = scalar_lea.vmem %s0, %s658
        %p660 = pneg %p73
        %p661 = pneg %p70
        %s662 = sand.u32 %s88, 1
        %s663 = scalar_lea.sflag [#allocation5], %s662
        %s664 = sand.u32 %s88, 1
        %s665 = smul.addr %s664, 8
        %s666 = scalar_lea.vmem [#allocation4], %s665
        %p667 = pneg %p101
        %p668 = pneg %p98
        %s669 = sand.u32 %s40, 1
        %s670 = scalar_lea.sflag [#allocation8], %s669
        %s671 = sand.u32 %s114, 1
        %s672 = scalar_lea.vmem [#allocation7], %s671
        %p673 = pneg %p127
        %p674 = pneg %p124
        %p675 = pneg %p148
        %p676 = pneg %p145
        %p677 = pneg %p169
        %p678 = pneg %p166
        %p679 = pneg %p190
        %p680 = pneg %p187
        %p681 = pneg %p211
        %p682 = pneg %p208
        %p683 = pneg %p232
        %p684 = pneg %p229
        %p685 = pneg %p253
        %p686 = pneg %p250
        %p687 = pneg %p274
        %p688 = pneg %p271
        %p689 = pneg %p295
        %p690 = pneg %p292
        %p691 = pneg %p316
        %p692 = pneg %p313
        %p693 = pneg %p337
        %p694 = pneg %p334
        %p695 = pneg %p358
        %p696 = pneg %p355
        %p697 = pneg %p379
        %p698 = pneg %p376
        %p699 = pneg %p400
        %p700 = pneg %p397
        %p701 = pneg %p421
        %p702 = pneg %p418
        %p703 = pneg %p449
        %p704 = pneg %p446
        %s705 = sand.u32 %s436, 1
        %s706 = scalar_lea.sflag [#allocation6], %s705
        %s707 = sand.u32 %s436, 1
        %s708 = smul.addr %s707, 8
        %s709 = scalar_lea.vmem [#allocation18], %s708
        %p710 = scmp.lt.s32.totalorder %s44, 1
        %s711 = scalar_select %p710, %s44, 1
        %s712 = smul.addr %s711, 2
        %s713 = smul.addr %s712, 8
        %s714 = scalar_lea.vmem %s0, %s713
        %p720 = scmp.eq.s32.totalorder %s45, 0
        // Predicated region
        $region121: #{tpu_custom_call.1} parent=87 // pred_check
          %p721 = pneg %p720
        $region122: #{tpu_custom_call.1} parent=87 // pred_check_branch
          %723 = sbr.rel (%p721) target = $region124
        $region123: #{tpu_custom_call.1} parent=87 // pred_region
          %v724 = vld [vmem:[%s714] sm:$0xff]
          %v725 = vld [vmem:[%s714 + $0x8] sm:$0xff]
          %v726 = vld [vmem:[#allocation9] sm:$0x1]
          %v727 = vld [vmem:[#allocation10] sm:$0x1]
          %vm728 = vcmask 261120
          %v729 = vsel %vm728, %v724, 0.0
          %730 = vadd.xlane.f32.xlu0 %v729
          %v731 = vpop.xlane.xlu0 %730
          %v732 = vsel %vm728, %v725, 0.0
          %733 = vadd.xlane.f32.xlu0 %v732
          %v734 = vpop.xlane.xlu0 %733
          %v735 = vrcp.pop 32.0
          %v736 = vmul.f32 %v731, %v735
          %v737 = vmul.f32 %v734, %v735
          %v738 = vmul.f32 %v724, %v724
          %v739 = vmul.f32 %v725, %v725
          %v740 = vsel %vm728, %v738, 0.0
          %741 = vadd.xlane.f32.xlu0 %v740
          %v742 = vpop.xlane.xlu0 %741
          %v743 = vsel %vm728, %v739, 0.0
          %744 = vadd.xlane.f32.xlu0 %v743
          %v745 = vpop.xlane.xlu0 %744
          %v746 = vmul.f32 %v742, %v735
          %v747 = vmul.f32 %v745, %v735
          %v748 = vmul.f32 %v736, %v736
          %v749 = vmul.f32 %v737, %v737
          %v750 = vsub.f32 %v746, %v748
          %v751 = vsub.f32 %v747, %v749
          %v752 = vsub.f32 %v724, %v736
          %v753 = vsub.f32 %v725, %v737
          %v754 = vadd.f32 %v750, 1e-06
          %v755 = vadd.f32 %v751, 1e-06
          %v756 = vrsqrt.pop %v754
          %v757 = vrsqrt.pop %v755
          %v758 = vmul.f32 %v752, %v756
          %v759 = vmul.f32 %v753, %v757
          %v761 = vlaneseq
          %v762 = vshrl.u32 %v761, 7
          %v763 = vsub.s32 0, %v762
          %v764 = vrot.slane %v726, %v763
          %v766 = vmul.f32 %v758, %v764
          %v767 = vmul.f32 %v759, %v764
          %v769 = vlaneseq
          %v770 = vshrl.u32 %v769, 7
          %v771 = vsub.s32 0, %v770
          %v772 = vrot.slane %v727, %v771
          %v774 = vadd.f32 %v766, %v772
          %v775 = vadd.f32 %v767, %v772
          %v776 = vpack.c.bf16 %v775, %v774
          %v777 = vld [vmem:[#allocation13] sm:$0xf]
          %v778 = vld [vmem:[#allocation13 + $0x4] sm:$0xf]
          %v779 = vld [vmem:[#allocation13 + $0x8] sm:$0xf]
          %v780 = vld [vmem:[#allocation13 + $0xc] sm:$0xf]
          %v781 = vld [vmem:[#allocation15] sm:$0x1]
          %v783 = vlaneseq
          %v784 = vshrl.u32 %v783, 7
          %v785 = vsub.s32 0, %v784
          %v786 = vrot.slane %v781, %v785
          %v792 = vunpack.c.l.b16 %v777
          %v793 = vunpack.c.l.b16 %v778
          %v794 = vunpack.c.l.b16 %v779
          %v795 = vunpack.c.l.b16 %v780
          %v796 = vpack.c.b16 %v793, %v792
          %v797 = vpack.c.b16 %v795, %v794
          %v801 = vsel %vm728, %v776, 0
          %803 = vmatprep.subr.bf16.mxu0 0
          %804 = vmatpush1.bf16.msra.mxu0 0
          %805 = vmatprep.subr.bf16.mxu0 0
          %806 = vmatpush1.bf16.msra.mxu0 0
          %807 = vmatprep.subr.bf16.mxu0 0
          %808 = vmatpush1.bf16.msra.mxu0 0
          %809 = vmatprep.subr.bf16.mxu0 0
          %810 = vmatpush1.bf16.msra.mxu0 0
          %811 = vmatprep.subr.bf16.mxu0 0
          %812 = vmatpush1.bf16.msra.mxu0 0
          %813 = vmatprep.subr.bf16.mxu0 0
          %814 = vmatpush1.bf16.msra.mxu0 0
          %815 = vmatprep.subr.bf16.mxu0 0
          %816 = vmatpush1.bf16.msra.mxu0 %v797
          %817 = vmatprep.subr.bf16.mxu0 0
          %818 = vmatpush1.bf16.msra.mxu0 %v796
          %819 = vmatprep.subr.bf16.mxu0 0
          %820 = vmatpush2.bf16.msra.mxu0 0
          %821 = vmatprep.subr.bf16.mxu0 0
          %822 = vmatpush2.bf16.msra.mxu0 0
          %823 = vmatprep.subr.bf16.mxu0 0
          %824 = vmatpush2.bf16.msra.mxu0 0
          %825 = vmatprep.subr.bf16.mxu0 0
          %826 = vmatpush2.bf16.msra.mxu0 0
          %827 = vmatprep.subr.bf16.mxu0 0
          %828 = vmatpush2.bf16.msra.mxu0 0
          %829 = vmatprep.subr.bf16.mxu0 0
          %830 = vmatpush2.bf16.msra.mxu0 0
          %831 = vmatprep.subr.bf16.mxu0 0
          %832 = vmatpush2.bf16.msra.mxu0 0
          %833 = vmatprep.subr.bf16.mxu0 0
          %834 = vmatpush2.bf16.msra.mxu0 0
          %835 = vmatprep.mubr.bf16.mxu0 0
          %836 = vmatmul.mubr.bf16.gmra.mxu0 %v801
          %v837 = vpop.f32.mrf.mxu0
          %v838 = vadd.f32 %v786, %v837
          %v839 = vpop.f32.mrf.mxu0
          %v840 = vpop.f32.mrf.mxu0
          %v841 = vadd.f32 %v786, %v840
          %v842 = vpop.f32.mrf.mxu0
          %843 = vdwg.mxu0
          %v844 = vpack.c.bf16 %v841, %v838
          %v846 = vunpack.c.l.b16 %v844
          %v847 = vunpack.c.h.b16 %v844
          %v848 = vpack.c.b16 %v846, %v846
          %v849 = vpack.c.b16 %v847, %v847
          %vm852 = vcmask 60416
          %853 = vst.msk [vmem:[#allocation2] sm:$0xf] %vm852, %v848
          %854 = vst.msk [vmem:[#allocation2 + $0x4] sm:$0xf] %vm852, %v849
          %855 = vrot.lane.b32.xlu0 %v848, 96
          %v856 = vpop.permute.xlu0 %855
          %857 = vrot.lane.b32.xlu0 %v849, 96
          %v858 = vpop.permute.xlu0 %857
          %861 = vst.msk [vmem:[#allocation3] sm:$0xf] %vm852, %v856
          %862 = vst.msk [vmem:[#allocation3 + $0x4] sm:$0xf] %vm852, %v858
          %863 = vrot.lane.b32.xlu0 %v848, 120
          %v864 = vpop.permute.xlu0 %863
          %865 = vrot.lane.b32.xlu0 %v849, 120
          %v866 = vpop.permute.xlu0 %865
          %s869 = scalar_lea.vmem [#allocation2], 8
          %870 = vst.msk [vmem:[%s869] sm:$0xf] %vm852, %v864
          %871 = vst.msk [vmem:[%s869 + $0x4] sm:$0xf] %vm852, %v866
          %872 = vrot.lane.b32.xlu0 %v848, 88
          %v873 = vpop.permute.xlu0 %872
          %874 = vrot.lane.b32.xlu0 %v849, 88
          %v875 = vpop.permute.xlu0 %874
          %s878 = scalar_lea.vmem [#allocation3], 8
          %879 = vst.msk [vmem:[%s878] sm:$0xf] %vm852, %v873
          %880 = vst.msk [vmem:[%s878 + $0x4] sm:$0xf] %vm852, %v875
          %881 = vrot.lane.b32.xlu0 %v848, 112
          %v882 = vpop.permute.xlu0 %881
          %883 = vrot.lane.b32.xlu0 %v849, 112
          %v884 = vpop.permute.xlu0 %883
          %s887 = scalar_lea.vmem [#allocation2], 16
          %888 = vst.msk [vmem:[%s887] sm:$0xf] %vm852, %v882
          %889 = vst.msk [vmem:[%s887 + $0x4] sm:$0xf] %vm852, %v884
          %890 = vrot.lane.b32.xlu0 %v848, 80
          %v891 = vpop.permute.xlu0 %890
          %892 = vrot.lane.b32.xlu0 %v849, 80
          %v893 = vpop.permute.xlu0 %892
          %s896 = scalar_lea.vmem [#allocation3], 16
          %897 = vst.msk [vmem:[%s896] sm:$0xf] %vm852, %v891
          %898 = vst.msk [vmem:[%s896 + $0x4] sm:$0xf] %vm852, %v893
          %899 = vrot.lane.b32.xlu0 %v848, 104
          %v900 = vpop.permute.xlu0 %899
          %901 = vrot.lane.b32.xlu0 %v849, 104
          %v902 = vpop.permute.xlu0 %901
          %s905 = scalar_lea.vmem [#allocation2], 24
          %906 = vst.msk [vmem:[%s905] sm:$0xf] %vm852, %v900
          %907 = vst.msk [vmem:[%s905 + $0x4] sm:$0xf] %vm852, %v902
          %908 = vrot.lane.b32.xlu0 %v848, 72
          %v909 = vpop.permute.xlu0 %908
          %910 = vrot.lane.b32.xlu0 %v849, 72
          %v911 = vpop.permute.xlu0 %910
          %s914 = scalar_lea.vmem [#allocation3], 24
          %915 = vst.msk [vmem:[%s914] sm:$0xf] %vm852, %v909
          %916 = vst.msk [vmem:[%s914 + $0x4] sm:$0xf] %vm852, %v911
        $region124: #{tpu_custom_call.1} parent=87 // pred_fallthru
          _
        %v917 = vld [vmem:[%s618] sm:$0xff]
        %v918 = vld [vmem:[#allocation9] sm:$0x1]
        %v919 = vld [vmem:[#allocation10] sm:$0x1]
        %vm920 = vcmask 261120
        %v921 = vsel %vm920, %v917, 0.0
        %922 = vadd.xlane.f32.xlu0 %v921
        %v923 = vpop.xlane.xlu0 %922
        %v924 = vrcp.pop 32.0
        %v925 = vmul.f32 %v923, %v924
        %v926 = vmul.f32 %v917, %v917
        %v927 = vsel %vm920, %v926, 0.0
        %928 = vadd.xlane.f32.xlu0 %v927
        %v929 = vpop.xlane.xlu0 %928
        %v930 = vmul.f32 %v929, %v924
        %v931 = vmul.f32 %v925, %v925
        %v932 = vsub.f32 %v930, %v931
        %v933 = vsub.f32 %v917, %v925
        %v934 = vadd.f32 %v932, 1e-06
        %v935 = vrsqrt.pop %v934
        %v936 = vmul.f32 %v933, %v935
        %v938 = vlaneseq
        %v939 = vshrl.u32 %v938, 7
        %v940 = vsub.s32 0, %v939
        %v941 = vrot.slane %v918, %v940
        %v943 = vmul.f32 %v936, %v941
        %v945 = vlaneseq
        %v946 = vshrl.u32 %v945, 7
        %v947 = vsub.s32 0, %v946
        %v948 = vrot.slane %v919, %v947
        %v950 = vadd.f32 %v943, %v948
        %v951 = vpack.c.bf16 %v950, %v950
        %v952 = vld [vmem:[%s5] sm:$0xf]
        %v953 = vld [vmem:[%s5 + $0x4] sm:$0xf]
        %v954 = vld [vmem:[%s5 + $0x8] sm:$0xf]
        %v955 = vld [vmem:[%s5 + $0xc] sm:$0xf]
        %v956 = vld [vmem:[#allocation12] sm:$0x1]
        %v958 = vlaneseq
        %v959 = vshrl.u32 %v958, 7
        %v960 = vsub.s32 0, %v959
        %v961 = vrot.slane %v956, %v960
        %v967 = vunpack.c.l.b16 %v952
        %v968 = vunpack.c.l.b16 %v953
        %v969 = vunpack.c.l.b16 %v954
        %v970 = vunpack.c.l.b16 %v955
        %v971 = vpack.c.b16 %v968, %v967
        %v972 = vpack.c.b16 %v970, %v969
        %v976 = vsel %vm920, %v951, 0
        %978 = vmatprep.subr.bf16.mxu0 0
        %979 = vmatpush1.bf16.msra.mxu0 0
        %980 = vmatprep.subr.bf16.mxu0 0
        %981 = vmatpush1.bf16.msra.mxu0 0
        %982 = vmatprep.subr.bf16.mxu0 0
        %983 = vmatpush1.bf16.msra.mxu0 0
        %984 = vmatprep.subr.bf16.mxu0 0
        %985 = vmatpush1.bf16.msra.mxu0 0
        %986 = vmatprep.subr.bf16.mxu0 0
        %987 = vmatpush1.bf16.msra.mxu0 0
        %988 = vmatprep.subr.bf16.mxu0 0
        %989 = vmatpush1.bf16.msra.mxu0 0
        %990 = vmatprep.subr.bf16.mxu0 0
        %991 = vmatpush1.bf16.msra.mxu0 %v972
        %992 = vmatprep.subr.bf16.mxu0 0
        %993 = vmatpush1.bf16.msra.mxu0 %v971
        %994 = vmatprep.subr.bf16.mxu0 0
        %995 = vmatpush2.bf16.msra.mxu0 0
        %996 = vmatprep.subr.bf16.mxu0 0
        %997 = vmatpush2.bf16.msra.mxu0 0
        %998 = vmatprep.subr.bf16.mxu0 0
        %999 = vmatpush2.bf16.msra.mxu0 0
        %1000 = vmatprep.subr.bf16.mxu0 0
        %1001 = vmatpush2.bf16.msra.mxu0 0
        %1002 = vmatprep.subr.bf16.mxu0 0
        %1003 = vmatpush2.bf16.msra.mxu0 0
        %1004 = vmatprep.subr.bf16.mxu0 0
        %1005 = vmatpush2.bf16.msra.mxu0 0
        %1006 = vmatprep.subr.bf16.mxu0 0
        %1007 = vmatpush2.bf16.msra.mxu0 0
        %1008 = vmatprep.subr.bf16.mxu0 0
        %1009 = vmatpush2.bf16.msra.mxu0 0
        %1010 = vmatprep.mubr.bf16.mxu0 0
        %1011 = vmatmul.mubr.bf16.gmra.mxu0 %v976
        %v1012 = vpop.f32.mrf.mxu0
        %v1013 = vadd.f32 %v961, %v1012
        %v1014 = vpop.f32.mrf.mxu0
        %v1015 = vpop.f32.mrf.mxu0
        %v1016 = vpop.f32.mrf.mxu0
        %1017 = vdwg.mxu0
        %v1018 = vpack.c.bf16 %v1013, %v1013
        %1020 = vrot.lane.b32.xlu0 %v1018, 120
        %v1021 = vpop.permute.xlu0 %1020
        %1022 = vrot.lane.b32.xlu0 %v1018, 112
        %v1023 = vpop.permute.xlu0 %1022
        %1024 = vrot.lane.b32.xlu0 %v1018, 104
        %v1025 = vpop.permute.xlu0 %1024
        %v1026 = vld [vmem:[#allocation2] sm:$0xf]
        %v1027 = vld [vmem:[#allocation2 + $0x4] sm:$0xf]
        %v1028 = vld [vmem:[#allocation2 + $0x8] sm:$0xf]
        %v1029 = vld [vmem:[#allocation2 + $0xc] sm:$0xf]
        %v1030 = vld [vmem:[#allocation2 + $0x10] sm:$0xf]
        %v1031 = vld [vmem:[#allocation2 + $0x14] sm:$0xf]
        %v1032 = vld [vmem:[#allocation2 + $0x18] sm:$0xf]
        %v1033 = vld [vmem:[#allocation2 + $0x1c] sm:$0xf]
        %v1034 = vld [vmem:[%s626] sm:$0x1]
        %v1036 = vlaneseq
        %v1037 = vshrl.u32 %v1036, 7
        %v1038 = vsub.s32 0, %v1037
        %v1039 = vrot.slane %v1034, %v1038
        %v1043 = vunpack.c.l.b16 %v1026
        %v1044 = vunpack.c.l.b16 %v1027
        %v1045 = vpack.c.b16 %v1044, %v1043
        %vm1046 = vcmask 64512
        %v1048 = vsel %vm1046, %v1018, 0
        %v1051 = vsel %vm1046, %v1045, 0
        %1053 = vmatprep.subr.bf16.mxu0 0
        %1054 = vmatpush1.bf16.xpose.msra.mxu0 0
        %1055 = vmatprep.subr.bf16.mxu0 0
        %1056 = vmatpush1.bf16.xpose.msra.mxu0 0
        %1057 = vmatprep.subr.bf16.mxu0 0
        %1058 = vmatpush1.bf16.xpose.msra.mxu0 0
        %1059 = vmatprep.subr.bf16.mxu0 0
        %1060 = vmatpush1.bf16.xpose.msra.mxu0 0
        %1061 = vmatprep.subr.bf16.mxu0 0
        %1062 = vmatpush1.bf16.xpose.msra.mxu0 0
        %1063 = vmatprep.subr.bf16.mxu0 0
        %1064 = vmatpush1.bf16.xpose.msra.mxu0 0
        %1065 = vmatprep.subr.bf16.mxu0 0
        %1066 = vmatpush1.bf16.xpose.msra.mxu0 0
        %1067 = vmatprep.subr.bf16.mxu0 0
        %1068 = vmatpush1.bf16.xpose.msra.mxu0 %v1051
        %1069 = vmatprep.subr.bf16.mxu0 0
        %1070 = vmatpush2.bf16.xpose.msra.mxu0 0
        %1071 = vmatprep.subr.bf16.mxu0 0
        %1072 = vmatpush2.bf16.xpose.msra.mxu0 0
        %1073 = vmatprep.subr.bf16.mxu0 0
        %1074 = vmatpush2.bf16.xpose.msra.mxu0 0
        %1075 = vmatprep.subr.bf16.mxu0 0
        %1076 = vmatpush2.bf16.xpose.msra.mxu0 0
        %1077 = vmatprep.subr.bf16.mxu0 0
        %1078 = vmatpush2.bf16.xpose.msra.mxu0 0
        %1079 = vmatprep.subr.bf16.mxu0 0
        %1080 = vmatpush2.bf16.xpose.msra.mxu0 0
        %1081 = vmatprep.subr.bf16.mxu0 0
        %1082 = vmatpush2.bf16.xpose.msra.mxu0 0
        %1083 = vmatprep.subr.bf16.mxu0 0
        %1084 = vmatpush2.bf16.xpose.msra.mxu0 0
        %1085 = vmatprep.mubr.bf16.mxu0 0
        %1086 = vmatmul.mubr.bf16.gmra.mxu0 %v1048
        %v1087 = vpop.f32.mrf.mxu0
        %v1088 = vadd.f32 %v1039, %v1087
        %v1089 = vpop.f32.mrf.mxu0
        %v1090 = vpop.f32.mrf.mxu0
        %v1091 = vpop.f32.mrf.mxu0
        %1092 = vdwg.mxu0
        %v1095 = vunpack.c.l.b16 %v1028
        %v1096 = vunpack.c.l.b16 %v1029
        %v1097 = vpack.c.b16 %v1096, %v1095
        %v1099 = vsel %vm1046, %v1021, 0
        %v1102 = vsel %vm1046, %v1097, 0
        %1104 = vmatprep.subr.bf16.mxu0 0
        %1105 = vmatpush1.bf16.xpose.msra.mxu0 0
        %1106 = vmatprep.subr.bf16.mxu0 0
        %1107 = vmatpush1.bf16.xpose.msra.mxu0 0
        %1108 = vmatprep.subr.bf16.mxu0 0
        %1109 = vmatpush1.bf16.xpose.msra.mxu0 0
        %1110 = vmatprep.subr.bf16.mxu0 0
        %1111 = vmatpush1.bf16.xpose.msra.mxu0 0
        %1112 = vmatprep.subr.bf16.mxu0 0
        %1113 = vmatpush1.bf16.xpose.msra.mxu0 0
        %1114 = vmatprep.subr.bf16.mxu0 0
        %1115 = vmatpush1.bf16.xpose.msra.mxu0 0
        %1116 = vmatprep.subr.bf16.mxu0 0
        %1117 = vmatpush1.bf16.xpose.msra.mxu0 0
        %1118 = vmatprep.subr.bf16.mxu0 0
        %1119 = vmatpush1.bf16.xpose.msra.mxu0 %v1102
        %1120 = vmatprep.subr.bf16.mxu0 0
        %1121 = vmatpush2.bf16.xpose.msra.mxu0 0
        %1122 = vmatprep.subr.bf16.mxu0 0
        %1123 = vmatpush2.bf16.xpose.msra.mxu0 0
        %1124 = vmatprep.subr.bf16.mxu0 0
        %1125 = vmatpush2.bf16.xpose.msra.mxu0 0
        %1126 = vmatprep.subr.bf16.mxu0 0
        %1127 = vmatpush2.bf16.xpose.msra.mxu0 0
        %1128 = vmatprep.subr.bf16.mxu0 0
        %1129 = vmatpush2.bf16.xpose.msra.mxu0 0
        %1130 = vmatprep.subr.bf16.mxu0 0
        %1131 = vmatpush2.bf16.xpose.msra.mxu0 0
        %1132 = vmatprep.subr.bf16.mxu0 0
        %1133 = vmatpush2.bf16.xpose.msra.mxu0 0
        %1134 = vmatprep.subr.bf16.mxu0 0
        %1135 = vmatpush2.bf16.xpose.msra.mxu0 0
        %1136 = vmatprep.mubr.bf16.mxu0 0
        %1137 = vmatmul.mubr.bf16.gmra.mxu0 %v1099
        %v1138 = vpop.f32.mrf.mxu0
        %v1139 = vadd.f32 %v1039, %v1138
        %v1140 = vpop.f32.mrf.mxu0
        %v1141 = vpop.f32.mrf.mxu0
        %v1142 = vpop.f32.mrf.mxu0
        %1143 = vdwg.mxu0
        %v1146 = vunpack.c.l.b16 %v1030
        %v1147 = vunpack.c.l.b16 %v1031
        %v1148 = vpack.c.b16 %v1147, %v1146
        %v1150 = vsel %vm1046, %v1023, 0
        %v1153 = vsel %vm1046, %v1148, 0
        %1155 = vmatprep.subr.bf16.mxu0 0
        %1156 = vmatpush1.bf16.xpose.msra.mxu0 0
        %1157 = vmatprep.subr.bf16.mxu0 0
        %1158 = vmatpush1.bf16.xpose.msra.mxu0 0
        %1159 = vmatprep.subr.bf16.mxu0 0
        %1160 = vmatpush1.bf16.xpose.msra.mxu0 0
        %1161 = vmatprep.subr.bf16.mxu0 0
        %1162 = vmatpush1.bf16.xpose.msra.mxu0 0
        %1163 = vmatprep.subr.bf16.mxu0 0
        %1164 = vmatpush1.bf16.xpose.msra.mxu0 0
        %1165 = vmatprep.subr.bf16.mxu0 0
        %1166 = vmatpush1.bf16.xpose.msra.mxu0 0
        %1167 = vmatprep.subr.bf16.mxu0 0
        %1168 = vmatpush1.bf16.xpose.msra.mxu0 0
        %1169 = vmatprep.subr.bf16.mxu0 0
        %1170 = vmatpush1.bf16.xpose.msra.mxu0 %v1153
        %1171 = vmatprep.subr.bf16.mxu0 0
        %1172 = vmatpush2.bf16.xpose.msra.mxu0 0
        %1173 = vmatprep.subr.bf16.mxu0 0
        %1174 = vmatpush2.bf16.xpose.msra.mxu0 0
        %1175 = vmatprep.subr.bf16.mxu0 0
        %1176 = vmatpush2.bf16.xpose.msra.mxu0 0
        %1177 = vmatprep.subr.bf16.mxu0 0
        %1178 = vmatpush2.bf16.xpose.msra.mxu0 0
        %1179 = vmatprep.subr.bf16.mxu0 0
        %1180 = vmatpush2.bf16.xpose.msra.mxu0 0
        %1181 = vmatprep.subr.bf16.mxu0 0
        %1182 = vmatpush2.bf16.xpose.msra.mxu0 0
        %1183 = vmatprep.subr.bf16.mxu0 0
        %1184 = vmatpush2.bf16.xpose.msra.mxu0 0
        %1185 = vmatprep.subr.bf16.mxu0 0
        %1186 = vmatpush2.bf16.xpose.msra.mxu0 0
        %1187 = vmatprep.mubr.bf16.mxu0 0
        %1188 = vmatmul.mubr.bf16.gmra.mxu0 %v1150
        %v1189 = vpop.f32.mrf.mxu0
        %v1190 = vadd.f32 %v1039, %v1189
        %v1191 = vpop.f32.mrf.mxu0
        %v1192 = vpop.f32.mrf.mxu0
        %v1193 = vpop.f32.mrf.mxu0
        %1194 = vdwg.mxu0
        %v1197 = vunpack.c.l.b16 %v1032
        %v1198 = vunpack.c.l.b16 %v1033
        %v1199 = vpack.c.b16 %v1198, %v1197
        %v1201 = vsel %vm1046, %v1025, 0
        %v1204 = vsel %vm1046, %v1199, 0
        %1206 = vmatprep.subr.bf16.mxu0 0
        %1207 = vmatpush1.bf16.xpose.msra.mxu0 0
        %1208 = vmatprep.subr.bf16.mxu0 0
        %1209 = vmatpush1.bf16.xpose.msra.mxu0 0
        %1210 = vmatprep.subr.bf16.mxu0 0
        %1211 = vmatpush1.bf16.xpose.msra.mxu0 0
        %1212 = vmatprep.subr.bf16.mxu0 0
        %1213 = vmatpush1.bf16.xpose.msra.mxu0 0
        %1214 = vmatprep.subr.bf16.mxu0 0
        %1215 = vmatpush1.bf16.xpose.msra.mxu0 0
        %1216 = vmatprep.subr.bf16.mxu0 0
        %1217 = vmatpush1.bf16.xpose.msra.mxu0 0
        %1218 = vmatprep.subr.bf16.mxu0 0
        %1219 = vmatpush1.bf16.xpose.msra.mxu0 0
        %1220 = vmatprep.subr.bf16.mxu0 0
        %1221 = vmatpush1.bf16.xpose.msra.mxu0 %v1204
        %1222 = vmatprep.subr.bf16.mxu0 0
        %1223 = vmatpush2.bf16.xpose.msra.mxu0 0
        %1224 = vmatprep.subr.bf16.mxu0 0
        %1225 = vmatpush2.bf16.xpose.msra.mxu0 0
        %1226 = vmatprep.subr.bf16.mxu0 0
        %1227 = vmatpush2.bf16.xpose.msra.mxu0 0
        %1228 = vmatprep.subr.bf16.mxu0 0
        %1229 = vmatpush2.bf16.xpose.msra.mxu0 0
        %1230 = vmatprep.subr.bf16.mxu0 0
        %1231 = vmatpush2.bf16.xpose.msra.mxu0 0
        %1232 = vmatprep.subr.bf16.mxu0 0
        %1233 = vmatpush2.bf16.xpose.msra.mxu0 0
        %1234 = vmatprep.subr.bf16.mxu0 0
        %1235 = vmatpush2.bf16.xpose.msra.mxu0 0
        %1236 = vmatprep.subr.bf16.mxu0 0
        %1237 = vmatpush2.bf16.xpose.msra.mxu0 0
        %1238 = vmatprep.mubr.bf16.mxu0 0
        %1239 = vmatmul.mubr.bf16.gmra.mxu0 %v1201
        %v1240 = vpop.f32.mrf.mxu0
        %v1241 = vadd.f32 %v1039, %v1240
        %v1242 = vpop.f32.mrf.mxu0
        %v1243 = vpop.f32.mrf.mxu0
        %v1244 = vpop.f32.mrf.mxu0
        %1245 = vdwg.mxu0
        %vm1246 = vcmask 130048
        %v1247 = vsel %vm1246, %v1088, -inf
        %1248 = vmax.xlane.f32.xlu0 %v1247
        %v1249 = vpop.xlane.xlu0 %1248
        %v1250 = vsel %vm1246, %v1139, -inf
        %1251 = vmax.xlane.f32.xlu0 %v1250
        %v1252 = vpop.xlane.xlu0 %1251
        %v1253 = vsel %vm1246, %v1190, -inf
        %1254 = vmax.xlane.f32.xlu0 %v1253
        %v1255 = vpop.xlane.xlu0 %1254
        %v1256 = vsel %vm1246, %v1241, -inf
        %1257 = vmax.xlane.f32.xlu0 %v1256
        %v1258 = vpop.xlane.xlu0 %1257
        %v1259 = vsub.f32 %v1088, %v1249
        %v1260 = vsub.f32 %v1139, %v1252
        %v1261 = vsub.f32 %v1190, %v1255
        %v1262 = vsub.f32 %v1241, %v1258
        %v1263 = vpack.c.bf16 %v1259, %v1259
        %v1264 = vpack.c.bf16 %v1260, %v1260
        %v1265 = vpack.c.bf16 %v1261, %v1261
        %v1266 = vpack.c.bf16 %v1262, %v1262
        %v1268 = vmul.bf16 %v1263, 1069105081
        %v1269 = vpow.bf16.pop %v1268
        %v1271 = vmul.bf16 %v1264, 1069105081
        %v1272 = vpow.bf16.pop %v1271
        %v1274 = vmul.bf16 %v1265, 1069105081
        %v1275 = vpow.bf16.pop %v1274
        %v1277 = vmul.bf16 %v1266, 1069105081
        %v1278 = vpow.bf16.pop %v1277
        %v1279 = vunpack.c.l.bf16 %v1269
        %v1280 = vunpack.c.l.bf16 %v1272
        %v1281 = vunpack.c.l.bf16 %v1275
        %v1282 = vunpack.c.l.bf16 %v1278
        %v1283 = vsel %vm1246, %v1279, 0.0
        %1284 = vadd.xlane.f32.xlu0 %v1283
        %v1285 = vpop.xlane.xlu0 %1284
        %v1286 = vsel %vm1246, %v1280, 0.0
        %1287 = vadd.xlane.f32.xlu0 %v1286
        %v1288 = vpop.xlane.xlu0 %1287
        %v1289 = vsel %vm1246, %v1281, 0.0
        %1290 = vadd.xlane.f32.xlu0 %v1289
        %v1291 = vpop.xlane.xlu0 %1290
        %v1292 = vsel %vm1246, %v1282, 0.0
        %1293 = vadd.xlane.f32.xlu0 %v1292
        %v1294 = vpop.xlane.xlu0 %1293
        %v1295 = vrcp.pop %v1285
        %v1296 = vrcp.pop %v1288
        %v1297 = vrcp.pop %v1291
        %v1298 = vrcp.pop %v1294
        %v1299 = vpack.c.bf16 %v1295, %v1295
        %v1300 = vpack.c.bf16 %v1296, %v1296
        %v1301 = vpack.c.bf16 %v1297, %v1297
        %v1302 = vpack.c.bf16 %v1298, %v1298
        %v1303 = vmul.bf16 %v1269, %v1299
        %v1304 = vmul.bf16 %v1272, %v1300
        %v1305 = vmul.bf16 %v1275, %v1301
        %v1306 = vmul.bf16 %v1278, %v1302
        %v1307 = vld [vmem:[#allocation3] sm:$0xf]
        %v1308 = vld [vmem:[#allocation3 + $0x4] sm:$0xf]
        %v1309 = vld [vmem:[#allocation3 + $0x8] sm:$0xf]
        %v1310 = vld [vmem:[#allocation3 + $0xc] sm:$0xf]
        %v1311 = vld [vmem:[#allocation3 + $0x10] sm:$0xf]
        %v1312 = vld [vmem:[#allocation3 + $0x14] sm:$0xf]
        %v1313 = vld [vmem:[#allocation3 + $0x18] sm:$0xf]
        %v1314 = vld [vmem:[#allocation3 + $0x1c] sm:$0xf]
        %v1317 = vunpack.c.l.b16 %v1307
        %v1318 = vunpack.c.l.b16 %v1308
        %v1319 = vpack.c.b16 %v1318, %v1317
        %v1322 = vsel %vm1246, %v1303, 0
        %1324 = vmatprep.subr.bf16.mxu0 0
        %1325 = vmatpush1.bf16.msra.mxu0 0
        %1326 = vmatprep.subr.bf16.mxu0 0
        %1327 = vmatpush1.bf16.msra.mxu0 0
        %1328 = vmatprep.subr.bf16.mxu0 0
        %1329 = vmatpush1.bf16.msra.mxu0 0
        %1330 = vmatprep.subr.bf16.mxu0 0
        %1331 = vmatpush1.bf16.msra.mxu0 0
        %1332 = vmatprep.subr.bf16.mxu0 0
        %1333 = vmatpush1.bf16.msra.mxu0 0
        %1334 = vmatprep.subr.bf16.mxu0 0
        %1335 = vmatpush1.bf16.msra.mxu0 0
        %1336 = vmatprep.subr.bf16.mxu0 0
        %1337 = vmatpush1.bf16.msra.mxu0 0
        %1338 = vmatprep.subr.bf16.mxu0 0
        %1339 = vmatpush1.bf16.msra.mxu0 %v1319
        %1340 = vmatprep.subr.bf16.mxu0 0
        %1341 = vmatpush2.bf16.msra.mxu0 0
        %1342 = vmatprep.subr.bf16.mxu0 0
        %1343 = vmatpush2.bf16.msra.mxu0 0
        %1344 = vmatprep.subr.bf16.mxu0 0
        %1345 = vmatpush2.bf16.msra.mxu0 0
        %1346 = vmatprep.subr.bf16.mxu0 0
        %1347 = vmatpush2.bf16.msra.mxu0 0
        %1348 = vmatprep.subr.bf16.mxu0 0
        %1349 = vmatpush2.bf16.msra.mxu0 0
        %1350 = vmatprep.subr.bf16.mxu0 0
        %1351 = vmatpush2.bf16.msra.mxu0 0
        %1352 = vmatprep.subr.bf16.mxu0 0
        %1353 = vmatpush2.bf16.msra.mxu0 0
        %1354 = vmatprep.subr.bf16.mxu0 0
        %1355 = vmatpush2.bf16.msra.mxu0 0
        %1356 = vmatprep.mubr.bf16.mxu0 0
        %1357 = vmatmul.mubr.bf16.gmra.mxu0 %v1322
        %v1358 = vpop.f32.mrf.mxu0
        %v1359 = vadd.f32 0.0, %v1358
        %v1360 = vpop.f32.mrf.mxu0
        %v1361 = vpop.f32.mrf.mxu0
        %v1362 = vpop.f32.mrf.mxu0
        %1363 = vdwg.mxu0
        %v1366 = vunpack.c.l.b16 %v1309
        %v1367 = vunpack.c.l.b16 %v1310
        %v1368 = vpack.c.b16 %v1367, %v1366
        %v1371 = vsel %vm1246, %v1304, 0
        %1373 = vmatprep.subr.bf16.mxu0 0
        %1374 = vmatpush1.bf16.msra.mxu0 0
        %1375 = vmatprep.subr.bf16.mxu0 0
        %1376 = vmatpush1.bf16.msra.mxu0 0
        %1377 = vmatprep.subr.bf16.mxu0 0
        %1378 = vmatpush1.bf16.msra.mxu0 0
        %1379 = vmatprep.subr.bf16.mxu0 0
        %1380 = vmatpush1.bf16.msra.mxu0 0
        %1381 = vmatprep.subr.bf16.mxu0 0
        %1382 = vmatpush1.bf16.msra.mxu0 0
        %1383 = vmatprep.subr.bf16.mxu0 0
        %1384 = vmatpush1.bf16.msra.mxu0 0
        %1385 = vmatprep.subr.bf16.mxu0 0
        %1386 = vmatpush1.bf16.msra.mxu0 0
        %1387 = vmatprep.subr.bf16.mxu0 0
        %1388 = vmatpush1.bf16.msra.mxu0 %v1368
        %1389 = vmatprep.subr.bf16.mxu0 0
        %1390 = vmatpush2.bf16.msra.mxu0 0
        %1391 = vmatprep.subr.bf16.mxu0 0
        %1392 = vmatpush2.bf16.msra.mxu0 0
        %1393 = vmatprep.subr.bf16.mxu0 0
        %1394 = vmatpush2.bf16.msra.mxu0 0
        %1395 = vmatprep.subr.bf16.mxu0 0
        %1396 = vmatpush2.bf16.msra.mxu0 0
        %1397 = vmatprep.subr.bf16.mxu0 0
        %1398 = vmatpush2.bf16.msra.mxu0 0
        %1399 = vmatprep.subr.bf16.mxu0 0
        %1400 = vmatpush2.bf16.msra.mxu0 0
        %1401 = vmatprep.subr.bf16.mxu0 0
        %1402 = vmatpush2.bf16.msra.mxu0 0
        %1403 = vmatprep.subr.bf16.mxu0 0
        %1404 = vmatpush2.bf16.msra.mxu0 0
        %1405 = vmatprep.mubr.bf16.mxu0 0
        %1406 = vmatmul.mubr.bf16.gmra.mxu0 %v1371
        %v1407 = vpop.f32.mrf.mxu0
        %v1408 = vadd.f32 0.0, %v1407
        %v1409 = vpop.f32.mrf.mxu0
        %v1410 = vpop.f32.mrf.mxu0
        %v1411 = vpop.f32.mrf.mxu0
        %1412 = vdwg.mxu0
        %v1415 = vunpack.c.l.b16 %v1311
        %v1416 = vunpack.c.l.b16 %v1312
        %v1417 = vpack.c.b16 %v1416, %v1415
        %v1420 = vsel %vm1246, %v1305, 0
        %1422 = vmatprep.subr.bf16.mxu0 0
        %1423 = vmatpush1.bf16.msra.mxu0 0
        %1424 = vmatprep.subr.bf16.mxu0 0
        %1425 = vmatpush1.bf16.msra.mxu0 0
        %1426 = vmatprep.subr.bf16.mxu0 0
        %1427 = vmatpush1.bf16.msra.mxu0 0
        %1428 = vmatprep.subr.bf16.mxu0 0
        %1429 = vmatpush1.bf16.msra.mxu0 0
        %1430 = vmatprep.subr.bf16.mxu0 0
        %1431 = vmatpush1.bf16.msra.mxu0 0
        %1432 = vmatprep.subr.bf16.mxu0 0
        %1433 = vmatpush1.bf16.msra.mxu0 0
        %1434 = vmatprep.subr.bf16.mxu0 0
        %1435 = vmatpush1.bf16.msra.mxu0 0
        %1436 = vmatprep.subr.bf16.mxu0 0
        %1437 = vmatpush1.bf16.msra.mxu0 %v1417
        %1438 = vmatprep.subr.bf16.mxu0 0
        %1439 = vmatpush2.bf16.msra.mxu0 0
        %1440 = vmatprep.subr.bf16.mxu0 0
        %1441 = vmatpush2.bf16.msra.mxu0 0
        %1442 = vmatprep.subr.bf16.mxu0 0
        %1443 = vmatpush2.bf16.msra.mxu0 0
        %1444 = vmatprep.subr.bf16.mxu0 0
        %1445 = vmatpush2.bf16.msra.mxu0 0
        %1446 = vmatprep.subr.bf16.mxu0 0
        %1447 = vmatpush2.bf16.msra.mxu0 0
        %1448 = vmatprep.subr.bf16.mxu0 0
        %1449 = vmatpush2.bf16.msra.mxu0 0
        %1450 = vmatprep.subr.bf16.mxu0 0
        %1451 = vmatpush2.bf16.msra.mxu0 0
        %1452 = vmatprep.subr.bf16.mxu0 0
        %1453 = vmatpush2.bf16.msra.mxu0 0
        %1454 = vmatprep.mubr.bf16.mxu0 0
        %1455 = vmatmul.mubr.bf16.gmra.mxu0 %v1420
        %v1456 = vpop.f32.mrf.mxu0
        %v1457 = vadd.f32 0.0, %v1456
        %v1458 = vpop.f32.mrf.mxu0
        %v1459 = vpop.f32.mrf.mxu0
        %v1460 = vpop.f32.mrf.mxu0
        %1461 = vdwg.mxu0
        %v1464 = vunpack.c.l.b16 %v1313
        %v1465 = vunpack.c.l.b16 %v1314
        %v1466 = vpack.c.b16 %v1465, %v1464
        %v1469 = vsel %vm1246, %v1306, 0
        %1471 = vmatprep.subr.bf16.mxu0 0
        %1472 = vmatpush1.bf16.msra.mxu0 0
        %1473 = vmatprep.subr.bf16.mxu0 0
        %1474 = vmatpush1.bf16.msra.mxu0 0
        %1475 = vmatprep.subr.bf16.mxu0 0
        %1476 = vmatpush1.bf16.msra.mxu0 0
        %1477 = vmatprep.subr.bf16.mxu0 0
        %1478 = vmatpush1.bf16.msra.mxu0 0
        %1479 = vmatprep.subr.bf16.mxu0 0
        %1480 = vmatpush1.bf16.msra.mxu0 0
        %1481 = vmatprep.subr.bf16.mxu0 0
        %1482 = vmatpush1.bf16.msra.mxu0 0
        %1483 = vmatprep.subr.bf16.mxu0 0
        %1484 = vmatpush1.bf16.msra.mxu0 0
        %1485 = vmatprep.subr.bf16.mxu0 0
        %1486 = vmatpush1.bf16.msra.mxu0 %v1466
        %1487 = vmatprep.subr.bf16.mxu0 0
        %1488 = vmatpush2.bf16.msra.mxu0 0
        %1489 = vmatprep.subr.bf16.mxu0 0
        %1490 = vmatpush2.bf16.msra.mxu0 0
        %1491 = vmatprep.subr.bf16.mxu0 0
        %1492 = vmatpush2.bf16.msra.mxu0 0
        %1493 = vmatprep.subr.bf16.mxu0 0
        %1494 = vmatpush2.bf16.msra.mxu0 0
        %1495 = vmatprep.subr.bf16.mxu0 0
        %1496 = vmatpush2.bf16.msra.mxu0 0
        %1497 = vmatprep.subr.bf16.mxu0 0
        %1498 = vmatpush2.bf16.msra.mxu0 0
        %1499 = vmatprep.subr.bf16.mxu0 0
        %1500 = vmatpush2.bf16.msra.mxu0 0
        %1501 = vmatprep.subr.bf16.mxu0 0
        %1502 = vmatpush2.bf16.msra.mxu0 0
        %1503 = vmatprep.mubr.bf16.mxu0 0
        %1504 = vmatmul.mubr.bf16.gmra.mxu0 %v1469
        %v1505 = vpop.f32.mrf.mxu0
        %v1506 = vadd.f32 0.0, %v1505
        %v1507 = vpop.f32.mrf.mxu0
        %v1508 = vpop.f32.mrf.mxu0
        %v1509 = vpop.f32.mrf.mxu0
        %1510 = vdwg.mxu0
        %v1511 = vpack.c.bf16 %v1359, %v1359
        %v1512 = vpack.c.bf16 %v1408, %v1408
        %v1513 = vpack.c.bf16 %v1457, %v1457
        %v1514 = vpack.c.bf16 %v1506, %v1506
        %1516 = vrot.lane.b32.xlu0 %v1512, 8
        %v1517 = vpop.permute.xlu0 %1516
        %1519 = vrot.lane.b32.xlu0 %v1513, 16
        %v1520 = vpop.permute.xlu0 %1519
        %1522 = vrot.lane.b32.xlu0 %v1514, 24
        %v1523 = vpop.permute.xlu0 %1522
        %v1526 = vsel %vm1046, %v1511, %v1517
        %v1528 = vsel %vm1246, %v1526, %v1520
        %vm1529 = vcmask 195584
        %v1531 = vsel %vm1529, %v1528, %v1523
        %v1532 = vld [vmem:[%s9] sm:$0xf]
        %v1533 = vld [vmem:[%s9 + $0x4] sm:$0xf]
        %v1534 = vld [vmem:[%s9 + $0x8] sm:$0xf]
        %v1535 = vld [vmem:[%s9 + $0xc] sm:$0xf]
        %v1536 = vld [vmem:[%s10] sm:$0x1]
        %v1538 = vlaneseq
        %v1539 = vshrl.u32 %v1538, 7
        %v1540 = vsub.s32 0, %v1539
        %v1541 = vrot.slane %v1536, %v1540
        %v1547 = vunpack.c.l.b16 %v1532
        %v1548 = vunpack.c.l.b16 %v1533
        %v1549 = vunpack.c.l.b16 %v1534
        %v1550 = vunpack.c.l.b16 %v1535
        %v1551 = vpack.c.b16 %v1548, %v1547
        %v1552 = vpack.c.b16 %v1550, %v1549
        %v1555 = vsel %vm920, %v1531, 0
        %1557 = vmatprep.subr.bf16.mxu0 0
        %1558 = vmatpush1.bf16.msra.mxu0 0
        %1559 = vmatprep.subr.bf16.mxu0 0
        %1560 = vmatpush1.bf16.msra.mxu0 0
        %1561 = vmatprep.subr.bf16.mxu0 0
        %1562 = vmatpush1.bf16.msra.mxu0 0
        %1563 = vmatprep.subr.bf16.mxu0 0
        %1564 = vmatpush1.bf16.msra.mxu0 0
        %1565 = vmatprep.subr.bf16.mxu0 0
        %1566 = vmatpush1.bf16.msra.mxu0 0
        %1567 = vmatprep.subr.bf16.mxu0 0
        %1568 = vmatpush1.bf16.msra.mxu0 0
        %1569 = vmatprep.subr.bf16.mxu0 0
        %1570 = vmatpush1.bf16.msra.mxu0 %v1552
        %1571 = vmatprep.subr.bf16.mxu0 0
        %1572 = vmatpush1.bf16.msra.mxu0 %v1551
        %1573 = vmatprep.subr.bf16.mxu0 0
        %1574 = vmatpush2.bf16.msra.mxu0 0
        %1575 = vmatprep.subr.bf16.mxu0 0
        %1576 = vmatpush2.bf16.msra.mxu0 0
        %1577 = vmatprep.subr.bf16.mxu0 0
        %1578 = vmatpush2.bf16.msra.mxu0 0
        %1579 = vmatprep.subr.bf16.mxu0 0
        %1580 = vmatpush2.bf16.msra.mxu0 0
        %1581 = vmatprep.subr.bf16.mxu0 0
        %1582 = vmatpush2.bf16.msra.mxu0 0
        %1583 = vmatprep.subr.bf16.mxu0 0
        %1584 = vmatpush2.bf16.msra.mxu0 0
        %1585 = vmatprep.subr.bf16.mxu0 0
        %1586 = vmatpush2.bf16.msra.mxu0 0
        %1587 = vmatprep.subr.bf16.mxu0 0
        %1588 = vmatpush2.bf16.msra.mxu0 0
        %1589 = vmatprep.mubr.bf16.mxu0 0
        %1590 = vmatmul.mubr.bf16.gmra.mxu0 %v1555
        %v1591 = vpop.f32.mrf.mxu0
        %v1592 = vadd.f32 %v1541, %v1591
        %v1593 = vpop.f32.mrf.mxu0
        %v1594 = vpop.f32.mrf.mxu0
        %v1595 = vpop.f32.mrf.mxu0
        %1596 = vdwg.mxu0
        %v1597 = vadd.f32 %v1592, %v917
        %v1598 = vld [vmem:[%s11] sm:$0x1]
        %v1599 = vld [vmem:[%s12] sm:$0x1]
        %v1600 = vsel %vm920, %v1597, 0.0
        %1601 = vadd.xlane.f32.xlu0 %v1600
        %v1602 = vpop.xlane.xlu0 %1601
        %v1603 = vmul.f32 %v1602, %v924
        %v1604 = vmul.f32 %v1597, %v1597
        %v1605 = vsel %vm920, %v1604, 0.0
        %1606 = vadd.xlane.f32.xlu0 %v1605
        %v1607 = vpop.xlane.xlu0 %1606
        %v1608 = vmul.f32 %v1607, %v924
        %v1609 = vmul.f32 %v1603, %v1603
        %v1610 = vsub.f32 %v1608, %v1609
        %v1611 = vsub.f32 %v1597, %v1603
        %v1612 = vadd.f32 %v1610, 1e-06
        %v1613 = vrsqrt.pop %v1612
        %v1614 = vmul.f32 %v1611, %v1613
        %v1616 = vlaneseq
        %v1617 = vshrl.u32 %v1616, 7
        %v1618 = vsub.s32 0, %v1617
        %v1619 = vrot.slane %v1598, %v1618
        %v1621 = vmul.f32 %v1614, %v1619
        %v1623 = vlaneseq
        %v1624 = vshrl.u32 %v1623, 7
        %v1625 = vsub.s32 0, %v1624
        %v1626 = vrot.slane %v1599, %v1625
        %v1628 = vadd.f32 %v1621, %v1626
        %v1629 = vpack.c.bf16 %v1628, %v1628
        %v1630 = vld [vmem:[#allocation16] sm:$0xf]
        %v1631 = vld [vmem:[#allocation16 + $0x4] sm:$0xf]
        %v1632 = vld [vmem:[#allocation16 + $0x8] sm:$0xf]
        %v1633 = vld [vmem:[#allocation16 + $0xc] sm:$0xf]
        %v1634 = vld [vmem:[%s14] sm:$0x1]
        %v1636 = vlaneseq
        %v1637 = vshrl.u32 %v1636, 7
        %v1638 = vsub.s32 0, %v1637
        %v1639 = vrot.slane %v1634, %v1638
        %v1645 = vunpack.c.l.b16 %v1630
        %v1646 = vunpack.c.l.b16 %v1631
        %v1647 = vunpack.c.l.b16 %v1632
        %v1648 = vunpack.c.l.b16 %v1633
        %v1649 = vpack.c.b16 %v1646, %v1645
        %v1650 = vpack.c.b16 %v1648, %v1647
        %v1654 = vsel %vm920, %v1629, 0
        %1656 = vmatprep.subr.bf16.mxu0 0
        %1657 = vmatpush1.bf16.msra.mxu0 0
        %1658 = vmatprep.subr.bf16.mxu0 0
        %1659 = vmatpush1.bf16.msra.mxu0 0
        %1660 = vmatprep.subr.bf16.mxu0 0
        %1661 = vmatpush1.bf16.msra.mxu0 0
        %1662 = vmatprep.subr.bf16.mxu0 0
        %1663 = vmatpush1.bf16.msra.mxu0 0
        %1664 = vmatprep.subr.bf16.mxu0 0
        %1665 = vmatpush1.bf16.msra.mxu0 0
        %1666 = vmatprep.subr.bf16.mxu0 0
        %1667 = vmatpush1.bf16.msra.mxu0 0
        %1668 = vmatprep.subr.bf16.mxu0 0
        %1669 = vmatpush1.bf16.msra.mxu0 %v1650
        %1670 = vmatprep.subr.bf16.mxu0 0
        %1671 = vmatpush1.bf16.msra.mxu0 %v1649
        %1672 = vmatprep.subr.bf16.mxu0 0
        %1673 = vmatpush2.bf16.msra.mxu0 0
        %1674 = vmatprep.subr.bf16.mxu0 0
        %1675 = vmatpush2.bf16.msra.mxu0 0
        %1676 = vmatprep.subr.bf16.mxu0 0
        %1677 = vmatpush2.bf16.msra.mxu0 0
        %1678 = vmatprep.subr.bf16.mxu0 0
        %1679 = vmatpush2.bf16.msra.mxu0 0
        %1680 = vmatprep.subr.bf16.mxu0 0
        %1681 = vmatpush2.bf16.msra.mxu0 0
        %1682 = vmatprep.subr.bf16.mxu0 0
        %1683 = vmatpush2.bf16.msra.mxu0 0
        %1684 = vmatprep.subr.bf16.mxu0 0
        %1685 = vmatpush2.bf16.msra.mxu0 0
        %1686 = vmatprep.subr.bf16.mxu0 0
        %1687 = vmatpush2.bf16.msra.mxu0 0
        %1688 = vmatprep.mubr.bf16.mxu0 0
        %1689 = vmatmul.mubr.bf16.gmra.mxu0 %v1654
        %v1690 = vpop.f32.mrf.mxu0
        %v1691 = vadd.f32 %v1639, %v1690
        %v1692 = vpop.f32.mrf.mxu0
        %v1693 = vpop.f32.mrf.mxu0
        %v1694 = vpop.f32.mrf.mxu0
        %1695 = vdwg.mxu0
        %v1696 = vpack.c.bf16 %v1691, %v1691
        %v1697 = vmul.bf16 %v1696, 1056980736
        %v1698 = vmul.bf16 %v1696, 1027030327
        %v1699 = vmul.bf16 %v1698, %v1696
        %v1700 = vmul.bf16 %v1699, %v1696
        %v1701 = vadd.bf16 %v1696, %v1700
        %v1702 = vmul.bf16 %v1701, 1061961548
        %v1703 = vtanh.bf16.pop %v1702
        %v1704 = vadd.bf16 %v1703, 1065369472
        %v1705 = vmul.bf16 %v1697, %v1704
        %v1706 = vld [vmem:[%s15] sm:$0xf]
        %v1707 = vld [vmem:[%s15 + $0x4] sm:$0xf]
        %v1708 = vld [vmem:[%s15 + $0x8] sm:$0xf]
        %v1709 = vld [vmem:[%s15 + $0xc] sm:$0xf]
        %v1710 = vld [vmem:[%s15 + $0x10] sm:$0xf]
        %v1711 = vld [vmem:[%s15 + $0x14] sm:$0xf]
        %v1712 = vld [vmem:[%s15 + $0x18] sm:$0xf]
        %v1713 = vld [vmem:[%s15 + $0x1c] sm:$0xf]
        %v1714 = vld [vmem:[%s16] sm:$0x1]
        %v1716 = vlaneseq
        %v1717 = vshrl.u32 %v1716, 7
        %v1718 = vsub.s32 0, %v1717
        %v1719 = vrot.slane %v1714, %v1718
        %v1729 = vunpack.c.l.b16 %v1706
        %v1730 = vunpack.c.l.b16 %v1707
        %v1731 = vunpack.c.l.b16 %v1708
        %v1732 = vunpack.c.l.b16 %v1709
        %v1733 = vunpack.c.l.b16 %v1710
        %v1734 = vunpack.c.l.b16 %v1711
        %v1735 = vunpack.c.l.b16 %v1712
        %v1736 = vunpack.c.l.b16 %v1713
        %v1737 = vpack.c.b16 %v1730, %v1729
        %v1738 = vpack.c.b16 %v1732, %v1731
        %v1739 = vpack.c.b16 %v1734, %v1733
        %v1740 = vpack.c.b16 %v1736, %v1735
        %vm1745 = vcmask 523264
        %v1747 = vsel %vm1745, %v1705, 0
        %1749 = vmatprep.subr.bf16.mxu0 0
        %1750 = vmatpush1.bf16.msra.mxu0 0
        %1751 = vmatprep.subr.bf16.mxu0 0
        %1752 = vmatpush1.bf16.msra.mxu0 0
        %1753 = vmatprep.subr.bf16.mxu0 0
        %1754 = vmatpush1.bf16.msra.mxu0 0
        %1755 = vmatprep.subr.bf16.mxu0 0
        %1756 = vmatpush1.bf16.msra.mxu0 0
        %1757 = vmatprep.subr.bf16.mxu0 0
        %1758 = vmatpush1.bf16.msra.mxu0 %v1740
        %1759 = vmatprep.subr.bf16.mxu0 0
        %1760 = vmatpush1.bf16.msra.mxu0 %v1739
        %1761 = vmatprep.subr.bf16.mxu0 0
        %1762 = vmatpush1.bf16.msra.mxu0 %v1738
        %1763 = vmatprep.subr.bf16.mxu0 0
        %1764 = vmatpush1.bf16.msra.mxu0 %v1737
        %1765 = vmatprep.subr.bf16.mxu0 0
        %1766 = vmatpush2.bf16.msra.mxu0 0
        %1767 = vmatprep.subr.bf16.mxu0 0
        %1768 = vmatpush2.bf16.msra.mxu0 0
        %1769 = vmatprep.subr.bf16.mxu0 0
        %1770 = vmatpush2.bf16.msra.mxu0 0
        %1771 = vmatprep.subr.bf16.mxu0 0
        %1772 = vmatpush2.bf16.msra.mxu0 0
        %1773 = vmatprep.subr.bf16.mxu0 0
        %1774 = vmatpush2.bf16.msra.mxu0 0
        %1775 = vmatprep.subr.bf16.mxu0 0
        %1776 = vmatpush2.bf16.msra.mxu0 0
        %1777 = vmatprep.subr.bf16.mxu0 0
        %1778 = vmatpush2.bf16.msra.mxu0 0
        %1779 = vmatprep.subr.bf16.mxu0 0
        %1780 = vmatpush2.bf16.msra.mxu0 0
        %1781 = vmatprep.mubr.bf16.mxu0 0
        %1782 = vmatmul.mubr.bf16.gmra.mxu0 %v1747
        %v1783 = vpop.f32.mrf.mxu0
        %v1784 = vadd.f32 %v1719, %v1783
        %v1785 = vpop.f32.mrf.mxu0
        %v1786 = vpop.f32.mrf.mxu0
        %v1787 = vpop.f32.mrf.mxu0
        %1788 = vdwg.mxu0
        %v1789 = vadd.f32 %v1784, %v1597
        %1790 = vst.msk [vmem:[%s709] sm:$0xff] %vm920, %v1789
        %s1791 = sand.u32 %s436, 1
        %s1792 = scalar_lea.sflag [#allocation6], %s1791
        %s1793 = sand.u32 %s436, 1
        %s1794 = smul.addr %s1793, 8
        %s1795 = scalar_lea.vmem [#allocation18], %s1794
        // Predicated region
        $region125: #{tpu_custom_call.1} parent=87 // pred_check
          %p1796 = pneg %p446
        $region126: #{tpu_custom_call.1} parent=87 // pred_check_branch
          %1798 = sbr.rel (%p1796) target = $region128
        $region127: #{tpu_custom_call.1} parent=87 // pred_region
          %s1800 = ssub.s32 128, 128
          %1801 = vsyncadd %s1792, %s1800
          %s1802 = smul.addr %s44, 2
          %s1803 = sadd.s32 %s45, %s1802
          %s1804 = smul.addr %s1803, 128
          %s1805 = scalar_lea.hbm %s17, %s1804
          %s1807 = sshll.u32 %s1795, 4
          %s1808 = int_to_ptr.vmem [resolvable:$true] %s1807
          %1810 = dma.vmem_to_hbm [thread:$0]  %s1808, 128, %s1805, %s1792
        $region128: #{tpu_custom_call.1} parent=87 // pred_fallthru
          _
      $region88: #{tpu_custom_call.1} parent=5 // pred_fallthru
        _
      %p1811 = scmp.le.s32.totalorder 2, %s35
      // Predicated region
      $region129: #{tpu_custom_call.1} parent=5 // pred_check
        %p1812 = pneg %p1811
      $region130: #{tpu_custom_call.1} parent=5 // pred_check_branch
        %1814 = sbr.rel (%p1812) target = $region132
      $region131: #{tpu_custom_call.1} parent=5 // pred_region
        %s1815 = ssub.s32 %s35, 2
        // Predicated region
        $region133: #{tpu_custom_call.1} parent=131 // pred_check
          %p1816 = pneg %p452
        $region134: #{tpu_custom_call.1} parent=131 // pred_check_branch
          %1818 = sbr.rel (%p1816) target = $region136
        $region135: #{tpu_custom_call.1} parent=131 // pred_region
          %s1819 = sand.u32 %s437, 1
          %s1820 = scalar_lea.sflag [#allocation6], %s1819
          %s1821 = sand.u32 %s437, 1
          %s1822 = smul.addr %s1821, 8
          %s1823 = scalar_lea.vmem [#allocation18], %s1822
          %1824 = dma.done %s1820, 128
        $region136: #{tpu_custom_call.1} parent=131 // pred_fallthru
          _
      $region132: #{tpu_custom_call.1} parent=5 // pred_fallthru
        _
    $region6: #{tpu_custom_call.1} parent=1 // loop_footer
      %s39 = sadd.s32 1, %s35
    $region7: #{tpu_custom_call.1} parent=1 // loop_footer_branch
      %34 = sbr.rel target = $region3
    $region8: #{tpu_custom_call.1} parent=1 // loop_exit
      _
    %1825 = vsyncpa [#allocation5], 1
    %s1826 = scalar_lea.sflag [#allocation5], 1
    %1827 = vsyncpa %s1826, 1
    %1828 = vsyncpa [#allocation8], 1
    %s1829 = scalar_lea.sflag [#allocation8], 1
    %1830 = vsyncpa %s1829, 1
    %1831 = vsyncpa [#allocation11], 1
    %1832 = vsyncpa [#allocation14], 1
    %1833 = vsyncpa [#allocation17], 1
    %1834 = vsyncpa [#allocation6], 1
    %s1835 = scalar_lea.sflag [#allocation6], 1
    %1836 = vsyncpa %s1835, 1

// kernel: tpu_custom_call.1
$region0: #{tpu_custom_call.1}
  #allocation0 [shape = 'u32[]', space=smem, size = 0x4, offset = 0x4, fixed_abs, tag = 'smem constant byte address 0x4 - core index']
  #allocation1 [shape = 'u32[144,128]{1,0:T(1,128)}', space=vmem, size = 0x12000, scoped, tag = 'internal scratch']
  #allocation2 [shape = 'bf16[4,16,8]{2,1,0:T(8,128)(2,1)}', space=vmem, size = 0x4000, scoped, tag = 'scratch operand']
  #allocation3 [shape = 'bf16[4,16,8]{2,1,0:T(8,128)(2,1)}', space=vmem, size = 0x4000, scoped, tag = 'scratch operand']
  %s0 = inlined_call_operand.vmem [shape: f32[2,16,32], index: 0, kind: input, shape index: {}]
  %s1 = inlined_call_operand.hbm [shape: f32[2,16,32], index: 1, kind: input, shape index: {}]
  %s2 = inlined_call_operand.hbm [shape: f32[2,1,16], index: 2, kind: input, shape index: {}]
  %s3 = inlined_call_operand.hbm [shape: f32[1,32], index: 3, kind: input, shape index: {}]
  %s4 = inlined_call_operand.hbm [shape: f32[1,32], index: 4, kind: input, shape index: {}]
  %s5 = inlined_call_operand.vmem [shape: bf16[32,32], index: 5, kind: input, shape index: {}]
  %s6 = inlined_call_operand.hbm [shape: f32[1,32], index: 6, kind: input, shape index: {}]
  %s7 = inlined_call_operand.hbm [shape: bf16[32,64], index: 7, kind: input, shape index: {}]
  %s8 = inlined_call_operand.hbm [shape: f32[1,64], index: 8, kind: input, shape index: {}]
  %s9 = inlined_call_operand.vmem [shape: bf16[32,32], index: 9, kind: input, shape index: {}]
  %s10 = inlined_call_operand.vmem [shape: f32[1,32], index: 10, kind: input, shape index: {}]
  %s11 = inlined_call_operand.vmem [shape: f32[1,32], index: 11, kind: input, shape index: {}]
  %s12 = inlined_call_operand.vmem [shape: f32[1,32], index: 12, kind: input, shape index: {}]
  %s13 = inlined_call_operand.hbm [shape: bf16[32,64], index: 13, kind: input, shape index: {}]
  %s14 = inlined_call_operand.vmem [shape: f32[1,64], index: 14, kind: input, shape index: {}]
  %s15 = inlined_call_operand.vmem [shape: bf16[64,32], index: 15, kind: input, shape index: {}]
  %s16 = inlined_call_operand.vmem [shape: f32[1,32], index: 16, kind: input, shape index: {}]
  %s17 = inlined_call_operand.hbm [shape: f32[2,16,32], index: 17, kind: output, shape index: {}]
  %s18 = sld [smem:[#allocation0]]
  $region137: #{tpu_custom_call.1} parent=0
    _
  %s20 = ssub.s32 1, %s18
  %s21 = scalar_select 0, %s20, %s18
  $region1: #{tpu_custom_call.1} parent=0
    #allocation4 [shape = 'u8[8192]{0}', space=vmem, size = 0x2000, scoped, tag = 'input window, operand 1']
    #allocation5 [shape = 's32[2]{0}', space=sflag, size = 0x8, scoped, tag = 'scoped memory for tpu_custom_call.1']
    #allocation6 [shape = 's32[2]{0}', space=sflag, size = 0x8, scoped, tag = 'scoped memory for tpu_custom_call.1']
    #allocation7 [shape = 'u8[1024]{0}', space=vmem, size = 0x400, scoped, tag = 'input window, operand 2']
    #allocation8 [shape = 's32[2]{0}', space=sflag, size = 0x8, scoped, tag = 'scoped memory for tpu_custom_call.1']
    #allocation9 [shape = 'u8[512]{0}', space=vmem, size = 0x400, scoped, tag = 'input window, operand 3, single buffered']
    #allocation10 [shape = 'u8[512]{0}', space=vmem, size = 0x400, scoped, tag = 'input window, operand 4, single buffered']
    #allocation11 [shape = 's32[1]{0}', space=sflag, size = 0x4, scoped, tag = 'scoped memory for tpu_custom_call.1']
    #allocation12 [shape = 'u8[512]{0}', space=vmem, size = 0x400, scoped, tag = 'input window, operand 6, single buffered']
    #allocation13 [shape = 'u8[8192]{0}', space=vmem, size = 0x2000, scoped, tag = 'input window, operand 7, single buffered']
    #allocation14 [shape = 's32[1]{0}', space=sflag, size = 0x4, scoped, tag = 'scoped memory for tpu_custom_call.1']
    #allocation15 [shape = 'u8[512]{0}', space=vmem, size = 0x400, scoped, tag = 'input window, operand 8, single buffered']
    #allocation16 [shape = 'u8[8192]{0}', space=vmem, size = 0x2000, scoped, tag = 'input window, operand 13, single buffered']
    #allocation17 [shape = 's32[1]{0}', space=sflag, size = 0x4, scoped, tag = 'scoped memory for tpu_custom_call.1']
    #allocation18 [shape = 'u8[8192]{0}', space=vmem, size = 0x2000, scoped, tag = 'output window, operand 0']
    %22 = vsyncpa [#allocation5], 0
    %s23 = scalar_lea.sflag [#allocation5], 1
    %24 = vsyncpa %s23, 0
    %25 = vsyncpa [#allocation8], 0
    %s26 = scalar_lea.sflag [#allocation8], 1
    %27 = vsyncpa %s26, 0
    %28 = vsyncpa [#allocation11], 0
    %29 = vsyncpa [#allocation14], 0
    %30 = vsyncpa [#allocation17], 0
    %31 = vsyncpa [#allocation6], 0
    %s32 = scalar_lea.sflag [#allocation6], 1
    %33 = vsyncpa %s32, 0
    loop: start=0, step=1, limit=6
    $region2: #{tpu_custom_call.1} parent=1 // loop_pre_header
      _
    $region3: #{tpu_custom_call.1} parent=1 // loop_header
      %s35 = sphi 0, %s39
      %p36 = scmp.ge.s32.totalorder %s35, 6
      %s42 = sphi 0, %s54
      %s43 = sphi 0, %s50
      %s44 = sphi 0, %s42
      %s45 = sphi 0, %s43
      %s46 = sphi 0, %s44
      %s47 = sphi 0, %s45
      %s57 = sphi 0, %s59
      %s60 = sphi 0, %s57
      %s61 = sphi 0, %s60
      %s77 = sphi 0, %s61
      %s85 = sphi 0, %s87
      %s88 = sphi 0, %s85
      %s89 = sphi 0, %s88
      %s105 = sphi 0, %s89
      %s111 = sphi 0, %s113
      %s114 = sphi 0, %s111
      %s115 = sphi 0, %s114
      %s131 = sphi 0, %s115
      %s135 = sphi 0, %s135
      %s137 = sphi 0, %s135
      %s138 = sphi 0, %s137
      %s152 = sphi 0, %s138
      %s156 = sphi 0, %s156
      %s158 = sphi 0, %s156
      %s159 = sphi 0, %s158
      %s173 = sphi 0, %s159
      %s177 = sphi 0, %s177
      %s179 = sphi 0, %s177
      %s180 = sphi 0, %s179
      %s194 = sphi 0, %s180
      %s198 = sphi 0, %s198
      %s200 = sphi 0, %s198
      %s201 = sphi 0, %s200
      %s215 = sphi 0, %s201
      %s219 = sphi 0, %s219
      %s221 = sphi 0, %s219
      %s222 = sphi 0, %s221
      %s236 = sphi 0, %s222
      %s240 = sphi 0, %s240
      %s242 = sphi 0, %s240
      %s243 = sphi 0, %s242
      %s257 = sphi 0, %s243
      %s261 = sphi 0, %s261
      %s263 = sphi 0, %s261
      %s264 = sphi 0, %s263
      %s278 = sphi 0, %s264
      %s282 = sphi 0, %s282
      %s284 = sphi 0, %s282
      %s285 = sphi 0, %s284
      %s299 = sphi 0, %s285
      %s303 = sphi 0, %s303
      %s305 = sphi 0, %s303
      %s306 = sphi 0, %s305
      %s320 = sphi 0, %s306
      %s324 = sphi 0, %s324
      %s326 = sphi 0, %s324
      %s327 = sphi 0, %s326
      %s341 = sphi 0, %s327
      %s345 = sphi 0, %s345
      %s347 = sphi 0, %s345
      %s348 = sphi 0, %s347
      %s362 = sphi 0, %s348
      %s366 = sphi 0, %s366
      %s368 = sphi 0, %s366
      %s369 = sphi 0, %s368
      %s383 = sphi 0, %s369
      %s387 = sphi 0, %s387
      %s389 = sphi 0, %s387
      %s390 = sphi 0, %s389
      %s404 = sphi 0, %s390
      %s408 = sphi 0, %s408
      %s410 = sphi 0, %s408
      %s411 = sphi 0, %s410
      %s425 = sphi 0, %s411
      %s433 = sphi 0, %s435
      %s436 = sphi 0, %s433
      %s437 = sphi 0, %s436
      %s453 = sphi 0, %s437
    $region4: #{tpu_custom_call.1} parent=1 // loop_header_branch
      %38 = sbr.rel (%p36) target = $region8
    $region5: #{tpu_custom_call.1} parent=1 // loop_body
      %s40 = ssub.s32 %s35, 1
      %s41 = ssub.s32 %s35, 2
      %s48 = sadd.s32 1, %s43
      %p49 = scmp.ge.s32.totalorder %s48, 2
      %s50 = scalar_select %p49, 0, %s48
      %s51 = sadd.s32 1, %s42
      %s52 = scalar_select %p49, %s51, %s42
      %p53 = scmp.ge.s32.totalorder %s52, 2
      %s54 = scalar_select %p53, 0, %s52
      %s55 = ssub.s32 %s42, %s54
      %p56 = scmp.eq.s32.totalorder %s55, 0
      %s58 = sadd.s32 %s57, 1
      %s59 = scalar_select %p56, %s57, %s58
      %p62 = pneg %p56
      %p63 = scmp.eq.s32.totalorder %s35, 3
      %p64 = por %p62, %p63
      %p65 = scmp.ne.s32.totalorder %s57, %s60
      %p66 = scmp.eq.s32.totalorder %s35, 0
      %p67 = por %p65, %p66
      %p68 = scmp.ne.s32.totalorder %s57, %s60
      %p69 = scmp.eq.s32.totalorder %s40, 3
      %p70 = por %p68, %p69
      %p71 = scmp.ne.s32.totalorder %s60, %s61
      %p72 = scmp.eq.s32.totalorder %s40, 0
      %p73 = por %p71, %p72
      %p74 = scmp.ne.s32.totalorder %s60, %s61
      %p75 = scmp.eq.s32.totalorder %s41, 3
      %p76 = por %p74, %p75
      %p78 = scmp.ne.s32.totalorder %s61, %s77
      %p79 = scmp.eq.s32.totalorder %s41, 0
      %p80 = por %p78, %p79
      %s81 = ssub.s32 %s42, %s54
      %s82 = ssub.s32 %s43, %s50
      %s83 = sor.u32 %s81, %s82
      %p84 = scmp.eq.s32.totalorder %s83, 0
      %s86 = sadd.s32 %s85, 1
      %s87 = scalar_select %p84, %s85, %s86
      %p90 = pneg %p84
      %p91 = scmp.eq.s32.totalorder %s35, 3
      %p92 = por %p90, %p91
      %p93 = scmp.ne.s32.totalorder %s85, %s88
      %p94 = scmp.eq.s32.totalorder %s35, 0
      %p95 = por %p93, %p94
      %p96 = scmp.ne.s32.totalorder %s85, %s88
      %p97 = scmp.eq.s32.totalorder %s40, 3
      %p98 = por %p96, %p97
      %p99 = scmp.ne.s32.totalorder %s88, %s89
      %p100 = scmp.eq.s32.totalorder %s40, 0
      %p101 = por %p99, %p100
      %p102 = scmp.ne.s32.totalorder %s88, %s89
      %p103 = scmp.eq.s32.totalorder %s41, 3
      %p104 = por %p102, %p103
      %p106 = scmp.ne.s32.totalorder %s89, %s105
      %p107 = scmp.eq.s32.totalorder %s41, 0
      %p108 = por %p106, %p107
      %s109 = ssub.s32 %s42, %s54
      %p110 = scmp.eq.s32.totalorder %s109, 0
      %s112 = sadd.s32 %s111, 1
      %s113 = scalar_select %p110, %s111, %s112
      %p116 = pneg %p110
      %p117 = scmp.eq.s32.totalorder %s35, 3
      %p118 = por %p116, %p117
      %p119 = scmp.ne.s32.totalorder %s111, %s114
      %p120 = scmp.eq.s32.totalorder %s35, 0
      %p121 = por %p119, %p120
      %p122 = scmp.ne.s32.totalorder %s111, %s114
      %p123 = scmp.eq.s32.totalorder %s40, 3
      %p124 = por %p122, %p123
      %p125 = scmp.ne.s32.totalorder %s114, %s115
      %p126 = scmp.eq.s32.totalorder %s40, 0
      %p127 = por %p125, %p126
      %p128 = scmp.ne.s32.totalorder %s114, %s115
      %p129 = scmp.eq.s32.totalorder %s41, 3
      %p130 = por %p128, %p129
      %p132 = scmp.ne.s32.totalorder %s115, %s131
      %p133 = scmp.eq.s32.totalorder %s41, 0
      %p134 = por %p132, %p133
      %s136 = sadd.s32 %s135, 1
      %p139 = scmp.eq.s32.totalorder %s35, 3
      %p140 = scmp.ne.s32.totalorder %s135, %s137
      %p141 = scmp.eq.s32.totalorder %s35, 0
      %p142 = por %p140, %p141
      %p143 = scmp.ne.s32.totalorder %s135, %s137
      %p144 = scmp.eq.s32.totalorder %s40, 3
      %p145 = por %p143, %p144
      %p146 = scmp.ne.s32.totalorder %s137, %s138
      %p147 = scmp.eq.s32.totalorder %s40, 0
      %p148 = por %p146, %p147
      %p149 = scmp.ne.s32.totalorder %s137, %s138
      %p150 = scmp.eq.s32.totalorder %s41, 3
      %p151 = por %p149, %p150
      %p153 = scmp.ne.s32.totalorder %s138, %s152
      %p154 = scmp.eq.s32.totalorder %s41, 0
      %p155 = por %p153, %p154
      %s157 = sadd.s32 %s156, 1
      %p160 = scmp.eq.s32.totalorder %s35, 3
      %p161 = scmp.ne.s32.totalorder %s156, %s158
      %p162 = scmp.eq.s32.totalorder %s35, 0
      %p163 = por %p161, %p162
      %p164 = scmp.ne.s32.totalorder %s156, %s158
      %p165 = scmp.eq.s32.totalorder %s40, 3
      %p166 = por %p164, %p165
      %p167 = scmp.ne.s32.totalorder %s158, %s159
      %p168 = scmp.eq.s32.totalorder %s40, 0
      %p169 = por %p167, %p168
      %p170 = scmp.ne.s32.totalorder %s158, %s159
      %p171 = scmp.eq.s32.totalorder %s41, 3
      %p172 = por %p170, %p171
      %p174 = scmp.ne.s32.totalorder %s159, %s173
      %p175 = scmp.eq.s32.totalorder %s41, 0
      %p176 = por %p174, %p175
      %s178 = sadd.s32 %s177, 1
      %p181 = scmp.eq.s32.totalorder %s35, 3
      %p182 = scmp.ne.s32.totalorder %s177, %s179
      %p183 = scmp.eq.s32.totalorder %s35, 0
      %p184 = por %p182, %p183
      %p185 = scmp.ne.s32.totalorder %s177, %s179
      %p186 = scmp.eq.s32.totalorder %s40, 3
      %p187 = por %p185, %p186
      %p188 = scmp.ne.s32.totalorder %s179, %s180
      %p189 = scmp.eq.s32.totalorder %s40, 0
      %p190 = por %p188, %p189
      %p191 = scmp.ne.s32.totalorder %s179, %s180
      %p192 = scmp.eq.s32.totalorder %s41, 3
      %p193 = por %p191, %p192
      %p195 = scmp.ne.s32.totalorder %s180, %s194
      %p196 = scmp.eq.s32.totalorder %s41, 0
      %p197 = por %p195, %p196
      %s199 = sadd.s32 %s198, 1
      %p202 = scmp.eq.s32.totalorder %s35, 3
      %p203 = scmp.ne.s32.totalorder %s198, %s200
      %p204 = scmp.eq.s32.totalorder %s35, 0
      %p205 = por %p203, %p204
      %p206 = scmp.ne.s32.totalorder %s198, %s200
      %p207 = scmp.eq.s32.totalorder %s40, 3
      %p208 = por %p206, %p207
      %p209 = scmp.ne.s32.totalorder %s200, %s201
      %p210 = scmp.eq.s32.totalorder %s40, 0
      %p211 = por %p209, %p210
      %p212 = scmp.ne.s32.totalorder %s200, %s201
      %p213 = scmp.eq.s32.totalorder %s41, 3
      %p214 = por %p212, %p213
      %p216 = scmp.ne.s32.totalorder %s201, %s215
      %p217 = scmp.eq.s32.totalorder %s41, 0
      %p218 = por %p216, %p217
      %s220 = sadd.s32 %s219, 1
      %p223 = scmp.eq.s32.totalorder %s35, 3
      %p224 = scmp.ne.s32.totalorder %s219, %s221
      %p225 = scmp.eq.s32.totalorder %s35, 0
      %p226 = por %p224, %p225
      %p227 = scmp.ne.s32.totalorder %s219, %s221
      %p228 = scmp.eq.s32.totalorder %s40, 3
      %p229 = por %p227, %p228
      %p230 = scmp.ne.s32.totalorder %s221, %s222
      %p231 = scmp.eq.s32.totalorder %s40, 0
      %p232 = por %p230, %p231
      %p233 = scmp.ne.s32.totalorder %s221, %s222
      %p234 = scmp.eq.s32.totalorder %s41, 3
      %p235 = por %p233, %p234
      %p237 = scmp.ne.s32.totalorder %s222, %s236
      %p238 = scmp.eq.s32.totalorder %s41, 0
      %p239 = por %p237, %p238
      %s241 = sadd.s32 %s240, 1
      %p244 = scmp.eq.s32.totalorder %s35, 3
      %p245 = scmp.ne.s32.totalorder %s240, %s242
      %p246 = scmp.eq.s32.totalorder %s35, 0
      %p247 = por %p245, %p246
      %p248 = scmp.ne.s32.totalorder %s240, %s242
      %p249 = scmp.eq.s32.totalorder %s40, 3
      %p250 = por %p248, %p249
      %p251 = scmp.ne.s32.totalorder %s242, %s243
      %p252 = scmp.eq.s32.totalorder %s40, 0
      %p253 = por %p251, %p252
      %p254 = scmp.ne.s32.totalorder %s242, %s243
      %p255 = scmp.eq.s32.totalorder %s41, 3
      %p256 = por %p254, %p255
      %p258 = scmp.ne.s32.totalorder %s243, %s257
      %p259 = scmp.eq.s32.totalorder %s41, 0
      %p260 = por %p258, %p259
      %s262 = sadd.s32 %s261, 1
      %p265 = scmp.eq.s32.totalorder %s35, 3
      %p266 = scmp.ne.s32.totalorder %s261, %s263
      %p267 = scmp.eq.s32.totalorder %s35, 0
      %p268 = por %p266, %p267
      %p269 = scmp.ne.s32.totalorder %s261, %s263
      %p270 = scmp.eq.s32.totalorder %s40, 3
      %p271 = por %p269, %p270
      %p272 = scmp.ne.s32.totalorder %s263, %s264
      %p273 = scmp.eq.s32.totalorder %s40, 0
      %p274 = por %p272, %p273
      %p275 = scmp.ne.s32.totalorder %s263, %s264
      %p276 = scmp.eq.s32.totalorder %s41, 3
      %p277 = por %p275, %p276
      %p279 = scmp.ne.s32.totalorder %s264, %s278
      %p280 = scmp.eq.s32.totalorder %s41, 0
      %p281 = por %p279, %p280
      %s283 = sadd.s32 %s282, 1
      %p286 = scmp.eq.s32.totalorder %s35, 3
      %p287 = scmp.ne.s32.totalorder %s282, %s284
      %p288 = scmp.eq.s32.totalorder %s35, 0
      %p289 = por %p287, %p288
      %p290 = scmp.ne.s32.totalorder %s282, %s284
      %p291 = scmp.eq.s32.totalorder %s40, 3
      %p292 = por %p290, %p291
      %p293 = scmp.ne.s32.totalorder %s284, %s285
      %p294 = scmp.eq.s32.totalorder %s40, 0
      %p295 = por %p293, %p294
      %p296 = scmp.ne.s32.totalorder %s284, %s285
      %p297 = scmp.eq.s32.totalorder %s41, 3
      %p298 = por %p296, %p297
      %p300 = scmp.ne.s32.totalorder %s285, %s299
      %p301 = scmp.eq.s32.totalorder %s41, 0
      %p302 = por %p300, %p301
      %s304 = sadd.s32 %s303, 1
      %p307 = scmp.eq.s32.totalorder %s35, 3
      %p308 = scmp.ne.s32.totalorder %s303, %s305
      %p309 = scmp.eq.s32.totalorder %s35, 0
      %p310 = por %p308, %p309
      %p311 = scmp.ne.s32.totalorder %s303, %s305
      %p312 = scmp.eq.s32.totalorder %s40, 3
      %p313 = por %p311, %p312
      %p314 = scmp.ne.s32.totalorder %s305, %s306
      %p315 = scmp.eq.s32.totalorder %s40, 0
      %p316 = por %p314, %p315
      %p317 = scmp.ne.s32.totalorder %s305, %s306
      %p318 = scmp.eq.s32.totalorder %s41, 3
      %p319 = por %p317, %p318
      %p321 = scmp.ne.s32.totalorder %s306, %s320
      %p322 = scmp.eq.s32.totalorder %s41, 0
      %p323 = por %p321, %p322
      %s325 = sadd.s32 %s324, 1
      %p328 = scmp.eq.s32.totalorder %s35, 3
      %p329 = scmp.ne.s32.totalorder %s324, %s326
      %p330 = scmp.eq.s32.totalorder %s35, 0
      %p331 = por %p329, %p330
      %p332 = scmp.ne.s32.totalorder %s324, %s326
      %p333 = scmp.eq.s32.totalorder %s40, 3
      %p334 = por %p332, %p333
      %p335 = scmp.ne.s32.totalorder %s326, %s327
      %p336 = scmp.eq.s32.totalorder %s40, 0
      %p337 = por %p335, %p336
      %p338 = scmp.ne.s32.totalorder %s326, %s327
      %p339 = scmp.eq.s32.totalorder %s41, 3
      %p340 = por %p338, %p339
      %p342 = scmp.ne.s32.totalorder %s327, %s341
      %p343 = scmp.eq.s32.totalorder %s41, 0
      %p344 = por %p342, %p343
      %s346 = sadd.s32 %s345, 1
      %p349 = scmp.eq.s32.totalorder %s35, 3
      %p350 = scmp.ne.s32.totalorder %s345, %s347
      %p351 = scmp.eq.s32.totalorder %s35, 0
      %p352 = por %p350, %p351
      %p353 = scmp.ne.s32.totalorder %s345, %s347
      %p354 = scmp.eq.s32.totalorder %s40, 3
      %p355 = por %p353, %p354
      %p356 = scmp.ne.s32.totalorder %s347, %s348
      %p357 = scmp.eq.s32.totalorder %s40, 0
      %p358 = por %p356, %p357
      %p359 = scmp.ne.s32.totalorder %s347, %s348
      %p360 = scmp.eq.s32.totalorder %s41, 3
      %p361 = por %p359, %p360
      %p363 = scmp.ne.s32.totalorder %s348, %s362
      %p364 = scmp.eq.s32.totalorder %s41, 0
      %p365 = por %p363, %p364
      %s367 = sadd.s32 %s366, 1
      %p370 = scmp.eq.s32.totalorder %s35, 3
      %p371 = scmp.ne.s32.totalorder %s366, %s368
      %p372 = scmp.eq.s32.totalorder %s35, 0
      %p373 = por %p371, %p372
      %p374 = scmp.ne.s32.totalorder %s366, %s368
      %p375 = scmp.eq.s32.totalorder %s40, 3
      %p376 = por %p374, %p375
      %p377 = scmp.ne.s32.totalorder %s368, %s369
      %p378 = scmp.eq.s32.totalorder %s40, 0
      %p379 = por %p377, %p378
      %p380 = scmp.ne.s32.totalorder %s368, %s369
      %p381 = scmp.eq.s32.totalorder %s41, 3
      %p382 = por %p380, %p381
      %p384 = scmp.ne.s32.totalorder %s369, %s383
      %p385 = scmp.eq.s32.totalorder %s41, 0
      %p386 = por %p384, %p385
      %s388 = sadd.s32 %s387, 1
      %p391 = scmp.eq.s32.totalorder %s35, 3
      %p392 = scmp.ne.s32.totalorder %s387, %s389
      %p393 = scmp.eq.s32.totalorder %s35, 0
      %p394 = por %p392, %p393
      %p395 = scmp.ne.s32.totalorder %s387, %s389
      %p396 = scmp.eq.s32.totalorder %s40, 3
      %p397 = por %p395, %p396
      %p398 = scmp.ne.s32.totalorder %s389, %s390
      %p399 = scmp.eq.s32.totalorder %s40, 0
      %p400 = por %p398, %p399
      %p401 = scmp.ne.s32.totalorder %s389, %s390
      %p402 = scmp.eq.s32.totalorder %s41, 3
      %p403 = por %p401, %p402
      %p405 = scmp.ne.s32.totalorder %s390, %s404
      %p406 = scmp.eq.s32.totalorder %s41, 0
      %p407 = por %p405, %p406
      %s409 = sadd.s32 %s408, 1
      %p412 = scmp.eq.s32.totalorder %s35, 3
      %p413 = scmp.ne.s32.totalorder %s408, %s410
      %p414 = scmp.eq.s32.totalorder %s35, 0
      %p415 = por %p413, %p414
      %p416 = scmp.ne.s32.totalorder %s408, %s410
      %p417 = scmp.eq.s32.totalorder %s40, 3
      %p418 = por %p416, %p417
      %p419 = scmp.ne.s32.totalorder %s410, %s411
      %p420 = scmp.eq.s32.totalorder %s40, 0
      %p421 = por %p419, %p420
      %p422 = scmp.ne.s32.totalorder %s410, %s411
      %p423 = scmp.eq.s32.totalorder %s41, 3
      %p424 = por %p422, %p423
      %p426 = scmp.ne.s32.totalorder %s411, %s425
      %p427 = scmp.eq.s32.totalorder %s41, 0
      %p428 = por %p426, %p427
      %s429 = ssub.s32 %s42, %s54
      %s430 = ssub.s32 %s43, %s50
      %s431 = sor.u32 %s429, %s430
      %p432 = scmp.eq.s32.totalorder %s431, 0
      %s434 = sadd.s32 %s433, 1
      %s435 = scalar_select %p432, %s433, %s434
      %p438 = pneg %p432
      %p439 = scmp.eq.s32.totalorder %s35, 3
      %p440 = por %p438, %p439
      %p441 = scmp.ne.s32.totalorder %s433, %s436
      %p442 = scmp.eq.s32.totalorder %s35, 0
      %p443 = por %p441, %p442
      %p444 = scmp.ne.s32.totalorder %s433, %s436
      %p445 = scmp.eq.s32.totalorder %s40, 3
      %p446 = por %p444, %p445
      %p447 = scmp.ne.s32.totalorder %s436, %s437
      %p448 = scmp.eq.s32.totalorder %s40, 0
      %p449 = por %p447, %p448
      %p450 = scmp.ne.s32.totalorder %s436, %s437
      %p451 = scmp.eq.s32.totalorder %s41, 3
      %p452 = por %p450, %p451
      %p454 = scmp.ne.s32.totalorder %s437, %s453
      %p455 = scmp.eq.s32.totalorder %s41, 0
      %p456 = por %p454, %p455
      %p457 = scmp.le.s32.totalorder 1, %s35
      %p458 = scmp.lt.s32.totalorder %s35, 5
      %p459 = pnand %p457, %p458
      %p460 = pneg %p459
      // Predicated region
      $region9: #{tpu_custom_call.1} parent=5 // pred_check
        _
      $region10: #{tpu_custom_call.1} parent=5 // pred_check_branch
        %462 = sbr.rel (%p459) target = $region12
      $region11: #{tpu_custom_call.1} parent=5 // pred_region
        %s463 = ssub.s32 %s35, 1
        // Predicated region
        $region13: #{tpu_custom_call.1} parent=11 // pred_check
          %p464 = pneg %p148
        $region14: #{tpu_custom_call.1} parent=11 // pred_check_branch
          %466 = sbr.rel (%p464) target = $region16
        $region15: #{tpu_custom_call.1} parent=11 // pred_region
          %s468 = ssub.s32 16, 16
          %469 = vsyncadd [#allocation8], %s468
          %s471 = sshll.u32 [#allocation9], 4
          %s472 = int_to_ptr.vmem [resolvable:$true] %s471
          %474 = dma.hbm_to_vmem [thread:$0]  %s3, 16, %s472, [#allocation8]
        $region16: #{tpu_custom_call.1} parent=11 // pred_fallthru
          _
        // Predicated region
        $region17: #{tpu_custom_call.1} parent=11 // pred_check
          %p475 = pneg %p169
        $region18: #{tpu_custom_call.1} parent=11 // pred_check_branch
          %477 = sbr.rel (%p475) target = $region20
        $region19: #{tpu_custom_call.1} parent=11 // pred_region
          %s479 = ssub.s32 16, 16
          %480 = vsyncadd [#allocation11], %s479
          %s482 = sshll.u32 [#allocation10], 4
          %s483 = int_to_ptr.vmem [resolvable:$true] %s482
          %485 = dma.hbm_to_vmem [thread:$0]  %s4, 16, %s483, [#allocation11]
        $region20: #{tpu_custom_call.1} parent=11 // pred_fallthru
          _
        // Predicated region
        $region21: #{tpu_custom_call.1} parent=11 // pred_check
          %p486 = pneg %p190
        $region22: #{tpu_custom_call.1} parent=11 // pred_check_branch
          %488 = sbr.rel (%p486) target = $region24
        $region23: #{tpu_custom_call.1} parent=11 // pred_region
          _
        $region24: #{tpu_custom_call.1} parent=11 // pred_fallthru
          _
        // Predicated region
        $region25: #{tpu_custom_call.1} parent=11 // pred_check
          %p489 = pneg %p211
        $region26: #{tpu_custom_call.1} parent=11 // pred_check_branch
          %491 = sbr.rel (%p489) target = $region28
        $region27: #{tpu_custom_call.1} parent=11 // pred_region
          %s493 = ssub.s32 16, 16
          %494 = vsyncadd [#allocation11], %s493
          %s496 = sshll.u32 [#allocation12], 4
          %s497 = int_to_ptr.vmem [resolvable:$true] %s496
          %499 = dma.hbm_to_vmem [thread:$0]  %s6, 16, %s497, [#allocation11]
        $region28: #{tpu_custom_call.1} parent=11 // pred_fallthru
          _
        // Predicated region
        $region29: #{tpu_custom_call.1} parent=11 // pred_check
          %p500 = pneg %p232
        $region30: #{tpu_custom_call.1} parent=11 // pred_check_branch
          %502 = sbr.rel (%p500) target = $region32
        $region31: #{tpu_custom_call.1} parent=11 // pred_region
          %s504 = ssub.s32 256, 256
          %505 = vsyncadd [#allocation14], %s504
          %s506 = sshll.u32 [#allocation13], 4
          %s507 = int_to_ptr.vmem [resolvable:$true] %s506
          %512 = dma.hbm_to_vmem [thread:$0]  %s7, 256, %s507, [#allocation14], 64, 64, 4
        $region32: #{tpu_custom_call.1} parent=11 // pred_fallthru
          _
        // Predicated region
        $region33: #{tpu_custom_call.1} parent=11 // pred_check
          %p513 = pneg %p253
        $region34: #{tpu_custom_call.1} parent=11 // pred_check_branch
          %515 = sbr.rel (%p513) target = $region36
        $region35: #{tpu_custom_call.1} parent=11 // pred_region
          %s517 = ssub.s32 16, 16
          %518 = vsyncadd [#allocation14], %s517
          %s520 = sshll.u32 [#allocation15], 4
          %s521 = int_to_ptr.vmem [resolvable:$true] %s520
          %523 = dma.hbm_to_vmem [thread:$0]  %s8, 16, %s521, [#allocation14]
        $region36: #{tpu_custom_call.1} parent=11 // pred_fallthru
          _
        // Predicated region
        $region37: #{tpu_custom_call.1} parent=11 // pred_check
          %p524 = pneg %p274
        $region38: #{tpu_custom_call.1} parent=11 // pred_check_branch
          %526 = sbr.rel (%p524) target = $region40
        $region39: #{tpu_custom_call.1} parent=11 // pred_region
          _
        $region40: #{tpu_custom_call.1} parent=11 // pred_fallthru
          _
        // Predicated region
        $region41: #{tpu_custom_call.1} parent=11 // pred_check
          %p527 = pneg %p295
        $region42: #{tpu_custom_call.1} parent=11 // pred_check_branch
          %529 = sbr.rel (%p527) target = $region44
        $region43: #{tpu_custom_call.1} parent=11 // pred_region
          _
        $region44: #{tpu_custom_call.1} parent=11 // pred_fallthru
          _
        // Predicated region
        $region45: #{tpu_custom_call.1} parent=11 // pred_check
          %p530 = pneg %p316
        $region46: #{tpu_custom_call.1} parent=11 // pred_check_branch
          %532 = sbr.rel (%p530) target = $region48
        $region47: #{tpu_custom_call.1} parent=11 // pred_region
          _
        $region48: #{tpu_custom_call.1} parent=11 // pred_fallthru
          _
        // Predicated region
        $region49: #{tpu_custom_call.1} parent=11 // pred_check
          %p533 = pneg %p337
        $region50: #{tpu_custom_call.1} parent=11 // pred_check_branch
          %535 = sbr.rel (%p533) target = $region52
        $region51: #{tpu_custom_call.1} parent=11 // pred_region
          _
        $region52: #{tpu_custom_call.1} parent=11 // pred_fallthru
          _
        // Predicated region
        $region53: #{tpu_custom_call.1} parent=11 // pred_check
          %p536 = pneg %p358
        $region54: #{tpu_custom_call.1} parent=11 // pred_check_branch
          %538 = sbr.rel (%p536) target = $region56
        $region55: #{tpu_custom_call.1} parent=11 // pred_region
          %s540 = ssub.s32 256, 256
          %541 = vsyncadd [#allocation17], %s540
          %s542 = sshll.u32 [#allocation16], 4
          %s543 = int_to_ptr.vmem [resolvable:$true] %s542
          %548 = dma.hbm_to_vmem [thread:$0]  %s13, 256, %s543, [#allocation17], 64, 64, 4
        $region56: #{tpu_custom_call.1} parent=11 // pred_fallthru
          _
        // Predicated region
        $region57: #{tpu_custom_call.1} parent=11 // pred_check
          %p549 = pneg %p379
        $region58: #{tpu_custom_call.1} parent=11 // pred_check_branch
          %551 = sbr.rel (%p549) target = $region60
        $region59: #{tpu_custom_call.1} parent=11 // pred_region
          _
        $region60: #{tpu_custom_call.1} parent=11 // pred_fallthru
          _
        // Predicated region
        $region61: #{tpu_custom_call.1} parent=11 // pred_check
          %p552 = pneg %p400
        $region62: #{tpu_custom_call.1} parent=11 // pred_check_branch
          %554 = sbr.rel (%p552) target = $region64
        $region63: #{tpu_custom_call.1} parent=11 // pred_region
          _
        $region64: #{tpu_custom_call.1} parent=11 // pred_fallthru
          _
        // Predicated region
        $region65: #{tpu_custom_call.1} parent=11 // pred_check
          %p555 = pneg %p421
        $region66: #{tpu_custom_call.1} parent=11 // pred_check_branch
          %557 = sbr.rel (%p555) target = $region68
        $region67: #{tpu_custom_call.1} parent=11 // pred_region
          _
        $region68: #{tpu_custom_call.1} parent=11 // pred_fallthru
          _
      $region12: #{tpu_custom_call.1} parent=5 // pred_fallthru
        _
      %p558 = scmp.lt.s32.totalorder %s35, 4
      // Predicated region
      $region69: #{tpu_custom_call.1} parent=5 // pred_check
        %p559 = pneg %p558
      $region70: #{tpu_custom_call.1} parent=5 // pred_check_branch
        %561 = sbr.rel (%p559) target = $region72
      $region71: #{tpu_custom_call.1} parent=5 // pred_region
        // Predicated region
        $region73: #{tpu_custom_call.1} parent=71 // pred_check
          %p562 = pneg %p67
        $region74: #{tpu_custom_call.1} parent=71 // pred_check_branch
          %564 = sbr.rel (%p562) target = $region76
        $region75: #{tpu_custom_call.1} parent=71 // pred_region
          %p565 = scmp.lt.s32.totalorder %s42, 1
          %s566 = scalar_select %p565, %s42, 1
          %s567 = smul.addr %s566, 2
          %s568 = smul.addr %s567, 8
          %s569 = scalar_lea.vmem %s0, %s568
        $region76: #{tpu_custom_call.1} parent=71 // pred_fallthru
          _
        // Predicated region
        $region77: #{tpu_custom_call.1} parent=71 // pred_check
          %p570 = pneg %p95
        $region78: #{tpu_custom_call.1} parent=71 // pred_check_branch
          %572 = sbr.rel (%p570) target = $region80
        $region79: #{tpu_custom_call.1} parent=71 // pred_region
          %s573 = sand.u32 %s85, 1
          %s574 = scalar_lea.sflag [#allocation5], %s573
          %s575 = sand.u32 %s85, 1
          %s576 = smul.addr %s575, 8
          %s577 = scalar_lea.vmem [#allocation4], %s576
          %s579 = ssub.s32 128, 128
          %580 = vsyncadd %s574, %s579
          %s581 = smul.addr %s42, 2
          %s582 = sadd.s32 %s43, %s581
          %s583 = smul.addr %s582, 128
          %s584 = scalar_lea.hbm %s1, %s583
          %s586 = sshll.u32 %s577, 4
          %s587 = int_to_ptr.vmem [resolvable:$true] %s586
          %589 = dma.hbm_to_vmem [thread:$0]  %s584, 128, %s587, %s574
        $region80: #{tpu_custom_call.1} parent=71 // pred_fallthru
          _
        // Predicated region
        $region81: #{tpu_custom_call.1} parent=71 // pred_check
          %p590 = pneg %p121
        $region82: #{tpu_custom_call.1} parent=71 // pred_check_branch
          %592 = sbr.rel (%p590) target = $region84
        $region83: #{tpu_custom_call.1} parent=71 // pred_region
          %s593 = sand.u32 %s35, 1
          %s594 = scalar_lea.sflag [#allocation8], %s593
          %s595 = sand.u32 %s111, 1
          %s596 = scalar_lea.vmem [#allocation7], %s595
          %s598 = ssub.s32 16, 16
          %599 = vsyncadd %s594, %s598
          %s600 = smul.addr %s42, 16
          %s601 = scalar_lea.hbm %s2, %s600
          %s603 = sshll.u32 %s596, 4
          %s604 = int_to_ptr.vmem [resolvable:$true] %s603
          %606 = dma.hbm_to_vmem [thread:$0]  %s601, 16, %s604, %s594
        $region84: #{tpu_custom_call.1} parent=71 // pred_fallthru
          _
      $region72: #{tpu_custom_call.1} parent=5 // pred_fallthru
        _
      %p607 = scmp.le.s32.totalorder 1, %s35
      %p608 = scmp.lt.s32.totalorder %s35, 5
      %p609 = pnand %p607, %p608
      %p610 = pneg %p609
      // Predicated region
      $region85: #{tpu_custom_call.1} parent=5 // pred_check
        _
      $region86: #{tpu_custom_call.1} parent=5 // pred_check_branch
        %612 = sbr.rel (%p609) target = $region88
      $region87: #{tpu_custom_call.1} parent=5 // pred_region
        %s613 = ssub.s32 %s35, 1
        %s614 = sand.u32 %s88, 1
        %s615 = scalar_lea.sflag [#allocation5], %s614
        %s616 = sand.u32 %s88, 1
        %s617 = smul.addr %s616, 8
        %s618 = scalar_lea.vmem [#allocation4], %s617
        // Predicated region
        $region89: #{tpu_custom_call.1} parent=87 // pred_check
          %p619 = pneg %p101
        $region90: #{tpu_custom_call.1} parent=87 // pred_check_branch
          %621 = sbr.rel (%p619) target = $region92
        $region91: #{tpu_custom_call.1} parent=87 // pred_region
          %622 = dma.done %s615, 128
        $region92: #{tpu_custom_call.1} parent=87 // pred_fallthru
          _
        %s623 = sand.u32 %s40, 1
        %s624 = scalar_lea.sflag [#allocation8], %s623
        %s625 = sand.u32 %s114, 1
        %s626 = scalar_lea.vmem [#allocation7], %s625
        // Predicated region
        $region93: #{tpu_custom_call.1} parent=87 // pred_check
          %p627 = pneg %p127
        $region94: #{tpu_custom_call.1} parent=87 // pred_check_branch
          %629 = sbr.rel (%p627) target = $region96
        $region95: #{tpu_custom_call.1} parent=87 // pred_region
          %630 = dma.done %s624, 16
        $region96: #{tpu_custom_call.1} parent=87 // pred_fallthru
          _
        // Predicated region
        $region97: #{tpu_custom_call.1} parent=87 // pred_check
          %p631 = pneg %p148
        $region98: #{tpu_custom_call.1} parent=87 // pred_check_branch
          %633 = sbr.rel (%p631) target = $region100
        $region99: #{tpu_custom_call.1} parent=87 // pred_region
          %634 = dma.done [#allocation8], 16
        $region100: #{tpu_custom_call.1} parent=87 // pred_fallthru
          _
        // Predicated region
        $region101: #{tpu_custom_call.1} parent=87 // pred_check
          %p635 = pneg %p169
        $region102: #{tpu_custom_call.1} parent=87 // pred_check_branch
          %637 = sbr.rel (%p635) target = $region104
        $region103: #{tpu_custom_call.1} parent=87 // pred_region
          %638 = dma.done [#allocation11], 16
        $region104: #{tpu_custom_call.1} parent=87 // pred_fallthru
          _
        // Predicated region
        $region105: #{tpu_custom_call.1} parent=87 // pred_check
          %p639 = pneg %p211
        $region106: #{tpu_custom_call.1} parent=87 // pred_check_branch
          %641 = sbr.rel (%p639) target = $region108
        $region107: #{tpu_custom_call.1} parent=87 // pred_region
          %642 = dma.done [#allocation11], 16
        $region108: #{tpu_custom_call.1} parent=87 // pred_fallthru
          _
        // Predicated region
        $region109: #{tpu_custom_call.1} parent=87 // pred_check
          %p643 = pneg %p232
        $region110: #{tpu_custom_call.1} parent=87 // pred_check_branch
          %645 = sbr.rel (%p643) target = $region112
        $region111: #{tpu_custom_call.1} parent=87 // pred_region
          %646 = dma.done [#allocation14], 256
        $region112: #{tpu_custom_call.1} parent=87 // pred_fallthru
          _
        // Predicated region
        $region113: #{tpu_custom_call.1} parent=87 // pred_check
          %p647 = pneg %p253
        $region114: #{tpu_custom_call.1} parent=87 // pred_check_branch
          %649 = sbr.rel (%p647) target = $region116
        $region115: #{tpu_custom_call.1} parent=87 // pred_region
          %650 = dma.done [#allocation14], 16
        $region116: #{tpu_custom_call.1} parent=87 // pred_fallthru
          _
        // Predicated region
        $region117: #{tpu_custom_call.1} parent=87 // pred_check
          %p651 = pneg %p358
        $region118: #{tpu_custom_call.1} parent=87 // pred_check_branch
          %653 = sbr.rel (%p651) target = $region120
        $region119: #{tpu_custom_call.1} parent=87 // pred_region
          %654 = dma.done [#allocation17], 256
        $region120: #{tpu_custom_call.1} parent=87 // pred_fallthru
          _
        %p655 = scmp.lt.s32.totalorder %s44, 1
        %s656 = scalar_select %p655, %s44, 1
        %s657 = smul.addr %s656, 2
        %s658 = smul.addr %s657, 8
        %s659 = scalar_lea.vmem %s0, %s658
        %p660 = pneg %p73
        %p661 = pneg %p70
        %s662 = sand.u32 %s88, 1
        %s663 = scalar_lea.sflag [#allocation5], %s662
        %s664 = sand.u32 %s88, 1
        %s665 = smul.addr %s664, 8
        %s666 = scalar_lea.vmem [#allocation4], %s665
        %p667 = pneg %p101
        %p668 = pneg %p98
        %s669 = sand.u32 %s40, 1
        %s670 = scalar_lea.sflag [#allocation8], %s669
        %s671 = sand.u32 %s114, 1
        %s672 = scalar_lea.vmem [#allocation7], %s671
        %p673 = pneg %p127
        %p674 = pneg %p124
        %p675 = pneg %p148
        %p676 = pneg %p145
        %p677 = pneg %p169
        %p678 = pneg %p166
        %p679 = pneg %p190
        %p680 = pneg %p187
        %p681 = pneg %p211
        %p682 = pneg %p208
        %p683 = pneg %p232
        %p684 = pneg %p229
        %p685 = pneg %p253
        %p686 = pneg %p250
        %p687 = pneg %p274
        %p688 = pneg %p271
        %p689 = pneg %p295
        %p690 = pneg %p292
        %p691 = pneg %p316
        %p692 = pneg %p313
        %p693 = pneg %p337
        %p694 = pneg %p334
        %p695 = pneg %p358
        %p696 = pneg %p355
        %p697 = pneg %p379
        %p698 = pneg %p376
        %p699 = pneg %p400
        %p700 = pneg %p397
        %p701 = pneg %p421
        %p702 = pneg %p418
        %p703 = pneg %p449
        %p704 = pneg %p446
        %s705 = sand.u32 %s436, 1
        %s706 = scalar_lea.sflag [#allocation6], %s705
        %s707 = sand.u32 %s436, 1
        %s708 = smul.addr %s707, 8
        %s709 = scalar_lea.vmem [#allocation18], %s708
        %p710 = scmp.lt.s32.totalorder %s44, 1
        %s711 = scalar_select %p710, %s44, 1
        %s712 = smul.addr %s711, 2
        %s713 = smul.addr %s712, 8
        %s714 = scalar_lea.vmem %s0, %s713
        %p720 = scmp.eq.s32.totalorder %s45, 0
        // Predicated region
        $region121: #{tpu_custom_call.1} parent=87 // pred_check
          %p721 = pneg %p720
        $region122: #{tpu_custom_call.1} parent=87 // pred_check_branch
          %723 = sbr.rel (%p721) target = $region124
        $region123: #{tpu_custom_call.1} parent=87 // pred_region
          %v724 = vld [vmem:[%s714] sm:$0xff]
          %v725 = vld [vmem:[%s714 + $0x8] sm:$0xff]
          %v726 = vld [vmem:[#allocation9] sm:$0x1]
          %v727 = vld [vmem:[#allocation10] sm:$0x1]
          %vm728 = vcmask 261120
          %v729 = vsel %vm728, %v724, 0.0
          %730 = vadd.xlane.f32.xlu0 %v729
          %v731 = vpop.xlane.xlu0 %730
          %v732 = vsel %vm728, %v725, 0.0
          %733 = vadd.xlane.f32.xlu0 %v732
          %v734 = vpop.xlane.xlu0 %733
          %v735 = vrcp.pop 32.0
          %v736 = vmul.f32 %v731, %v735
          %v737 = vmul.f32 %v734, %v735
          %v738 = vmul.f32 %v724, %v724
          %v739 = vmul.f32 %v725, %v725
          %v740 = vsel %vm728, %v738, 0.0
          %741 = vadd.xlane.f32.xlu0 %v740
          %v742 = vpop.xlane.xlu0 %741
          %v743 = vsel %vm728, %v739, 0.0
          %744 = vadd.xlane.f32.xlu0 %v743
          %v745 = vpop.xlane.xlu0 %744
          %v746 = vmul.f32 %v742, %v735
          %v747 = vmul.f32 %v745, %v735
          %v748 = vmul.f32 %v736, %v736
          %v749 = vmul.f32 %v737, %v737
          %v750 = vsub.f32 %v746, %v748
          %v751 = vsub.f32 %v747, %v749
          %v752 = vsub.f32 %v724, %v736
          %v753 = vsub.f32 %v725, %v737
          %v754 = vadd.f32 %v750, 1e-06
          %v755 = vadd.f32 %v751, 1e-06
          %v756 = vrsqrt.pop %v754
          %v757 = vrsqrt.pop %v755
          %v758 = vmul.f32 %v752, %v756
          %v759 = vmul.f32 %v753, %v757
          %v761 = vlaneseq
          %v762 = vshrl.u32 %v761, 7
          %v763 = vsub.s32 0, %v762
          %v764 = vrot.slane %v726, %v763
          %v766 = vmul.f32 %v758, %v764
          %v767 = vmul.f32 %v759, %v764
          %v769 = vlaneseq
          %v770 = vshrl.u32 %v769, 7
          %v771 = vsub.s32 0, %v770
          %v772 = vrot.slane %v727, %v771
          %v774 = vadd.f32 %v766, %v772
          %v775 = vadd.f32 %v767, %v772
          %v776 = vpack.c.bf16 %v775, %v774
          %v777 = vld [vmem:[#allocation13] sm:$0xf]
          %v778 = vld [vmem:[#allocation13 + $0x4] sm:$0xf]
          %v779 = vld [vmem:[#allocation13 + $0x8] sm:$0xf]
          %v780 = vld [vmem:[#allocation13 + $0xc] sm:$0xf]
          %v781 = vld [vmem:[#allocation15] sm:$0x1]
          %v783 = vlaneseq
          %v784 = vshrl.u32 %v783, 7
          %v785 = vsub.s32 0, %v784
          %v786 = vrot.slane %v781, %v785
          %v792 = vunpack.c.l.b16 %v777
          %v793 = vunpack.c.l.b16 %v778
          %v794 = vunpack.c.l.b16 %v779
          %v795 = vunpack.c.l.b16 %v780
          %v796 = vpack.c.b16 %v793, %v792
          %v797 = vpack.c.b16 %v795, %v794
          %v801 = vsel %vm728, %v776, 0
          %803 = vmatprep.subr.bf16.mxu0 0
          %804 = vmatpush1.bf16.msra.mxu0 0
          %805 = vmatprep.subr.bf16.mxu0 0
          %806 = vmatpush1.bf16.msra.mxu0 0
          %807 = vmatprep.subr.bf16.mxu0 0
          %808 = vmatpush1.bf16.msra.mxu0 0
          %809 = vmatprep.subr.bf16.mxu0 0
          %810 = vmatpush1.bf16.msra.mxu0 0
          %811 = vmatprep.subr.bf16.mxu0 0
          %812 = vmatpush1.bf16.msra.mxu0 0
          %813 = vmatprep.subr.bf16.mxu0 0
          %814 = vmatpush1.bf16.msra.mxu0 0
          %815 = vmatprep.subr.bf16.mxu0 0
          %816 = vmatpush1.bf16.msra.mxu0 %v797
          %817 = vmatprep.subr.bf16.mxu0 0
          %818 = vmatpush1.bf16.msra.mxu0 %v796
          %819 = vmatprep.subr.bf16.mxu0 0
          %820 = vmatpush2.bf16.msra.mxu0 0
          %821 = vmatprep.subr.bf16.mxu0 0
          %822 = vmatpush2.bf16.msra.mxu0 0
          %823 = vmatprep.subr.bf16.mxu0 0
          %824 = vmatpush2.bf16.msra.mxu0 0
          %825 = vmatprep.subr.bf16.mxu0 0
          %826 = vmatpush2.bf16.msra.mxu0 0
          %827 = vmatprep.subr.bf16.mxu0 0
          %828 = vmatpush2.bf16.msra.mxu0 0
          %829 = vmatprep.subr.bf16.mxu0 0
          %830 = vmatpush2.bf16.msra.mxu0 0
          %831 = vmatprep.subr.bf16.mxu0 0
          %832 = vmatpush2.bf16.msra.mxu0 0
          %833 = vmatprep.subr.bf16.mxu0 0
          %834 = vmatpush2.bf16.msra.mxu0 0
          %835 = vmatprep.mubr.bf16.mxu0 0
          %836 = vmatmul.mubr.bf16.gmra.mxu0 %v801
          %v837 = vpop.f32.mrf.mxu0
          %v838 = vadd.f32 %v786, %v837
          %v839 = vpop.f32.mrf.mxu0
          %v840 = vpop.f32.mrf.mxu0
          %v841 = vadd.f32 %v786, %v840
          %v842 = vpop.f32.mrf.mxu0
          %843 = vdwg.mxu0
          %v844 = vpack.c.bf16 %v841, %v838
          %v846 = vunpack.c.l.b16 %v844
          %v847 = vunpack.c.h.b16 %v844
          %v848 = vpack.c.b16 %v846, %v846
          %v849 = vpack.c.b16 %v847, %v847
          %vm852 = vcmask 60416
          %853 = vst.msk [vmem:[#allocation2] sm:$0xf] %vm852, %v848
          %854 = vst.msk [vmem:[#allocation2 + $0x4] sm:$0xf] %vm852, %v849
          %855 = vrot.lane.b32.xlu0 %v848, 96
          %v856 = vpop.permute.xlu0 %855
          %857 = vrot.lane.b32.xlu0 %v849, 96
          %v858 = vpop.permute.xlu0 %857
          %861 = vst.msk [vmem:[#allocation3] sm:$0xf] %vm852, %v856
          %862 = vst.msk [vmem:[#allocation3 + $0x4] sm:$0xf] %vm852, %v858
          %863 = vrot.lane.b32.xlu0 %v848, 120
          %v864 = vpop.permute.xlu0 %863
          %865 = vrot.lane.b32.xlu0 %v849, 120
          %v866 = vpop.permute.xlu0 %865
          %s869 = scalar_lea.vmem [#allocation2], 8
          %870 = vst.msk [vmem:[%s869] sm:$0xf] %vm852, %v864
          %871 = vst.msk [vmem:[%s869 + $0x4] sm:$0xf] %vm852, %v866
          %872 = vrot.lane.b32.xlu0 %v848, 88
          %v873 = vpop.permute.xlu0 %872
          %874 = vrot.lane.b32.xlu0 %v849, 88
          %v875 = vpop.permute.xlu0 %874
          %s878 = scalar_lea.vmem [#allocation3], 8
          %879 = vst.msk [vmem:[%s878] sm:$0xf] %vm852, %v873
          %880 = vst.msk [vmem:[%s878 + $0x4] sm:$0xf] %vm852, %v875
          %881 = vrot.lane.b32.xlu0 %v848, 112
          %v882 = vpop.permute.xlu0 %881
          %883 = vrot.lane.b32.xlu0 %v849, 112
          %v884 = vpop.permute.xlu0 %883
          %s887 = scalar_lea.vmem [#allocation2], 16
          %888 = vst.msk [vmem:[%s887] sm:$0xf] %vm852, %v882
          %889 = vst.msk [vmem:[%s887 + $0x4] sm:$0xf] %vm852, %v884
          %890 = vrot.lane.b32.xlu0 %v848, 80
          %v891 = vpop.permute.xlu0 %890
          %892 = vrot.lane.b32.xlu0 %v849, 80
          %v893 = vpop.permute.xlu0 %892
          %s896 = scalar_lea.vmem [#allocation3], 16
          %897 = vst.msk [vmem:[%s896] sm:$0xf] %vm852, %v891
          %898 = vst.msk [vmem:[%s896 + $0x4] sm:$0xf] %vm852, %v893
          %899 = vrot.lane.b32.xlu0 %v848, 104
          %v900 = vpop.permute.xlu0 %899
          %901 = vrot.lane.b32.xlu0 %v849, 104
          %v902 = vpop.permute.xlu0 %901
          %s905 = scalar_lea.vmem [#allocation2], 24
          %906 = vst.msk [vmem:[%s905] sm:$0xf] %vm852, %v900
          %907 = vst.msk [vmem:[%s905 + $0x4] sm:$0xf] %vm852, %v902
          %908 = vrot.lane.b32.xlu0 %v848, 72
          %v909 = vpop.permute.xlu0 %908
          %910 = vrot.lane.b32.xlu0 %v849, 72
          %v911 = vpop.permute.xlu0 %910
          %s914 = scalar_lea.vmem [#allocation3], 24
          %915 = vst.msk [vmem:[%s914] sm:$0xf] %vm852, %v909
          %916 = vst.msk [vmem:[%s914 + $0x4] sm:$0xf] %vm852, %v911
        $region124: #{tpu_custom_call.1} parent=87 // pred_fallthru
          _
        %v917 = vld [vmem:[%s618] sm:$0xff]
        %v918 = vld [vmem:[#allocation9] sm:$0x1]
        %v919 = vld [vmem:[#allocation10] sm:$0x1]
        %vm920 = vcmask 261120
        %v921 = vsel %vm920, %v917, 0.0
        %922 = vadd.xlane.f32.xlu0 %v921
        %v923 = vpop.xlane.xlu0 %922
        %v924 = vrcp.pop 32.0
        %v925 = vmul.f32 %v923, %v924
        %v926 = vmul.f32 %v917, %v917
        %v927 = vsel %vm920, %v926, 0.0
        %928 = vadd.xlane.f32.xlu0 %v927
        %v929 = vpop.xlane.xlu0 %928
        %v930 = vmul.f32 %v929, %v924
        %v931 = vmul.f32 %v925, %v925
        %v932 = vsub.f32 %v930, %v931
        %v933 = vsub.f32 %v917, %v925
        %v934 = vadd.f32 %v932, 1e-06
        %v935 = vrsqrt.pop %v934
        %v936 = vmul.f32 %v933, %v935
        %v938 = vlaneseq
        %v939 = vshrl.u32 %v938, 7
        %v940 = vsub.s32 0, %v939
        %v941 = vrot.slane %v918, %v940
        %v943 = vmul.f32 %v936, %v941
        %v945 = vlaneseq
        %v946 = vshrl.u32 %v945, 7
        %v947 = vsub.s32 0, %v946
        %v948 = vrot.slane %v919, %v947
        %v950 = vadd.f32 %v943, %v948
        %v951 = vpack.c.bf16 %v950, %v950
        %v952 = vld [vmem:[%s5] sm:$0xf]
        %v953 = vld [vmem:[%s5 + $0x4] sm:$0xf]
        %v954 = vld [vmem:[%s5 + $0x8] sm:$0xf]
        %v955 = vld [vmem:[%s5 + $0xc] sm:$0xf]
        %v956 = vld [vmem:[#allocation12] sm:$0x1]
        %v958 = vlaneseq
        %v959 = vshrl.u32 %v958, 7
        %v960 = vsub.s32 0, %v959
        %v961 = vrot.slane %v956, %v960
        %v967 = vunpack.c.l.b16 %v952
        %v968 = vunpack.c.l.b16 %v953
        %v969 = vunpack.c.l.b16 %v954
        %v970 = vunpack.c.l.b16 %v955
        %v971 = vpack.c.b16 %v968, %v967
        %v972 = vpack.c.b16 %v970, %v969
        %v976 = vsel %vm920, %v951, 0
        %978 = vmatprep.subr.bf16.mxu0 0
        %979 = vmatpush1.bf16.msra.mxu0 0
        %980 = vmatprep.subr.bf16.mxu0 0
        %981 = vmatpush1.bf16.msra.mxu0 0
        %982 = vmatprep.subr.bf16.mxu0 0
        %983 = vmatpush1.bf16.msra.mxu0 0
        %984 = vmatprep.subr.bf16.mxu0 0
        %985 = vmatpush1.bf16.msra.mxu0 0
        %986 = vmatprep.subr.bf16.mxu0 0
        %987 = vmatpush1.bf16.msra.mxu0 0
        %988 = vmatprep.subr.bf16.mxu0 0
        %989 = vmatpush1.bf16.msra.mxu0 0
        %990 = vmatprep.subr.bf16.mxu0 0
        %991 = vmatpush1.bf16.msra.mxu0 %v972
        %992 = vmatprep.subr.bf16.mxu0 0
        %993 = vmatpush1.bf16.msra.mxu0 %v971
        %994 = vmatprep.subr.bf16.mxu0 0
        %995 = vmatpush2.bf16.msra.mxu0 0
        %996 = vmatprep.subr.bf16.mxu0 0
        %997 = vmatpush2.bf16.msra.mxu0 0
        %998 = vmatprep.subr.bf16.mxu0 0
        %999 = vmatpush2.bf16.msra.mxu0 0
        %1000 = vmatprep.subr.bf16.mxu0 0
        %1001 = vmatpush2.bf16.msra.mxu0 0
        %1002 = vmatprep.subr.bf16.mxu0 0
        %1003 = vmatpush2.bf16.msra.mxu0 0
        %1004 = vmatprep.subr.bf16.mxu0 0
        %1005 = vmatpush2.bf16.msra.mxu0 0
        %1006 = vmatprep.subr.bf16.mxu0 0
        %1007 = vmatpush2.bf16.msra.mxu0 0
        %1008 = vmatprep.subr.bf16.mxu0 0
        %1009 = vmatpush2.bf16.msra.mxu0 0
        %1010 = vmatprep.mubr.bf16.mxu0 0
        %1011 = vmatmul.mubr.bf16.gmra.mxu0 %v976
        %v1012 = vpop.f32.mrf.mxu0
        %v1013 = vadd.f32 %v961, %v1012
        %v1014 = vpop.f32.mrf.mxu0
        %v1015 = vpop.f32.mrf.mxu0
        %v1016 = vpop.f32.mrf.mxu0
        %1017 = vdwg.mxu0
        %v1018 = vpack.c.bf16 %v1013, %v1013
        %1020 = vrot.lane.b32.xlu0 %v1018, 120
        %v1021 = vpop.permute.xlu0 %1020
        %1022 = vrot.lane.b32.xlu0 %v1018, 112
        %v1023 = vpop.permute.xlu0 %1022
        %1024 = vrot.lane.b32.xlu0 %v1018, 104
        %v1025 = vpop.permute.xlu0 %1024
        %v1026 = vld [vmem:[#allocation2] sm:$0xf]
        %v1027 = vld [vmem:[#allocation2 + $0x4] sm:$0xf]
        %v1028 = vld [vmem:[#allocation2 + $0x8] sm:$0xf]
        %v1029 = vld [vmem:[#allocation2 + $0xc] sm:$0xf]
        %v1030 = vld [vmem:[#allocation2 + $0x10] sm:$0xf]
        %v1031 = vld [vmem:[#allocation2 + $0x14] sm:$0xf]
        %v1032 = vld [vmem:[#allocation2 + $0x18] sm:$0xf]
        %v1033 = vld [vmem:[#allocation2 + $0x1c] sm:$0xf]
        %v1034 = vld [vmem:[%s626] sm:$0x1]
        %v1036 = vlaneseq
        %v1037 = vshrl.u32 %v1036, 7
        %v1038 = vsub.s32 0, %v1037
        %v1039 = vrot.slane %v1034, %v1038
        %v1043 = vunpack.c.l.b16 %v1026
        %v1044 = vunpack.c.l.b16 %v1027
        %v1045 = vpack.c.b16 %v1044, %v1043
        %vm1046 = vcmask 64512
        %v1048 = vsel %vm1046, %v1018, 0
        %v1051 = vsel %vm1046, %v1045, 0
        %1053 = vmatprep.subr.bf16.mxu0 0
        %1054 = vmatpush1.bf16.xpose.msra.mxu0 0
        %1055 = vmatprep.subr.bf16.mxu0 0
        %1056 = vmatpush1.bf16.xpose.msra.mxu0 0
        %1057 = vmatprep.subr.bf16.mxu0 0
        %1058 = vmatpush1.bf16.xpose.msra.mxu0 0
        %1059 = vmatprep.subr.bf16.mxu0 0
        %1060 = vmatpush1.bf16.xpose.msra.mxu0 0
        %1061 = vmatprep.subr.bf16.mxu0 0
        %1062 = vmatpush1.bf16.xpose.msra.mxu0 0
        %1063 = vmatprep.subr.bf16.mxu0 0
        %1064 = vmatpush1.bf16.xpose.msra.mxu0 0
        %1065 = vmatprep.subr.bf16.mxu0 0
        %1066 = vmatpush1.bf16.xpose.msra.mxu0 0
        %1067 = vmatprep.subr.bf16.mxu0 0
        %1068 = vmatpush1.bf16.xpose.msra.mxu0 %v1051
        %1069 = vmatprep.subr.bf16.mxu0 0
        %1070 = vmatpush2.bf16.xpose.msra.mxu0 0
        %1071 = vmatprep.subr.bf16.mxu0 0
        %1072 = vmatpush2.bf16.xpose.msra.mxu0 0
        %1073 = vmatprep.subr.bf16.mxu0 0
        %1074 = vmatpush2.bf16.xpose.msra.mxu0 0
        %1075 = vmatprep.subr.bf16.mxu0 0
        %1076 = vmatpush2.bf16.xpose.msra.mxu0 0
        %1077 = vmatprep.subr.bf16.mxu0 0
        %1078 = vmatpush2.bf16.xpose.msra.mxu0 0
        %1079 = vmatprep.subr.bf16.mxu0 0
        %1080 = vmatpush2.bf16.xpose.msra.mxu0 0
        %1081 = vmatprep.subr.bf16.mxu0 0
        %1082 = vmatpush2.bf16.xpose.msra.mxu0 0
        %1083 = vmatprep.subr.bf16.mxu0 0
        %1084 = vmatpush2.bf16.xpose.msra.mxu0 0
        %1085 = vmatprep.mubr.bf16.mxu0 0
        %1086 = vmatmul.mubr.bf16.gmra.mxu0 %v1048
        %v1087 = vpop.f32.mrf.mxu0
        %v1088 = vadd.f32 %v1039, %v1087
        %v1089 = vpop.f32.mrf.mxu0
        %v1090 = vpop.f32.mrf.mxu0
        %v1091 = vpop.f32.mrf.mxu0
        %1092 = vdwg.mxu0
        %v1095 = vunpack.c.l.b16 %v1028
        %v1096 = vunpack.c.l.b16 %v1029
        %v1097 = vpack.c.b16 %v1096, %v1095
        %v1099 = vsel %vm1046, %v1021, 0
        %v1102 = vsel %vm1046, %v1097, 0
        %1104 = vmatprep.subr.bf16.mxu0 0
        %1105 = vmatpush1.bf16.xpose.msra.mxu0 0
        %1106 = vmatprep.subr.bf16.mxu0 0
        %1107 = vmatpush1.bf16.xpose.msra.mxu0 0
        %1108 = vmatprep.subr.bf16.mxu0 0
        %1109 = vmatpush1.bf16.xpose.msra.mxu0 0
        %1110 = vmatprep.subr.bf16.mxu0 0
        %1111 = vmatpush1.bf16.xpose.msra.mxu0 0
        %1112 = vmatprep.subr.bf16.mxu0 0
        %1113 = vmatpush1.bf16.xpose.msra.mxu0 0
        %1114 = vmatprep.subr.bf16.mxu0 0
        %1115 = vmatpush1.bf16.xpose.msra.mxu0 0
        %1116 = vmatprep.subr.bf16.mxu0 0
        %1117 = vmatpush1.bf16.xpose.msra.mxu0 0
        %1118 = vmatprep.subr.bf16.mxu0 0
        %1119 = vmatpush1.bf16.xpose.msra.mxu0 %v1102
        %1120 = vmatprep.subr.bf16.mxu0 0
        %1121 = vmatpush2.bf16.xpose.msra.mxu0 0
        %1122 = vmatprep.subr.bf16.mxu0 0
        %1123 = vmatpush2.bf16.xpose.msra.mxu0 0
        %1124 = vmatprep.subr.bf16.mxu0 0
        %1125 = vmatpush2.bf16.xpose.msra.mxu0 0
        %1126 = vmatprep.subr.bf16.mxu0 0
        %1127 = vmatpush2.bf16.xpose.msra.mxu0 0
        %1128 = vmatprep.subr.bf16.mxu0 0
        %1129 = vmatpush2.bf16.xpose.msra.mxu0 0
        %1130 = vmatprep.subr.bf16.mxu0 0
        %1131 = vmatpush2.bf16.xpose.msra.mxu0 0
        %1132 = vmatprep.subr.bf16.mxu0 0
        %1133 = vmatpush2.bf16.xpose.msra.mxu0 0
        %1134 = vmatprep.subr.bf16.mxu0 0
        %1135 = vmatpush2.bf16.xpose.msra.mxu0 0
        %1136 = vmatprep.mubr.bf16.mxu0 0
        %1137 = vmatmul.mubr.bf16.gmra.mxu0 %v1099
        %v1138 = vpop.f32.mrf.mxu0
        %v1139 = vadd.f32 %v1039, %v1138
        %v1140 = vpop.f32.mrf.mxu0
        %v1141 = vpop.f32.mrf.mxu0
        %v1142 = vpop.f32.mrf.mxu0
        %1143 = vdwg.mxu0
        %v1146 = vunpack.c.l.b16 %v1030
        %v1147 = vunpack.c.l.b16 %v1031
        %v1148 = vpack.c.b16 %v1147, %v1146
        %v1150 = vsel %vm1046, %v1023, 0
        %v1153 = vsel %vm1046, %v1148, 0
        %1155 = vmatprep.subr.bf16.mxu0 0
        %1156 = vmatpush1.bf16.xpose.msra.mxu0 0
        %1157 = vmatprep.subr.bf16.mxu0 0
        %1158 = vmatpush1.bf16.xpose.msra.mxu0 0
        %1159 = vmatprep.subr.bf16.mxu0 0
        %1160 = vmatpush1.bf16.xpose.msra.mxu0 0
        %1161 = vmatprep.subr.bf16.mxu0 0
        %1162 = vmatpush1.bf16.xpose.msra.mxu0 0
        %1163 = vmatprep.subr.bf16.mxu0 0
        %1164 = vmatpush1.bf16.xpose.msra.mxu0 0
        %1165 = vmatprep.subr.bf16.mxu0 0
        %1166 = vmatpush1.bf16.xpose.msra.mxu0 0
        %1167 = vmatprep.subr.bf16.mxu0 0
        %1168 = vmatpush1.bf16.xpose.msra.mxu0 0
        %1169 = vmatprep.subr.bf16.mxu0 0
        %1170 = vmatpush1.bf16.xpose.msra.mxu0 %v1153
        %1171 = vmatprep.subr.bf16.mxu0 0
        %1172 = vmatpush2.bf16.xpose.msra.mxu0 0
        %1173 = vmatprep.subr.bf16.mxu0 0
        %1174 = vmatpush2.bf16.xpose.msra.mxu0 0
        %1175 = vmatprep.subr.bf16.mxu0 0
        %1176 = vmatpush2.bf16.xpose.msra.mxu0 0
        %1177 = vmatprep.subr.bf16.mxu0 0
        %1178 = vmatpush2.bf16.xpose.msra.mxu0 0
        %1179 = vmatprep.subr.bf16.mxu0 0
        %1180 = vmatpush2.bf16.xpose.msra.mxu0 0
        %1181 = vmatprep.subr.bf16.mxu0 0
        %1182 = vmatpush2.bf16.xpose.msra.mxu0 0
        %1183 = vmatprep.subr.bf16.mxu0 0
        %1184 = vmatpush2.bf16.xpose.msra.mxu0 0
        %1185 = vmatprep.subr.bf16.mxu0 0
        %1186 = vmatpush2.bf16.xpose.msra.mxu0 0
        %1187 = vmatprep.mubr.bf16.mxu0 0
        %1188 = vmatmul.mubr.bf16.gmra.mxu0 %v1150
        %v1189 = vpop.f32.mrf.mxu0
        %v1190 = vadd.f32 %v1039, %v1189
        %v1191 = vpop.f32.mrf.mxu0
        %v1192 = vpop.f32.mrf.mxu0
        %v1193 = vpop.f32.mrf.mxu0
        %1194 = vdwg.mxu0
        %v1197 = vunpack.c.l.b16 %v1032
        %v1198 = vunpack.c.l.b16 %v1033
        %v1199 = vpack.c.b16 %v1198, %v1197
        %v1201 = vsel %vm1046, %v1025, 0
        %v1204 = vsel %vm1046, %v1199, 0
        %1206 = vmatprep.subr.bf16.mxu0 0
        %1207 = vmatpush1.bf16.xpose.msra.mxu0 0
        %1208 = vmatprep.subr.bf16.mxu0 0
        %1209 = vmatpush1.bf16.xpose.msra.mxu0 0
        %1210 = vmatprep.subr.bf16.mxu0 0
        %1211 = vmatpush1.bf16.xpose.msra.mxu0 0
        %1212 = vmatprep.subr.bf16.mxu0 0
        %1213 = vmatpush1.bf16.xpose.msra.mxu0 0
        %1214 = vmatprep.subr.bf16.mxu0 0
        %1215 = vmatpush1.bf16.xpose.msra.mxu0 0
        %1216 = vmatprep.subr.bf16.mxu0 0
        %1217 = vmatpush1.bf16.xpose.msra.mxu0 0
        %1218 = vmatprep.subr.bf16.mxu0 0
        %1219 = vmatpush1.bf16.xpose.msra.mxu0 0
        %1220 = vmatprep.subr.bf16.mxu0 0
        %1221 = vmatpush1.bf16.xpose.msra.mxu0 %v1204
        %1222 = vmatprep.subr.bf16.mxu0 0
        %1223 = vmatpush2.bf16.xpose.msra.mxu0 0
        %1224 = vmatprep.subr.bf16.mxu0 0
        %1225 = vmatpush2.bf16.xpose.msra.mxu0 0
        %1226 = vmatprep.subr.bf16.mxu0 0
        %1227 = vmatpush2.bf16.xpose.msra.mxu0 0
        %1228 = vmatprep.subr.bf16.mxu0 0
        %1229 = vmatpush2.bf16.xpose.msra.mxu0 0
        %1230 = vmatprep.subr.bf16.mxu0 0
        %1231 = vmatpush2.bf16.xpose.msra.mxu0 0
        %1232 = vmatprep.subr.bf16.mxu0 0
        %1233 = vmatpush2.bf16.xpose.msra.mxu0 0
        %1234 = vmatprep.subr.bf16.mxu0 0
        %1235 = vmatpush2.bf16.xpose.msra.mxu0 0
        %1236 = vmatprep.subr.bf16.mxu0 0
        %1237 = vmatpush2.bf16.xpose.msra.mxu0 0
        %1238 = vmatprep.mubr.bf16.mxu0 0
        %1239 = vmatmul.mubr.bf16.gmra.mxu0 %v1201
        %v1240 = vpop.f32.mrf.mxu0
        %v1241 = vadd.f32 %v1039, %v1240
        %v1242 = vpop.f32.mrf.mxu0
        %v1243 = vpop.f32.mrf.mxu0
        %v1244 = vpop.f32.mrf.mxu0
        %1245 = vdwg.mxu0
        %vm1246 = vcmask 130048
        %v1247 = vsel %vm1246, %v1088, -inf
        %1248 = vmax.xlane.f32.xlu0 %v1247
        %v1249 = vpop.xlane.xlu0 %1248
        %v1250 = vsel %vm1246, %v1139, -inf
        %1251 = vmax.xlane.f32.xlu0 %v1250
        %v1252 = vpop.xlane.xlu0 %1251
        %v1253 = vsel %vm1246, %v1190, -inf
        %1254 = vmax.xlane.f32.xlu0 %v1253
        %v1255 = vpop.xlane.xlu0 %1254
        %v1256 = vsel %vm1246, %v1241, -inf
        %1257 = vmax.xlane.f32.xlu0 %v1256
        %v1258 = vpop.xlane.xlu0 %1257
        %v1259 = vsub.f32 %v1088, %v1249
        %v1260 = vsub.f32 %v1139, %v1252
        %v1261 = vsub.f32 %v1190, %v1255
        %v1262 = vsub.f32 %v1241, %v1258
        %v1263 = vpack.c.bf16 %v1259, %v1259
        %v1264 = vpack.c.bf16 %v1260, %v1260
        %v1265 = vpack.c.bf16 %v1261, %v1261
        %v1266 = vpack.c.bf16 %v1262, %v1262
        %v1268 = vmul.bf16 %v1263, 1069105081
        %v1269 = vpow.bf16.pop %v1268
        %v1271 = vmul.bf16 %v1264, 1069105081
        %v1272 = vpow.bf16.pop %v1271
        %v1274 = vmul.bf16 %v1265, 1069105081
        %v1275 = vpow.bf16.pop %v1274
        %v1277 = vmul.bf16 %v1266, 1069105081
        %v1278 = vpow.bf16.pop %v1277
        %v1279 = vunpack.c.l.bf16 %v1269
        %v1280 = vunpack.c.l.bf16 %v1272
        %v1281 = vunpack.c.l.bf16 %v1275
        %v1282 = vunpack.c.l.bf16 %v1278
        %v1283 = vsel %vm1246, %v1279, 0.0
        %1284 = vadd.xlane.f32.xlu0 %v1283
        %v1285 = vpop.xlane.xlu0 %1284
        %v1286 = vsel %vm1246, %v1280, 0.0
        %1287 = vadd.xlane.f32.xlu0 %v1286
        %v1288 = vpop.xlane.xlu0 %1287
        %v1289 = vsel %vm1246, %v1281, 0.0
        %1290 = vadd.xlane.f32.xlu0 %v1289
        %v1291 = vpop.xlane.xlu0 %1290
        %v1292 = vsel %vm1246, %v1282, 0.0
        %1293 = vadd.xlane.f32.xlu0 %v1292
        %v1294 = vpop.xlane.xlu0 %1293
        %v1295 = vrcp.pop %v1285
        %v1296 = vrcp.pop %v1288
        %v1297 = vrcp.pop %v1291
        %v1298 = vrcp.pop %v1294
        %v1299 = vpack.c.bf16 %v1295, %v1295
        %v1300 = vpack.c.bf16 %v1296, %v1296
        %v1301 = vpack.c.bf16 %v1297, %v1297
        %v1302 = vpack.c.bf16 %v1298, %v1298
        %v1303 = vmul.bf16 %v1269, %v1299
        %v1304 = vmul.bf16 %v1272, %v1300
        %v1305 = vmul.bf16 %v1275, %v1301
        %v1306 = vmul.bf16 %v1278, %v1302
        %v1307 = vld [vmem:[#allocation3] sm:$0xf]
        %v1308 = vld [vmem:[#allocation3 + $0x4] sm:$0xf]
        %v1309 = vld [vmem:[#allocation3 + $0x8] sm:$0xf]
        %v1310 = vld [vmem:[#allocation3 + $0xc] sm:$0xf]
        %v1311 = vld [vmem:[#allocation3 + $0x10] sm:$0xf]
        %v1312 = vld [vmem:[#allocation3 + $0x14] sm:$0xf]
        %v1313 = vld [vmem:[#allocation3 + $0x18] sm:$0xf]
        %v1314 = vld [vmem:[#allocation3 + $0x1c] sm:$0xf]
        %v1317 = vunpack.c.l.b16 %v1307
        %v1318 = vunpack.c.l.b16 %v1308
        %v1319 = vpack.c.b16 %v1318, %v1317
        %v1322 = vsel %vm1246, %v1303, 0
        %1324 = vmatprep.subr.bf16.mxu0 0
        %1325 = vmatpush1.bf16.msra.mxu0 0
        %1326 = vmatprep.subr.bf16.mxu0 0
        %1327 = vmatpush1.bf16.msra.mxu0 0
        %1328 = vmatprep.subr.bf16.mxu0 0
        %1329 = vmatpush1.bf16.msra.mxu0 0
        %1330 = vmatprep.subr.bf16.mxu0 0
        %1331 = vmatpush1.bf16.msra.mxu0 0
        %1332 = vmatprep.subr.bf16.mxu0 0
        %1333 = vmatpush1.bf16.msra.mxu0 0
        %1334 = vmatprep.subr.bf16.mxu0 0
        %1335 = vmatpush1.bf16.msra.mxu0 0
        %1336 = vmatprep.subr.bf16.mxu0 0
        %1337 = vmatpush1.bf16.msra.mxu0 0
        %1338 = vmatprep.subr.bf16.mxu0 0
        %1339 = vmatpush1.bf16.msra.mxu0 %v1319
        %1340 = vmatprep.subr.bf16.mxu0 0
        %1341 = vmatpush2.bf16.msra.mxu0 0
        %1342 = vmatprep.subr.bf16.mxu0 0
        %1343 = vmatpush2.bf16.msra.mxu0 0
        %1344 = vmatprep.subr.bf16.mxu0 0
        %1345 = vmatpush2.bf16.msra.mxu0 0
        %1346 = vmatprep.subr.bf16.mxu0 0
        %1347 = vmatpush2.bf16.msra.mxu0 0
        %1348 = vmatprep.subr.bf16.mxu0 0
        %1349 = vmatpush2.bf16.msra.mxu0 0
        %1350 = vmatprep.subr.bf16.mxu0 0
        %1351 = vmatpush2.bf16.msra.mxu0 0
        %1352 = vmatprep.subr.bf16.mxu0 0
        %1353 = vmatpush2.bf16.msra.mxu0 0
        %1354 = vmatprep.subr.bf16.mxu0 0
        %1355 = vmatpush2.bf16.msra.mxu0 0
        %1356 = vmatprep.mubr.bf16.mxu0 0
        %1357 = vmatmul.mubr.bf16.gmra.mxu0 %v1322
        %v1358 = vpop.f32.mrf.mxu0
        %v1359 = vadd.f32 0.0, %v1358
        %v1360 = vpop.f32.mrf.mxu0
        %v1361 = vpop.f32.mrf.mxu0
        %v1362 = vpop.f32.mrf.mxu0
        %1363 = vdwg.mxu0
        %v1366 = vunpack.c.l.b16 %v1309
        %v1367 = vunpack.c.l.b16 %v1310
        %v1368 = vpack.c.b16 %v1367, %v1366
        %v1371 = vsel %vm1246, %v1304, 0
        %1373 = vmatprep.subr.bf16.mxu0 0
        %1374 = vmatpush1.bf16.msra.mxu0 0
        %1375 = vmatprep.subr.bf16.mxu0 0
        %1376 = vmatpush1.bf16.msra.mxu0 0
        %1377 = vmatprep.subr.bf16.mxu0 0
        %1378 = vmatpush1.bf16.msra.mxu0 0
        %1379 = vmatprep.subr.bf16.mxu0 0
        %1380 = vmatpush1.bf16.msra.mxu0 0
        %1381 = vmatprep.subr.bf16.mxu0 0
        %1382 = vmatpush1.bf16.msra.mxu0 0
        %1383 = vmatprep.subr.bf16.mxu0 0
        %1384 = vmatpush1.bf16.msra.mxu0 0
        %1385 = vmatprep.subr.bf16.mxu0 0
        %1386 = vmatpush1.bf16.msra.mxu0 0
        %1387 = vmatprep.subr.bf16.mxu0 0
        %1388 = vmatpush1.bf16.msra.mxu0 %v1368
        %1389 = vmatprep.subr.bf16.mxu0 0
        %1390 = vmatpush2.bf16.msra.mxu0 0
        %1391 = vmatprep.subr.bf16.mxu0 0
        %1392 = vmatpush2.bf16.msra.mxu0 0
        %1393 = vmatprep.subr.bf16.mxu0 0
        %1394 = vmatpush2.bf16.msra.mxu0 0
        %1395 = vmatprep.subr.bf16.mxu0 0
        %1396 = vmatpush2.bf16.msra.mxu0 0
        %1397 = vmatprep.subr.bf16.mxu0 0
        %1398 = vmatpush2.bf16.msra.mxu0 0
        %1399 = vmatprep.subr.bf16.mxu0 0
        %1400 = vmatpush2.bf16.msra.mxu0 0
        %1401 = vmatprep.subr.bf16.mxu0 0
        %1402 = vmatpush2.bf16.msra.mxu0 0
        %1403 = vmatprep.subr.bf16.mxu0 0
        %1404 = vmatpush2.bf16.msra.mxu0 0
        %1405 = vmatprep.mubr.bf16.mxu0 0
        %1406 = vmatmul.mubr.bf16.gmra.mxu0 %v1371
        %v1407 = vpop.f32.mrf.mxu0
        %v1408 = vadd.f32 0.0, %v1407
        %v1409 = vpop.f32.mrf.mxu0
        %v1410 = vpop.f32.mrf.mxu0
        %v1411 = vpop.f32.mrf.mxu0
        %1412 = vdwg.mxu0
        %v1415 = vunpack.c.l.b16 %v1311
        %v1416 = vunpack.c.l.b16 %v1312
        %v1417 = vpack.c.b16 %v1416, %v1415
        %v1420 = vsel %vm1246, %v1305, 0
        %1422 = vmatprep.subr.bf16.mxu0 0
        %1423 = vmatpush1.bf16.msra.mxu0 0
        %1424 = vmatprep.subr.bf16.mxu0 0
        %1425 = vmatpush1.bf16.msra.mxu0 0
        %1426 = vmatprep.subr.bf16.mxu0 0
        %1427 = vmatpush1.bf16.msra.mxu0 0
        %1428 = vmatprep.subr.bf16.mxu0 0
        %1429 = vmatpush1.bf16.msra.mxu0 0
        %1430 = vmatprep.subr.bf16.mxu0 0
        %1431 = vmatpush1.bf16.msra.mxu0 0
        %1432 = vmatprep.subr.bf16.mxu0 0
        %1433 = vmatpush1.bf16.msra.mxu0 0
        %1434 = vmatprep.subr.bf16.mxu0 0
        %1435 = vmatpush1.bf16.msra.mxu0 0
        %1436 = vmatprep.subr.bf16.mxu0 0
        %1437 = vmatpush1.bf16.msra.mxu0 %v1417
        %1438 = vmatprep.subr.bf16.mxu0 0
        %1439 = vmatpush2.bf16.msra.mxu0 0
        %1440 = vmatprep.subr.bf16.mxu0 0
        %1441 = vmatpush2.bf16.msra.mxu0 0
        %1442 = vmatprep.subr.bf16.mxu0 0
        %1443 = vmatpush2.bf16.msra.mxu0 0
        %1444 = vmatprep.subr.bf16.mxu0 0
        %1445 = vmatpush2.bf16.msra.mxu0 0
        %1446 = vmatprep.subr.bf16.mxu0 0
        %1447 = vmatpush2.bf16.msra.mxu0 0
        %1448 = vmatprep.subr.bf16.mxu0 0
        %1449 = vmatpush2.bf16.msra.mxu0 0
        %1450 = vmatprep.subr.bf16.mxu0 0
        %1451 = vmatpush2.bf16.msra.mxu0 0
        %1452 = vmatprep.subr.bf16.mxu0 0
        %1453 = vmatpush2.bf16.msra.mxu0 0
        %1454 = vmatprep.mubr.bf16.mxu0 0
        %1455 = vmatmul.mubr.bf16.gmra.mxu0 %v1420
        %v1456 = vpop.f32.mrf.mxu0
        %v1457 = vadd.f32 0.0, %v1456
        %v1458 = vpop.f32.mrf.mxu0
        %v1459 = vpop.f32.mrf.mxu0
        %v1460 = vpop.f32.mrf.mxu0
        %1461 = vdwg.mxu0
        %v1464 = vunpack.c.l.b16 %v1313
        %v1465 = vunpack.c.l.b16 %v1314
        %v1466 = vpack.c.b16 %v1465, %v1464
        %v1469 = vsel %vm1246, %v1306, 0
        %1471 = vmatprep.subr.bf16.mxu0 0
        %1472 = vmatpush1.bf16.msra.mxu0 0
        %1473 = vmatprep.subr.bf16.mxu0 0
        %1474 = vmatpush1.bf16.msra.mxu0 0
        %1475 = vmatprep.subr.bf16.mxu0 0
        %1476 = vmatpush1.bf16.msra.mxu0 0
        %1477 = vmatprep.subr.bf16.mxu0 0
        %1478 = vmatpush1.bf16.msra.mxu0 0
        %1479 = vmatprep.subr.bf16.mxu0 0
        %1480 = vmatpush1.bf16.msra.mxu0 0
        %1481 = vmatprep.subr.bf16.mxu0 0
        %1482 = vmatpush1.bf16.msra.mxu0 0
        %1483 = vmatprep.subr.bf16.mxu0 0
        %1484 = vmatpush1.bf16.msra.mxu0 0
        %1485 = vmatprep.subr.bf16.mxu0 0
        %1486 = vmatpush1.bf16.msra.mxu0 %v1466
        %1487 = vmatprep.subr.bf16.mxu0 0
        %1488 = vmatpush2.bf16.msra.mxu0 0
        %1489 = vmatprep.subr.bf16.mxu0 0
        %1490 = vmatpush2.bf16.msra.mxu0 0
        %1491 = vmatprep.subr.bf16.mxu0 0
        %1492 = vmatpush2.bf16.msra.mxu0 0
        %1493 = vmatprep.subr.bf16.mxu0 0
        %1494 = vmatpush2.bf16.msra.mxu0 0
        %1495 = vmatprep.subr.bf16.mxu0 0
        %1496 = vmatpush2.bf16.msra.mxu0 0
        %1497 = vmatprep.subr.bf16.mxu0 0
        %1498 = vmatpush2.bf16.msra.mxu0 0
        %1499 = vmatprep.subr.bf16.mxu0 0
        %1500 = vmatpush2.bf16.msra.mxu0 0
        %1501 = vmatprep.subr.bf16.mxu0 0
        %1502 = vmatpush2.bf16.msra.mxu0 0
        %1503 = vmatprep.mubr.bf16.mxu0 0
        %1504 = vmatmul.mubr.bf16.gmra.mxu0 %v1469
        %v1505 = vpop.f32.mrf.mxu0
        %v1506 = vadd.f32 0.0, %v1505
        %v1507 = vpop.f32.mrf.mxu0
        %v1508 = vpop.f32.mrf.mxu0
        %v1509 = vpop.f32.mrf.mxu0
        %1510 = vdwg.mxu0
        %v1511 = vpack.c.bf16 %v1359, %v1359
        %v1512 = vpack.c.bf16 %v1408, %v1408
        %v1513 = vpack.c.bf16 %v1457, %v1457
        %v1514 = vpack.c.bf16 %v1506, %v1506
        %1516 = vrot.lane.b32.xlu0 %v1512, 8
        %v1517 = vpop.permute.xlu0 %1516
        %1519 = vrot.lane.b32.xlu0 %v1513, 16
        %v1520 = vpop.permute.xlu0 %1519
        %1522 = vrot.lane.b32.xlu0 %v1514, 24
        %v1523 = vpop.permute.xlu0 %1522
        %v1526 = vsel %vm1046, %v1511, %v1517
        %v1528 = vsel %vm1246, %v1526, %v1520
        %vm1529 = vcmask 195584
        %v1531 = vsel %vm1529, %v1528, %v1523
        %v1532 = vld [vmem:[%s9] sm:$0xf]
        %v1533 = vld [vmem:[%s9 + $0x4] sm:$0xf]
        %v1534 = vld [vmem:[%s9 + $0x8] sm:$0xf]
        %v1535 = vld [vmem:[%s9 + $0xc] sm:$0xf]
        %v1536 = vld [vmem:[%s10] sm:$0x1]
        %v1538 = vlaneseq
        %v1539 = vshrl.u32 %v1538, 7
        %v1540 = vsub.s32 0, %v1539
        %v1541 = vrot.slane %v1536, %v1540
        %v1547 = vunpack.c.l.b16 %v1532
        %v1548 = vunpack.c.l.b16 %v1533
        %v1549 = vunpack.c.l.b16 %v1534
        %v1550 = vunpack.c.l.b16 %v1535
        %v1551 = vpack.c.b16 %v1548, %v1547
        %v1552 = vpack.c.b16 %v1550, %v1549
        %v1555 = vsel %vm920, %v1531, 0
        %1557 = vmatprep.subr.bf16.mxu0 0
        %1558 = vmatpush1.bf16.msra.mxu0 0
        %1559 = vmatprep.subr.bf16.mxu0 0
        %1560 = vmatpush1.bf16.msra.mxu0 0
        %1561 = vmatprep.subr.bf16.mxu0 0
        %1562 = vmatpush1.bf16.msra.mxu0 0
        %1563 = vmatprep.subr.bf16.mxu0 0
        %1564 = vmatpush1.bf16.msra.mxu0 0
        %1565 = vmatprep.subr.bf16.mxu0 0
        %1566 = vmatpush1.bf16.msra.mxu0 0
        %1567 = vmatprep.subr.bf16.mxu0 0
        %1568 = vmatpush1.bf16.msra.mxu0 0
        %1569 = vmatprep.subr.bf16.mxu0 0
        %1570 = vmatpush1.bf16.msra.mxu0 %v1552
        %1571 = vmatprep.subr.bf16.mxu0 0
        %1572 = vmatpush1.bf16.msra.mxu0 %v1551
        %1573 = vmatprep.subr.bf16.mxu0 0
        %1574 = vmatpush2.bf16.msra.mxu0 0
        %1575 = vmatprep.subr.bf16.mxu0 0
        %1576 = vmatpush2.bf16.msra.mxu0 0
        %1577 = vmatprep.subr.bf16.mxu0 0
        %1578 = vmatpush2.bf16.msra.mxu0 0
        %1579 = vmatprep.subr.bf16.mxu0 0
        %1580 = vmatpush2.bf16.msra.mxu0 0
        %1581 = vmatprep.subr.bf16.mxu0 0
        %1582 = vmatpush2.bf16.msra.mxu0 0
        %1583 = vmatprep.subr.bf16.mxu0 0
        %1584 = vmatpush2.bf16.msra.mxu0 0
        %1585 = vmatprep.subr.bf16.mxu0 0
        %1586 = vmatpush2.bf16.msra.mxu0 0
        %1587 = vmatprep.subr.bf16.mxu0 0
        %1588 = vmatpush2.bf16.msra.mxu0 0
        %1589 = vmatprep.mubr.bf16.mxu0 0
        %1590 = vmatmul.mubr.bf16.gmra.mxu0 %v1555
        %v1591 = vpop.f32.mrf.mxu0
        %v1592 = vadd.f32 %v1541, %v1591
        %v1593 = vpop.f32.mrf.mxu0
        %v1594 = vpop.f32.mrf.mxu0
        %v1595 = vpop.f32.mrf.mxu0
        %1596 = vdwg.mxu0
        %v1597 = vadd.f32 %v1592, %v917
        %v1598 = vld [vmem:[%s11] sm:$0x1]
        %v1599 = vld [vmem:[%s12] sm:$0x1]
        %v1600 = vsel %vm920, %v1597, 0.0
        %1601 = vadd.xlane.f32.xlu0 %v1600
        %v1602 = vpop.xlane.xlu0 %1601
        %v1603 = vmul.f32 %v1602, %v924
        %v1604 = vmul.f32 %v1597, %v1597
        %v1605 = vsel %vm920, %v1604, 0.0
        %1606 = vadd.xlane.f32.xlu0 %v1605
        %v1607 = vpop.xlane.xlu0 %1606
        %v1608 = vmul.f32 %v1607, %v924
        %v1609 = vmul.f32 %v1603, %v1603
        %v1610 = vsub.f32 %v1608, %v1609
        %v1611 = vsub.f32 %v1597, %v1603
        %v1612 = vadd.f32 %v1610, 1e-06
        %v1613 = vrsqrt.pop %v1612
        %v1614 = vmul.f32 %v1611, %v1613
        %v1616 = vlaneseq
        %v1617 = vshrl.u32 %v1616, 7
        %v1618 = vsub.s32 0, %v1617
        %v1619 = vrot.slane %v1598, %v1618
        %v1621 = vmul.f32 %v1614, %v1619
        %v1623 = vlaneseq
        %v1624 = vshrl.u32 %v1623, 7
        %v1625 = vsub.s32 0, %v1624
        %v1626 = vrot.slane %v1599, %v1625
        %v1628 = vadd.f32 %v1621, %v1626
        %v1629 = vpack.c.bf16 %v1628, %v1628
        %v1630 = vld [vmem:[#allocation16] sm:$0xf]
        %v1631 = vld [vmem:[#allocation16 + $0x4] sm:$0xf]
        %v1632 = vld [vmem:[#allocation16 + $0x8] sm:$0xf]
        %v1633 = vld [vmem:[#allocation16 + $0xc] sm:$0xf]
        %v1634 = vld [vmem:[%s14] sm:$0x1]
        %v1636 = vlaneseq
        %v1637 = vshrl.u32 %v1636, 7
        %v1638 = vsub.s32 0, %v1637
        %v1639 = vrot.slane %v1634, %v1638
        %v1645 = vunpack.c.l.b16 %v1630
        %v1646 = vunpack.c.l.b16 %v1631
        %v1647 = vunpack.c.l.b16 %v1632
        %v1648 = vunpack.c.l.b16 %v1633
        %v1649 = vpack.c.b16 %v1646, %v1645
        %v1650 = vpack.c.b16 %v1648, %v1647
        %v1654 = vsel %vm920, %v1629, 0
        %1656 = vmatprep.subr.bf16.mxu0 0
        %1657 = vmatpush1.bf16.msra.mxu0 0
        %1658 = vmatprep.subr.bf16.mxu0 0
        %1659 = vmatpush1.bf16.msra.mxu0 0
        %1660 = vmatprep.subr.bf16.mxu0 0
        %1661 = vmatpush1.bf16.msra.mxu0 0
        %1662 = vmatprep.subr.bf16.mxu0 0
        %1663 = vmatpush1.bf16.msra.mxu0 0
        %1664 = vmatprep.subr.bf16.mxu0 0
        %1665 = vmatpush1.bf16.msra.mxu0 0
        %1666 = vmatprep.subr.bf16.mxu0 0
        %1667 = vmatpush1.bf16.msra.mxu0 0
        %1668 = vmatprep.subr.bf16.mxu0 0
        %1669 = vmatpush1.bf16.msra.mxu0 %v1650
        %1670 = vmatprep.subr.bf16.mxu0 0
        %1671 = vmatpush1.bf16.msra.mxu0 %v1649
        %1672 = vmatprep.subr.bf16.mxu0 0
        %1673 = vmatpush2.bf16.msra.mxu0 0
        %1674 = vmatprep.subr.bf16.mxu0 0
        %1675 = vmatpush2.bf16.msra.mxu0 0
        %1676 = vmatprep.subr.bf16.mxu0 0
        %1677 = vmatpush2.bf16.msra.mxu0 0
        %1678 = vmatprep.subr.bf16.mxu0 0
        %1679 = vmatpush2.bf16.msra.mxu0 0
        %1680 = vmatprep.subr.bf16.mxu0 0
        %1681 = vmatpush2.bf16.msra.mxu0 0
        %1682 = vmatprep.subr.bf16.mxu0 0
        %1683 = vmatpush2.bf16.msra.mxu0 0
        %1684 = vmatprep.subr.bf16.mxu0 0
        %1685 = vmatpush2.bf16.msra.mxu0 0
        %1686 = vmatprep.subr.bf16.mxu0 0
        %1687 = vmatpush2.bf16.msra.mxu0 0
        %1688 = vmatprep.mubr.bf16.mxu0 0
        %1689 = vmatmul.mubr.bf16.gmra.mxu0 %v1654
        %v1690 = vpop.f32.mrf.mxu0
        %v1691 = vadd.f32 %v1639, %v1690
        %v1692 = vpop.f32.mrf.mxu0
        %v1693 = vpop.f32.mrf.mxu0
        %v1694 = vpop.f32.mrf.mxu0
        %1695 = vdwg.mxu0
        %v1696 = vpack.c.bf16 %v1691, %v1691
        %v1697 = vmul.bf16 %v1696, 1056980736
        %v1698 = vmul.bf16 %v1696, 1027030327
        %v1699 = vmul.bf16 %v1698, %v1696
        %v1700 = vmul.bf16 %v1699, %v1696
        %v1701 = vadd.bf16 %v1696, %v1700
        %v1702 = vmul.bf16 %v1701, 1061961548
        %v1703 = vtanh.bf16.pop %v1702
        %v1704 = vadd.bf16 %v1703, 1065369472
        %v1705 = vmul.bf16 %v1697, %v1704
        %v1706 = vld [vmem:[%s15] sm:$0xf]
        %v1707 = vld [vmem:[%s15 + $0x4] sm:$0xf]
        %v1708 = vld [vmem:[%s15 + $0x8] sm:$0xf]
        %v1709 = vld [vmem:[%s15 + $0xc] sm:$0xf]
        %v1710 = vld [vmem:[%s15 + $0x10] sm:$0xf]
        %v1711 = vld [vmem:[%s15 + $0x14] sm:$0xf]
        %v1712 = vld [vmem:[%s15 + $0x18] sm:$0xf]
        %v1713 = vld [vmem:[%s15 + $0x1c] sm:$0xf]
        %v1714 = vld [vmem:[%s16] sm:$0x1]
        %v1716 = vlaneseq
        %v1717 = vshrl.u32 %v1716, 7
        %v1718 = vsub.s32 0, %v1717
        %v1719 = vrot.slane %v1714, %v1718
        %v1729 = vunpack.c.l.b16 %v1706
        %v1730 = vunpack.c.l.b16 %v1707
        %v1731 = vunpack.c.l.b16 %v1708
        %v1732 = vunpack.c.l.b16 %v1709
        %v1733 = vunpack.c.l.b16 %v1710
        %v1734 = vunpack.c.l.b16 %v1711
        %v1735 = vunpack.c.l.b16 %v1712
        %v1736 = vunpack.c.l.b16 %v1713
        %v1737 = vpack.c.b16 %v1730, %v1729
        %v1738 = vpack.c.b16 %v1732, %v1731
        %v1739 = vpack.c.b16 %v1734, %v1733
        %v1740 = vpack.c.b16 %v1736, %v1735
        %vm1745 = vcmask 523264
        %v1747 = vsel %vm1745, %v1705, 0
        %1749 = vmatprep.subr.bf16.mxu0 0
        %1750 = vmatpush1.bf16.msra.mxu0 0
        %1751 = vmatprep.subr.bf16.mxu0 0
        %1752 = vmatpush1.bf16.msra.mxu0 0
        %1753 = vmatprep.subr.bf16.mxu0 0
        %1754 = vmatpush1.bf16.msra.mxu0 0
        %1755 = vmatprep.subr.bf16.mxu0 0
        %1756 = vmatpush1.bf16.msra.mxu0 0
        %1757 = vmatprep.subr.bf16.mxu0 0
        %1758 = vmatpush1.bf16.msra.mxu0 %v1740
        %1759 = vmatprep.subr.bf16.mxu0 0
        %1760 = vmatpush1.bf16.msra.mxu0 %v1739
        %1761 = vmatprep.subr.bf16.mxu0 0
        %1762 = vmatpush1.bf16.msra.mxu0 %v1738
        %1763 = vmatprep.subr.bf16.mxu0 0
        %1764 = vmatpush1.bf16.msra.mxu0 %v1737
        %1765 = vmatprep.subr.bf16.mxu0 0
        %1766 = vmatpush2.bf16.msra.mxu0 0
        %1767 = vmatprep.subr.bf16.mxu0 0
        %1768 = vmatpush2.bf16.msra.mxu0 0
        %1769 = vmatprep.subr.bf16.mxu0 0
        %1770 = vmatpush2.bf16.msra.mxu0 0
        %1771 = vmatprep.subr.bf16.mxu0 0
        %1772 = vmatpush2.bf16.msra.mxu0 0
        %1773 = vmatprep.subr.bf16.mxu0 0
        %1774 = vmatpush2.bf16.msra.mxu0 0
        %1775 = vmatprep.subr.bf16.mxu0 0
        %1776 = vmatpush2.bf16.msra.mxu0 0
        %1777 = vmatprep.subr.bf16.mxu0 0
        %1778 = vmatpush2.bf16.msra.mxu0 0
        %1779 = vmatprep.subr.bf16.mxu0 0
        %1780 = vmatpush2.bf16.msra.mxu0 0
        %1781 = vmatprep.mubr.bf16.mxu0 0
        %1782 = vmatmul.mubr.bf16.gmra.mxu0 %v1747
        %v1783 = vpop.f32.mrf.mxu0
        %v1784 = vadd.f32 %v1719, %v1783
        %v1785 = vpop.f32.mrf.mxu0
        %v1786 = vpop.f32.mrf.mxu0
        %v1787 = vpop.f32.mrf.mxu0
        %1788 = vdwg.mxu0
        %v1789 = vadd.f32 %v1784, %v1597
        %1790 = vst.msk [vmem:[%s709] sm:$0xff] %vm920, %v1789
        %s1791 = sand.u32 %s436, 1
        %s1792 = scalar_lea.sflag [#allocation6], %s1791
        %s1793 = sand.u32 %s436, 1
        %s1794 = smul.addr %s1793, 8
        %s1795 = scalar_lea.vmem [#allocation18], %s1794
        // Predicated region
        $region125: #{tpu_custom_call.1} parent=87 // pred_check
          %p1796 = pneg %p446
        $region126: #{tpu_custom_call.1} parent=87 // pred_check_branch
          %1798 = sbr.rel (%p1796) target = $region128
        $region127: #{tpu_custom_call.1} parent=87 // pred_region
          %s1800 = ssub.s32 128, 128
          %1801 = vsyncadd %s1792, %s1800
          %s1802 = smul.addr %s44, 2
          %s1803 = sadd.s32 %s45, %s1802
          %s1804 = smul.addr %s1803, 128
          %s1805 = scalar_lea.hbm %s17, %s1804
          %s1807 = sshll.u32 %s1795, 4
          %s1808 = int_to_ptr.vmem [resolvable:$true] %s1807
          %1810 = dma.vmem_to_hbm [thread:$0]  %s1808, 128, %s1805, %s1792
        $region128: #{tpu_custom_call.1} parent=87 // pred_fallthru
          _
      $region88: #{tpu_custom_call.1} parent=5 // pred_fallthru
        _
      %p1811 = scmp.le.s32.totalorder 2, %s35
      // Predicated region
      $region129: #{tpu_custom_call.1} parent=5 // pred_check
        %p1812 = pneg %p1811
      $region130: #{tpu_custom_call.1} parent=5 // pred_check_branch
        %1814 = sbr.rel (%p1812) target = $region132
      $region131: #{tpu_custom_call.1} parent=5 // pred_region
        %s1815 = ssub.s32 %s35, 2
        // Predicated region
        $region133: #{tpu_custom_call.1} parent=131 // pred_check
          %p1816 = pneg %p452
        $region134: #{tpu_custom_call.1} parent=131 // pred_check_branch
          %1818 = sbr.rel (%p1816) target = $region136
        $region135: #{tpu_custom_call.1} parent=131 // pred_region
          %s1819 = sand.u32 %s437, 1
          %s1820 = scalar_lea.sflag [#allocation6], %s1819
          %s1821 = sand.u32 %s437, 1
          %s1822 = smul.addr %s1821, 8
          %s1823 = scalar_lea.vmem [#allocation18], %s1822
          %1824 = dma.done %s1820, 128
        $region136: #{tpu_custom_call.1} parent=131 // pred_fallthru
          _
      $region132: #{tpu_custom_call.1} parent=5 // pred_fallthru
        _
    $region6: #{tpu_custom_call.1} parent=1 // loop_footer
      %s39 = sadd.s32 1, %s35
    $region7: #{tpu_custom_call.1} parent=1 // loop_footer_branch
      %34 = sbr.rel target = $region3
    $region8: #{tpu_custom_call.1} parent=1 // loop_exit
      _
    %1825 = vsyncpa [#allocation5], 1
    %s1826 = scalar_lea.sflag [#allocation5], 1
    %1827 = vsyncpa %s1826, 1
    %1828 = vsyncpa [#allocation8], 1
    %s1829 = scalar_lea.sflag [#allocation8], 1
    %1830 = vsyncpa %s1829, 1
    %1831 = vsyncpa [#allocation11], 1
    %1832 = vsyncpa [#allocation14], 1
    %1833 = vsyncpa [#allocation17], 1
    %1834 = vsyncpa [#allocation6], 1
    %s1835 = scalar_lea.sflag [#allocation6], 1
    %1836 = vsyncpa %s1835, 1

</llo_original>
